<compile_context>
chip_gen: v6e
topology: v6e:2x2x1
jax: 0.10.0
libtpu: 0.0.40
codegen_flags: <defaults>
</compile_context>

<pallas_src>
import jax
import jax.numpy as jnp
from jax.experimental import pallas as pl
from jax.experimental.pallas import tpu as pltpu

C_OUT = 4                 # conv output channels
KSZ = 3                   # conv kernel size
H = W = 28                # spatial size implied by Linear(28*28*4, 10)
N_CLS = 10
P = H * W                 # 784 flattened spatial positions per channel
CPAD = 896                # per-channel lane stride in feature scratch (7*128)
FEAT_PAD = C_OUT * CPAD   # 3584 padded feature dim fed to the MXU
NPAD = 128                # class dim padded to a full lane group
XE_W = 1024               # zero-margined flat image buffer width
XE_OFF = 128              # image starts at lane 128 (aligned); margins are zero
SB = 8                    # batch sub-tile (sublanes) processed per inner iter
MAX_BT = 256              # max images per grid step
FEAT = C_OUT * P          # 3136 (PyTorch flatten length)


def _round_up(n, m):
    return ((n + m - 1) // m) * m


def fused_kernel(x_ref, wc_ref, bc_ref, wq_ref, bd_ref, out_ref, xe_ref, f_ref):
    """Fused conv(3x3,pad=1)+bias+ReLU -> flatten -> dense -> softmax.

    x_ref : (BT, 784)   f32 VMEM   flattened 28x28 images
    wc_ref: (4, 9)      f32 SMEM   conv taps (row c = flattened 3x3)
    bc_ref: (1, 4)      f32 SMEM   conv bias
    wq_ref: (3584, 128) bf16 VMEM  dense weight in padded feature/class layout
    bd_ref: (1, 128)    f32 VMEM   dense bias (-1e9 on padded classes)
    out_ref:(BT, 128)   f32 VMEM   softmax probs (cols >= 10 are ~0)
    xe_ref: (BT, 1024)  f32 VMEM   scratch: image with zero margins
    f_ref : (BT, 3584)  f32 VMEM   scratch: ReLU conv features, channel c at
                                    lanes [c*896, c*896+784)
    """
    BT = x_ref.shape[0]
    nsb = BT // SB

    zero_col = jnp.zeros((BT, 128), jnp.float32)

    # --- stage 1: place the flat image inside a zero-margined buffer (all
    #     stores 128-lane aligned; data store overwrites part of right margin).
    xe_ref[:, 0:XE_OFF] = zero_col
    xe_ref[:, XE_W - 128:XE_W] = zero_col
    xe_ref[:, XE_OFF:XE_OFF + P] = x_ref[...]

    # zero the feature-scratch padding lanes (aligned strips; real lanes
    # [c*CPAD, c*CPAD+784) are rewritten below) so the matmul never sees junk.
    for c in range(C_OUT):
        f_ref[:, c * CPAD + 768:(c + 1) * CPAD] = zero_col

    # column-border masks for horizontally shifted taps (shared by all taps).
    col = jax.lax.broadcasted_iota(jnp.int32, (1, P), 1) % W
    mask_l = col > 0          # tap shifted one column left  -> invalid at w == 0
    mask_r = col < (W - 1)    # tap shifted one column right -> invalid at w == 27

    # conv taps / biases as SMEM scalars (hoisted out of the loop).
    taps = [[wc_ref[c, t] for t in range(KSZ * KSZ)] for c in range(C_OUT)]
    bias = [bc_ref[0, c] for c in range(C_OUT)]

    # --- stage 2: 3x3 conv + bias + ReLU, written directly as flat features.
    def subtile(sb, carry):
        r0 = pl.multiple_of(sb * SB, SB)
        xev = xe_ref[pl.ds(r0, SB), :]                       # (SB, 1024)
        accs = [jnp.zeros((SB, P), jnp.float32) + bias[c] for c in range(C_OUT)]
        for i in range(KSZ):
            for j in range(KSZ):
                start = XE_OFF + (i - 1) * W + (j - 1)
                win = xev[:, start:start + P]                # (SB, 784) lane window
                if j == 0:
                    win = jnp.where(mask_l, win, 0.0)
                elif j == 2:
                    win = jnp.where(mask_r, win, 0.0)
                t = i * KSZ + j
                for c in range(C_OUT):
                    accs[c] = accs[c] + taps[c][t] * win
        for c in range(C_OUT):
            f_ref[pl.ds(r0, SB), c * CPAD:c * CPAD + P] = jnp.maximum(accs[c], 0.0)
        return carry

    jax.lax.fori_loop(0, nsb, subtile, 0)

    # --- stage 3: dense layer on the MXU (bf16 operands, f32 accumulate)
    feats = f_ref[...].astype(jnp.bfloat16)                  # (BT, 3584)
    logits = jnp.dot(feats, wq_ref[...],
                     preferred_element_type=jnp.float32) + bd_ref[...]

    # --- stage 4: softmax over the 10 real classes (padded classes -> ~0)
    m = jnp.max(logits, axis=1, keepdims=True)
    e = jnp.exp(logits - m)
    denom = jnp.sum(e, axis=1, keepdims=True)
    r = pl.reciprocal(denom, approx=True)
    r = r * (2.0 - denom * r)            # one Newton step -> near-f32 accuracy
    out_ref[...] = e * r


def snow_classifier_forward(x, params):
    """x: (B, 1, 28, 28) f32 NCHW -> (B, 10) softmax probabilities."""
    wc = params["conv_w"]    # (4, 1, 3, 3)
    bc = params["conv_b"]    # (4,)
    wd = params["dense_w"]   # (10, 3136)
    bd = params["dense_b"]   # (10,)

    B = x.shape[0]
    xf = x.reshape(B, P).astype(jnp.float32)        # free reshape, no spatial pad
    BT = min(MAX_BT, _round_up(B, SB))
    B_pad = _round_up(B, BT)
    if B_pad != B:
        xf = jnp.pad(xf, ((0, B_pad - B), (0, 0)))

    wc_flat = wc.reshape(C_OUT, KSZ * KSZ).astype(jnp.float32)   # (4, 9)
    bc_row = bc.reshape(1, C_OUT).astype(jnp.float32)            # (1, 4)

    # dense weight scattered into the kernel's padded feature/class layout:
    # kernel feature index = c*896 + (h*28 + w)  <->  torch flatten c*784 + h*28 + w
    wq = wd.reshape(N_CLS, C_OUT, P).transpose(1, 2, 0)          # (4, 784, 10)
    wq = jnp.pad(wq, ((0, 0), (0, CPAD - P), (0, NPAD - N_CLS)))
    wq = wq.reshape(FEAT_PAD, NPAD).astype(jnp.bfloat16)         # (3584, 128)
    bd_row = jnp.full((1, NPAD), -1e9, jnp.float32)
    bd_row = bd_row.at[0, :N_CLS].set(bd.astype(jnp.float32))

    probs = pl.pallas_call(
        fused_kernel,
        out_shape=jax.ShapeDtypeStruct((B_pad, NPAD), jnp.float32),
        grid=(B_pad // BT,),
        in_specs=[
            pl.BlockSpec((BT, P), lambda b: (b, 0)),
            pl.BlockSpec(memory_space=pltpu.MemorySpace.SMEM),
            pl.BlockSpec(memory_space=pltpu.MemorySpace.SMEM),
            pl.BlockSpec((FEAT_PAD, NPAD), lambda b: (0, 0)),
            pl.BlockSpec((1, NPAD), lambda b: (0, 0)),
        ],
        out_specs=pl.BlockSpec((BT, NPAD), lambda b: (b, 0)),
        scratch_shapes=[
            pltpu.VMEM((BT, XE_W), jnp.float32),
            pltpu.VMEM((BT, FEAT_PAD), jnp.float32),
        ],
        compiler_params=pltpu.CompilerParams(
            dimension_semantics=("parallel",),
            vmem_limit_bytes=32 * 1024 * 1024),
    )(xf, wc_flat, bc_row, wq, bd_row)

    return probs[:B, :N_CLS]


def reference_forward(x, params):
    """Pure-JAX reference of the PyTorch forward."""
    out = jax.lax.conv_general_dilated(
        x.astype(jnp.float32), params["conv_w"].astype(jnp.float32),
        window_strides=(1, 1), padding=((1, 1), (1, 1)),
        dimension_numbers=("NCHW", "OIHW", "NCHW"))
    out = out + params["conv_b"][None, :, None, None]
    out = jnp.maximum(out, 0.0)
    flat = out.reshape(x.shape[0], -1)
    logits = flat @ params["dense_w"].T + params["dense_b"]
    return jax.nn.softmax(logits, axis=1)


def init_params(key):
    k1, k2, k3, k4 = jax.random.split(key, 4)
    return {
        "conv_w": (jax.random.normal(k1, (C_OUT, 1, KSZ, KSZ), jnp.float32)
                   * (1.0 / 3.0)),
        "conv_b": jax.random.normal(k2, (C_OUT,), jnp.float32) * 0.1,
        "dense_w": (jax.random.normal(k3, (N_CLS, FEAT), jnp.float32)
                    * (1.0 / jnp.sqrt(FEAT))),
        "dense_b": jax.random.normal(k4, (N_CLS,), jnp.float32) * 0.1,
    }


if __name__ == "__main__":
    key = jax.random.PRNGKey(0)
    k_params, k_x = jax.random.split(key)
    params = init_params(k_params)
    x = jax.random.normal(k_x, (2, 1, H, W), jnp.float32)   # (B, 1, 28, 28) NCHW

    fwd = jax.jit(snow_classifier_forward)
    probs = jax.block_until_ready(fwd(x, params))
    ref = jax.block_until_ready(reference_forward(x, params))

    assert probs.shape == (2, N_CLS)
    assert bool(jnp.all(jnp.isfinite(probs)))
    # probabilities sum to 1 per row
    assert float(jnp.max(jnp.abs(jnp.sum(probs, axis=1) - 1.0))) < 1e-3
    # match the pure-JAX reference (bf16 MXU path -> loose-ish tolerance)
    assert float(jnp.max(jnp.abs(probs - ref))) < 1e-2

    print("KERNEL_OK")
</pallas_src>

<mosaic_0001>
module attributes {stable_mosaic.version = 11 : i64} {
  func.func @fused_kernel(%arg0: i32, %arg1: memref<8x784xf32, #tpu.memory_space<vmem>>, %arg2: memref<4x9xf32, #tpu.memory_space<smem>>, %arg3: memref<1x4xf32, #tpu.memory_space<smem>>, %arg4: memref<3584x128xbf16, #tpu.memory_space<vmem>>, %arg5: memref<1x128xf32, #tpu.memory_space<vmem>>, %arg6: memref<8x128xf32, #tpu.memory_space<vmem>>, %arg7: memref<8x1024xf32, #tpu.memory_space<vmem>>, %arg8: memref<8x3584xf32, #tpu.memory_space<vmem>>) attributes {dimension_semantics = [#tpu.dimension_semantics<parallel>], iteration_bounds = array<i64: 1>, scalar_prefetch = 0 : i64, scratch_operands = 2 : i64, tpu.core_type = #tpu.core_type<tc>, window_params = [{transform_indices = @transform_0, window_bounds = array<i64: 8, 784>}, {transform_indices = @transform_1, window_bounds = array<i64: 4, 9>}, {transform_indices = @transform_2, window_bounds = array<i64: 1, 4>}, {pipeline_mode = #tpu.pipeline_mode<synchronous>, transform_indices = @transform_3, window_bounds = array<i64: 3584, 128>}, {pipeline_mode = #tpu.pipeline_mode<synchronous>, transform_indices = @transform_4, window_bounds = array<i64: 1, 128>}, {transform_indices = @transform_5, window_bounds = array<i64: 8, 128>}]} {
    %cst = arith.constant 0.000000e+00 : f32
    %0 = vector.broadcast %cst : f32 to vector<8x128xf32>
    %c0 = arith.constant 0 : index
    %c0_0 = arith.constant 0 : index
    %1 = vector.load %arg7[%c0, %c0_0] : memref<8x1024xf32, #tpu.memory_space<vmem>>, vector<8x128xf32>
    tpu.vector_store %arg7[%c0, %c0_0], %0 {strides = array<i32>} : memref<8x1024xf32, #tpu.memory_space<vmem>>, vector<8x128xf32>,
    %c0_1 = arith.constant 0 : index
    %c896 = arith.constant 896 : index
    %2 = vector.load %arg7[%c0_1, %c896] : memref<8x1024xf32, #tpu.memory_space<vmem>>, vector<8x128xf32>
    tpu.vector_store %arg7[%c0_1, %c896], %0 {strides = array<i32>} : memref<8x1024xf32, #tpu.memory_space<vmem>>, vector<8x128xf32>,
    %c0_2 = arith.constant 0 : index
    %c0_3 = arith.constant 0 : index
    %3 = vector.load %arg1[%c0_2, %c0_3] : memref<8x784xf32, #tpu.memory_space<vmem>>, vector<8x784xf32>
    %c0_4 = arith.constant 0 : index
    %c128 = arith.constant 128 : index
    %4 = vector.load %arg7[%c0_4, %c128] : memref<8x1024xf32, #tpu.memory_space<vmem>>, vector<8x784xf32>
    tpu.vector_store %arg7[%c0_4, %c128], %3 {strides = array<i32>} : memref<8x1024xf32, #tpu.memory_space<vmem>>, vector<8x784xf32>,
    %c0_5 = arith.constant 0 : index
    %c768 = arith.constant 768 : index
    %5 = vector.load %arg8[%c0_5, %c768] : memref<8x3584xf32, #tpu.memory_space<vmem>>, vector<8x128xf32>
    tpu.vector_store %arg8[%c0_5, %c768], %0 {strides = array<i32>} : memref<8x3584xf32, #tpu.memory_space<vmem>>, vector<8x128xf32>,
    %c0_6 = arith.constant 0 : index
    %c1664 = arith.constant 1664 : index
    %6 = vector.load %arg8[%c0_6, %c1664] : memref<8x3584xf32, #tpu.memory_space<vmem>>, vector<8x128xf32>
    tpu.vector_store %arg8[%c0_6, %c1664], %0 {strides = array<i32>} : memref<8x3584xf32, #tpu.memory_space<vmem>>, vector<8x128xf32>,
    %c0_7 = arith.constant 0 : index
    %c2560 = arith.constant 2560 : index
    %7 = vector.load %arg8[%c0_7, %c2560] : memref<8x3584xf32, #tpu.memory_space<vmem>>, vector<8x128xf32>
    tpu.vector_store %arg8[%c0_7, %c2560], %0 {strides = array<i32>} : memref<8x3584xf32, #tpu.memory_space<vmem>>, vector<8x128xf32>,
    %c0_8 = arith.constant 0 : index
    %c3456 = arith.constant 3456 : index
    %8 = vector.load %arg8[%c0_8, %c3456] : memref<8x3584xf32, #tpu.memory_space<vmem>>, vector<8x128xf32>
    tpu.vector_store %arg8[%c0_8, %c3456], %0 {strides = array<i32>} : memref<8x3584xf32, #tpu.memory_space<vmem>>, vector<8x128xf32>,
    %9 = tpu.iota {dimensions = array<i32: 1>} : vector<1x784xi32>
    %c28_i32 = arith.constant 28 : i32
    %c0_i32 = arith.constant 0 : i32
    %10 = arith.cmpi eq, %c28_i32, %c0_i32 : i32
    %c1_i32 = arith.constant 1 : i32
    %11 = arith.select %10, %c1_i32, %c28_i32 : i32
    %12 = vector.broadcast %11 : i32 to vector<1x784xi32>
    %13 = arith.remsi %9, %12 : vector<1x784xi32>
    %c0_i32_9 = arith.constant 0 : i32
    %14 = vector.broadcast %c0_i32_9 : i32 to vector<1x784xi32>
    %15 = arith.cmpi ne, %13, %14 : vector<1x784xi32>
    %c0_i32_10 = arith.constant 0 : i32
    %16 = vector.broadcast %c0_i32_10 : i32 to vector<1x784xi32>
    %17 = arith.cmpi slt, %13, %16 : vector<1x784xi32>
    %c0_i32_11 = arith.constant 0 : i32
    %18 = arith.cmpi slt, %11, %c0_i32_11 : i32
    %19 = vector.broadcast %18 : i1 to vector<1x784xi1>
    %20 = vector.broadcast %19 : vector<1x784xi1> to vector<1x784xi1>
    %21 = arith.xori %17, %20 : vector<1x784xi1>
    %22 = arith.andi %21, %15 : vector<1x784xi1>
    %23 = vector.broadcast %11 : i32 to vector<1x784xi32>
    %24 = arith.addi %13, %23 : vector<1x784xi32>
    %25 = arith.select %22, %24, %13 : vector<1x784xi1>, vector<1x784xi32>
    %c0_i32_12 = arith.constant 0 : i32
    %26 = vector.broadcast %c0_i32_12 : i32 to vector<1x784xi32>
    %27 = arith.cmpi sgt, %25, %26 : vector<1x784xi32>
    %c27_i32 = arith.constant 27 : i32
    %28 = vector.broadcast %c27_i32 : i32 to vector<1x784xi32>
    %29 = arith.cmpi slt, %25, %28 : vector<1x784xi32>
    %c0_13 = arith.constant 0 : index
    %c0_14 = arith.constant 0 : index
    %30 = memref.load %arg2[%c0_13, %c0_14] : memref<4x9xf32, #tpu.memory_space<smem>>
    %c0_15 = arith.constant 0 : index
    %c1 = arith.constant 1 : index
    %31 = memref.load %arg2[%c0_15, %c1] : memref<4x9xf32, #tpu.memory_space<smem>>
    %c0_16 = arith.constant 0 : index
    %c2 = arith.constant 2 : index
    %32 = memref.load %arg2[%c0_16, %c2] : memref<4x9xf32, #tpu.memory_space<smem>>
    %c0_17 = arith.constant 0 : index
    %c3 = arith.constant 3 : index
    %33 = memref.load %arg2[%c0_17, %c3] : memref<4x9xf32, #tpu.memory_space<smem>>
    %c0_18 = arith.constant 0 : index
    %c4 = arith.constant 4 : index
    %34 = memref.load %arg2[%c0_18, %c4] : memref<4x9xf32, #tpu.memory_space<smem>>
    %c0_19 = arith.constant 0 : index
    %c5 = arith.constant 5 : index
    %35 = memref.load %arg2[%c0_19, %c5] : memref<4x9xf32, #tpu.memory_space<smem>>
    %c0_20 = arith.constant 0 : index
    %c6 = arith.constant 6 : index
    %36 = memref.load %arg2[%c0_20, %c6] : memref<4x9xf32, #tpu.memory_space<smem>>
    %c0_21 = arith.constant 0 : index
    %c7 = arith.constant 7 : index
    %37 = memref.load %arg2[%c0_21, %c7] : memref<4x9xf32, #tpu.memory_space<smem>>
    %c0_22 = arith.constant 0 : index
    %c8 = arith.constant 8 : index
    %38 = memref.load %arg2[%c0_22, %c8] : memref<4x9xf32, #tpu.memory_space<smem>>
    %c1_23 = arith.constant 1 : index
    %c0_24 = arith.constant 0 : index
    %39 = memref.load %arg2[%c1_23, %c0_24] : memref<4x9xf32, #tpu.memory_space<smem>>
    %c1_25 = arith.constant 1 : index
    %c1_26 = arith.constant 1 : index
    %40 = memref.load %arg2[%c1_25, %c1_26] : memref<4x9xf32, #tpu.memory_space<smem>>
    %c1_27 = arith.constant 1 : index
    %c2_28 = arith.constant 2 : index
    %41 = memref.load %arg2[%c1_27, %c2_28] : memref<4x9xf32, #tpu.memory_space<smem>>
    %c1_29 = arith.constant 1 : index
    %c3_30 = arith.constant 3 : index
    %42 = memref.load %arg2[%c1_29, %c3_30] : memref<4x9xf32, #tpu.memory_space<smem>>
    %c1_31 = arith.constant 1 : index
    %c4_32 = arith.constant 4 : index
    %43 = memref.load %arg2[%c1_31, %c4_32] : memref<4x9xf32, #tpu.memory_space<smem>>
    %c1_33 = arith.constant 1 : index
    %c5_34 = arith.constant 5 : index
    %44 = memref.load %arg2[%c1_33, %c5_34] : memref<4x9xf32, #tpu.memory_space<smem>>
    %c1_35 = arith.constant 1 : index
    %c6_36 = arith.constant 6 : index
    %45 = memref.load %arg2[%c1_35, %c6_36] : memref<4x9xf32, #tpu.memory_space<smem>>
    %c1_37 = arith.constant 1 : index
    %c7_38 = arith.constant 7 : index
    %46 = memref.load %arg2[%c1_37, %c7_38] : memref<4x9xf32, #tpu.memory_space<smem>>
    %c1_39 = arith.constant 1 : index
    %c8_40 = arith.constant 8 : index
    %47 = memref.load %arg2[%c1_39, %c8_40] : memref<4x9xf32, #tpu.memory_space<smem>>
    %c2_41 = arith.constant 2 : index
    %c0_42 = arith.constant 0 : index
    %48 = memref.load %arg2[%c2_41, %c0_42] : memref<4x9xf32, #tpu.memory_space<smem>>
    %c2_43 = arith.constant 2 : index
    %c1_44 = arith.constant 1 : index
    %49 = memref.load %arg2[%c2_43, %c1_44] : memref<4x9xf32, #tpu.memory_space<smem>>
    %c2_45 = arith.constant 2 : index
    %c2_46 = arith.constant 2 : index
    %50 = memref.load %arg2[%c2_45, %c2_46] : memref<4x9xf32, #tpu.memory_space<smem>>
    %c2_47 = arith.constant 2 : index
    %c3_48 = arith.constant 3 : index
    %51 = memref.load %arg2[%c2_47, %c3_48] : memref<4x9xf32, #tpu.memory_space<smem>>
    %c2_49 = arith.constant 2 : index
    %c4_50 = arith.constant 4 : index
    %52 = memref.load %arg2[%c2_49, %c4_50] : memref<4x9xf32, #tpu.memory_space<smem>>
    %c2_51 = arith.constant 2 : index
    %c5_52 = arith.constant 5 : index
    %53 = memref.load %arg2[%c2_51, %c5_52] : memref<4x9xf32, #tpu.memory_space<smem>>
    %c2_53 = arith.constant 2 : index
    %c6_54 = arith.constant 6 : index
    %54 = memref.load %arg2[%c2_53, %c6_54] : memref<4x9xf32, #tpu.memory_space<smem>>
    %c2_55 = arith.constant 2 : index
    %c7_56 = arith.constant 7 : index
    %55 = memref.load %arg2[%c2_55, %c7_56] : memref<4x9xf32, #tpu.memory_space<smem>>
    %c2_57 = arith.constant 2 : index
    %c8_58 = arith.constant 8 : index
    %56 = memref.load %arg2[%c2_57, %c8_58] : memref<4x9xf32, #tpu.memory_space<smem>>
    %c3_59 = arith.constant 3 : index
    %c0_60 = arith.constant 0 : index
    %57 = memref.load %arg2[%c3_59, %c0_60] : memref<4x9xf32, #tpu.memory_space<smem>>
    %c3_61 = arith.constant 3 : index
    %c1_62 = arith.constant 1 : index
    %58 = memref.load %arg2[%c3_61, %c1_62] : memref<4x9xf32, #tpu.memory_space<smem>>
    %c3_63 = arith.constant 3 : index
    %c2_64 = arith.constant 2 : index
    %59 = memref.load %arg2[%c3_63, %c2_64] : memref<4x9xf32, #tpu.memory_space<smem>>
    %c3_65 = arith.constant 3 : index
    %c3_66 = arith.constant 3 : index
    %60 = memref.load %arg2[%c3_65, %c3_66] : memref<4x9xf32, #tpu.memory_space<smem>>
    %c3_67 = arith.constant 3 : index
    %c4_68 = arith.constant 4 : index
    %61 = memref.load %arg2[%c3_67, %c4_68] : memref<4x9xf32, #tpu.memory_space<smem>>
    %c3_69 = arith.constant 3 : index
    %c5_70 = arith.constant 5 : index
    %62 = memref.load %arg2[%c3_69, %c5_70] : memref<4x9xf32, #tpu.memory_space<smem>>
    %c3_71 = arith.constant 3 : index
    %c6_72 = arith.constant 6 : index
    %63 = memref.load %arg2[%c3_71, %c6_72] : memref<4x9xf32, #tpu.memory_space<smem>>
    %c3_73 = arith.constant 3 : index
    %c7_74 = arith.constant 7 : index
    %64 = memref.load %arg2[%c3_73, %c7_74] : memref<4x9xf32, #tpu.memory_space<smem>>
    %c3_75 = arith.constant 3 : index
    %c8_76 = arith.constant 8 : index
    %65 = memref.load %arg2[%c3_75, %c8_76] : memref<4x9xf32, #tpu.memory_space<smem>>
    %c0_77 = arith.constant 0 : index
    %c0_78 = arith.constant 0 : index
    %66 = memref.load %arg3[%c0_77, %c0_78] : memref<1x4xf32, #tpu.memory_space<smem>>
    %c0_79 = arith.constant 0 : index
    %c1_80 = arith.constant 1 : index
    %67 = memref.load %arg3[%c0_79, %c1_80] : memref<1x4xf32, #tpu.memory_space<smem>>
    %c0_81 = arith.constant 0 : index
    %c2_82 = arith.constant 2 : index
    %68 = memref.load %arg3[%c0_81, %c2_82] : memref<1x4xf32, #tpu.memory_space<smem>>
    %c0_83 = arith.constant 0 : index
    %c3_84 = arith.constant 3 : index
    %69 = memref.load %arg3[%c0_83, %c3_84] : memref<1x4xf32, #tpu.memory_space<smem>>
    %c0_i32_85 = arith.constant 0 : i32
    %c8_i32 = arith.constant 8 : i32
    %70 = arith.muli %c0_i32_85, %c8_i32 : i32
    %71 = tpu.assume_multiple %70, 8 : i32
    %72 = arith.index_cast %71 : i32 to index
    %c0_86 = arith.constant 0 : index
    %73 = vector.load %arg7[%72, %c0_86] : memref<8x1024xf32, #tpu.memory_space<vmem>>, vector<8x1024xf32>
    %cst_87 = arith.constant 0.000000e+00 : f32
    %74 = vector.broadcast %cst_87 : f32 to vector<8x784xf32>
    %75 = vector.broadcast %66 : f32 to vector<8x784xf32>
    %76 = arith.addf %74, %75 : vector<8x784xf32>
    %cst_88 = arith.constant 0.000000e+00 : f32
    %77 = vector.broadcast %cst_88 : f32 to vector<8x784xf32>
    %78 = vector.broadcast %67 : f32 to vector<8x784xf32>
    %79 = arith.addf %77, %78 : vector<8x784xf32>
    %cst_89 = arith.constant 0.000000e+00 : f32
    %80 = vector.broadcast %cst_89 : f32 to vector<8x784xf32>
    %81 = vector.broadcast %68 : f32 to vector<8x784xf32>
    %82 = arith.addf %80, %81 : vector<8x784xf32>
    %cst_90 = arith.constant 0.000000e+00 : f32
    %83 = vector.broadcast %cst_90 : f32 to vector<8x784xf32>
    %84 = vector.broadcast %69 : f32 to vector<8x784xf32>
    %85 = arith.addf %83, %84 : vector<8x784xf32>
    %86 = vector.extract_strided_slice %73 {offsets = [0, 99], sizes = [8, 784], strides = [1, 1]} : vector<8x1024xf32> to vector<8x784xf32>
    %cst_91 = arith.constant 0.000000e+00 : f32
    %87 = vector.shape_cast %27 : vector<1x784xi1> to vector<1x784xi1>
    %88 = vector.broadcast %87 : vector<1x784xi1> to vector<8x784xi1>
    %89 = vector.broadcast %cst_91 : f32 to vector<8x784xf32>
    %90 = arith.select %88, %86, %89 : vector<8x784xi1>, vector<8x784xf32>
    %91 = vector.broadcast %30 : f32 to vector<8x784xf32>
    %92 = arith.mulf %91, %90 : vector<8x784xf32>
    %93 = arith.addf %76, %92 : vector<8x784xf32>
    %94 = vector.broadcast %39 : f32 to vector<8x784xf32>
    %95 = arith.mulf %94, %90 : vector<8x784xf32>
    %96 = arith.addf %79, %95 : vector<8x784xf32>
    %97 = vector.broadcast %48 : f32 to vector<8x784xf32>
    %98 = arith.mulf %97, %90 : vector<8x784xf32>
    %99 = arith.addf %82, %98 : vector<8x784xf32>
    %100 = vector.broadcast %57 : f32 to vector<8x784xf32>
    %101 = arith.mulf %100, %90 : vector<8x784xf32>
    %102 = arith.addf %85, %101 : vector<8x784xf32>
    %103 = vector.extract_strided_slice %73 {offsets = [0, 100], sizes = [8, 784], strides = [1, 1]} : vector<8x1024xf32> to vector<8x784xf32>
    %104 = vector.broadcast %31 : f32 to vector<8x784xf32>
    %105 = arith.mulf %104, %103 : vector<8x784xf32>
    %106 = arith.addf %93, %105 : vector<8x784xf32>
    %107 = vector.broadcast %40 : f32 to vector<8x784xf32>
    %108 = arith.mulf %107, %103 : vector<8x784xf32>
    %109 = arith.addf %96, %108 : vector<8x784xf32>
    %110 = vector.broadcast %49 : f32 to vector<8x784xf32>
    %111 = arith.mulf %110, %103 : vector<8x784xf32>
    %112 = arith.addf %99, %111 : vector<8x784xf32>
    %113 = vector.broadcast %58 : f32 to vector<8x784xf32>
    %114 = arith.mulf %113, %103 : vector<8x784xf32>
    %115 = arith.addf %102, %114 : vector<8x784xf32>
    %116 = vector.extract_strided_slice %73 {offsets = [0, 101], sizes = [8, 784], strides = [1, 1]} : vector<8x1024xf32> to vector<8x784xf32>
    %cst_92 = arith.constant 0.000000e+00 : f32
    %117 = vector.shape_cast %29 : vector<1x784xi1> to vector<1x784xi1>
    %118 = vector.broadcast %117 : vector<1x784xi1> to vector<8x784xi1>
    %119 = vector.broadcast %cst_92 : f32 to vector<8x784xf32>
    %120 = arith.select %118, %116, %119 : vector<8x784xi1>, vector<8x784xf32>
    %121 = vector.broadcast %32 : f32 to vector<8x784xf32>
    %122 = arith.mulf %121, %120 : vector<8x784xf32>
    %123 = arith.addf %106, %122 : vector<8x784xf32>
    %124 = vector.broadcast %41 : f32 to vector<8x784xf32>
    %125 = arith.mulf %124, %120 : vector<8x784xf32>
    %126 = arith.addf %109, %125 : vector<8x784xf32>
    %127 = vector.broadcast %50 : f32 to vector<8x784xf32>
    %128 = arith.mulf %127, %120 : vector<8x784xf32>
    %129 = arith.addf %112, %128 : vector<8x784xf32>
    %130 = vector.broadcast %59 : f32 to vector<8x784xf32>
    %131 = arith.mulf %130, %120 : vector<8x784xf32>
    %132 = arith.addf %115, %131 : vector<8x784xf32>
    %133 = vector.extract_strided_slice %73 {offsets = [0, 127], sizes = [8, 784], strides = [1, 1]} : vector<8x1024xf32> to vector<8x784xf32>
    %cst_93 = arith.constant 0.000000e+00 : f32
    %134 = vector.shape_cast %27 : vector<1x784xi1> to vector<1x784xi1>
    %135 = vector.broadcast %134 : vector<1x784xi1> to vector<8x784xi1>
    %136 = vector.broadcast %cst_93 : f32 to vector<8x784xf32>
    %137 = arith.select %135, %133, %136 : vector<8x784xi1>, vector<8x784xf32>
    %138 = vector.broadcast %33 : f32 to vector<8x784xf32>
    %139 = arith.mulf %138, %137 : vector<8x784xf32>
    %140 = arith.addf %123, %139 : vector<8x784xf32>
    %141 = vector.broadcast %42 : f32 to vector<8x784xf32>
    %142 = arith.mulf %141, %137 : vector<8x784xf32>
    %143 = arith.addf %126, %142 : vector<8x784xf32>
    %144 = vector.broadcast %51 : f32 to vector<8x784xf32>
    %145 = arith.mulf %144, %137 : vector<8x784xf32>
    %146 = arith.addf %129, %145 : vector<8x784xf32>
    %147 = vector.broadcast %60 : f32 to vector<8x784xf32>
    %148 = arith.mulf %147, %137 : vector<8x784xf32>
    %149 = arith.addf %132, %148 : vector<8x784xf32>
    %150 = vector.extract_strided_slice %73 {offsets = [0, 128], sizes = [8, 784], strides = [1, 1]} : vector<8x1024xf32> to vector<8x784xf32>
    %151 = vector.broadcast %34 : f32 to vector<8x784xf32>
    %152 = arith.mulf %151, %150 : vector<8x784xf32>
    %153 = arith.addf %140, %152 : vector<8x784xf32>
    %154 = vector.broadcast %43 : f32 to vector<8x784xf32>
    %155 = arith.mulf %154, %150 : vector<8x784xf32>
    %156 = arith.addf %143, %155 : vector<8x784xf32>
    %157 = vector.broadcast %52 : f32 to vector<8x784xf32>
    %158 = arith.mulf %157, %150 : vector<8x784xf32>
    %159 = arith.addf %146, %158 : vector<8x784xf32>
    %160 = vector.broadcast %61 : f32 to vector<8x784xf32>
    %161 = arith.mulf %160, %150 : vector<8x784xf32>
    %162 = arith.addf %149, %161 : vector<8x784xf32>
    %163 = vector.extract_strided_slice %73 {offsets = [0, 129], sizes = [8, 784], strides = [1, 1]} : vector<8x1024xf32> to vector<8x784xf32>
    %cst_94 = arith.constant 0.000000e+00 : f32
    %164 = vector.shape_cast %29 : vector<1x784xi1> to vector<1x784xi1>
    %165 = vector.broadcast %164 : vector<1x784xi1> to vector<8x784xi1>
    %166 = vector.broadcast %cst_94 : f32 to vector<8x784xf32>
    %167 = arith.select %165, %163, %166 : vector<8x784xi1>, vector<8x784xf32>
    %168 = vector.broadcast %35 : f32 to vector<8x784xf32>
    %169 = arith.mulf %168, %167 : vector<8x784xf32>
    %170 = arith.addf %153, %169 : vector<8x784xf32>
    %171 = vector.broadcast %44 : f32 to vector<8x784xf32>
    %172 = arith.mulf %171, %167 : vector<8x784xf32>
    %173 = arith.addf %156, %172 : vector<8x784xf32>
    %174 = vector.broadcast %53 : f32 to vector<8x784xf32>
    %175 = arith.mulf %174, %167 : vector<8x784xf32>
    %176 = arith.addf %159, %175 : vector<8x784xf32>
    %177 = vector.broadcast %62 : f32 to vector<8x784xf32>
    %178 = arith.mulf %177, %167 : vector<8x784xf32>
    %179 = arith.addf %162, %178 : vector<8x784xf32>
    %180 = vector.extract_strided_slice %73 {offsets = [0, 155], sizes = [8, 784], strides = [1, 1]} : vector<8x1024xf32> to vector<8x784xf32>
    %cst_95 = arith.constant 0.000000e+00 : f32
    %181 = vector.shape_cast %27 : vector<1x784xi1> to vector<1x784xi1>
    %182 = vector.broadcast %181 : vector<1x784xi1> to vector<8x784xi1>
    %183 = vector.broadcast %cst_95 : f32 to vector<8x784xf32>
    %184 = arith.select %182, %180, %183 : vector<8x784xi1>, vector<8x784xf32>
    %185 = vector.broadcast %36 : f32 to vector<8x784xf32>
    %186 = arith.mulf %185, %184 : vector<8x784xf32>
    %187 = arith.addf %170, %186 : vector<8x784xf32>
    %188 = vector.broadcast %45 : f32 to vector<8x784xf32>
    %189 = arith.mulf %188, %184 : vector<8x784xf32>
    %190 = arith.addf %173, %189 : vector<8x784xf32>
    %191 = vector.broadcast %54 : f32 to vector<8x784xf32>
    %192 = arith.mulf %191, %184 : vector<8x784xf32>
    %193 = arith.addf %176, %192 : vector<8x784xf32>
    %194 = vector.broadcast %63 : f32 to vector<8x784xf32>
    %195 = arith.mulf %194, %184 : vector<8x784xf32>
    %196 = arith.addf %179, %195 : vector<8x784xf32>
    %197 = vector.extract_strided_slice %73 {offsets = [0, 156], sizes = [8, 784], strides = [1, 1]} : vector<8x1024xf32> to vector<8x784xf32>
    %198 = vector.broadcast %37 : f32 to vector<8x784xf32>
    %199 = arith.mulf %198, %197 : vector<8x784xf32>
    %200 = arith.addf %187, %199 : vector<8x784xf32>
    %201 = vector.broadcast %46 : f32 to vector<8x784xf32>
    %202 = arith.mulf %201, %197 : vector<8x784xf32>
    %203 = arith.addf %190, %202 : vector<8x784xf32>
    %204 = vector.broadcast %55 : f32 to vector<8x784xf32>
    %205 = arith.mulf %204, %197 : vector<8x784xf32>
    %206 = arith.addf %193, %205 : vector<8x784xf32>
    %207 = vector.broadcast %64 : f32 to vector<8x784xf32>
    %208 = arith.mulf %207, %197 : vector<8x784xf32>
    %209 = arith.addf %196, %208 : vector<8x784xf32>
    %210 = vector.extract_strided_slice %73 {offsets = [0, 157], sizes = [8, 784], strides = [1, 1]} : vector<8x1024xf32> to vector<8x784xf32>
    %cst_96 = arith.constant 0.000000e+00 : f32
    %211 = vector.shape_cast %29 : vector<1x784xi1> to vector<1x784xi1>
    %212 = vector.broadcast %211 : vector<1x784xi1> to vector<8x784xi1>
    %213 = vector.broadcast %cst_96 : f32 to vector<8x784xf32>
    %214 = arith.select %212, %210, %213 : vector<8x784xi1>, vector<8x784xf32>
    %215 = vector.broadcast %38 : f32 to vector<8x784xf32>
    %216 = arith.mulf %215, %214 : vector<8x784xf32>
    %217 = arith.addf %200, %216 : vector<8x784xf32>
    %218 = vector.broadcast %47 : f32 to vector<8x784xf32>
    %219 = arith.mulf %218, %214 : vector<8x784xf32>
    %220 = arith.addf %203, %219 : vector<8x784xf32>
    %221 = vector.broadcast %56 : f32 to vector<8x784xf32>
    %222 = arith.mulf %221, %214 : vector<8x784xf32>
    %223 = arith.addf %206, %222 : vector<8x784xf32>
    %224 = vector.broadcast %65 : f32 to vector<8x784xf32>
    %225 = arith.mulf %224, %214 : vector<8x784xf32>
    %226 = arith.addf %209, %225 : vector<8x784xf32>
    %cst_97 = arith.constant 0.000000e+00 : f32
    %227 = vector.broadcast %cst_97 : f32 to vector<8x784xf32>
    %228 = arith.maximumf %217, %227 : vector<8x784xf32>
    %229 = arith.index_cast %71 : i32 to index
    %c0_98 = arith.constant 0 : index
    %230 = vector.load %arg8[%229, %c0_98] : memref<8x3584xf32, #tpu.memory_space<vmem>>, vector<8x784xf32>
    tpu.vector_store %arg8[%229, %c0_98], %228 {strides = array<i32>} : memref<8x3584xf32, #tpu.memory_space<vmem>>, vector<8x784xf32>,
    %cst_99 = arith.constant 0.000000e+00 : f32
    %231 = vector.broadcast %cst_99 : f32 to vector<8x784xf32>
    %232 = arith.maximumf %220, %231 : vector<8x784xf32>
    %233 = arith.index_cast %71 : i32 to index
    %c896_100 = arith.constant 896 : index
    %234 = vector.load %arg8[%233, %c896_100] : memref<8x3584xf32, #tpu.memory_space<vmem>>, vector<8x784xf32>
    tpu.vector_store %arg8[%233, %c896_100], %232 {strides = array<i32>} : memref<8x3584xf32, #tpu.memory_space<vmem>>, vector<8x784xf32>,
    %cst_101 = arith.constant 0.000000e+00 : f32
    %235 = vector.broadcast %cst_101 : f32 to vector<8x784xf32>
    %236 = arith.maximumf %223, %235 : vector<8x784xf32>
    %237 = arith.index_cast %71 : i32 to index
    %c1792 = arith.constant 1792 : index
    %238 = vector.load %arg8[%237, %c1792] : memref<8x3584xf32, #tpu.memory_space<vmem>>, vector<8x784xf32>
    tpu.vector_store %arg8[%237, %c1792], %236 {strides = array<i32>} : memref<8x3584xf32, #tpu.memory_space<vmem>>, vector<8x784xf32>,
    %cst_102 = arith.constant 0.000000e+00 : f32
    %239 = vector.broadcast %cst_102 : f32 to vector<8x784xf32>
    %240 = arith.maximumf %226, %239 : vector<8x784xf32>
    %241 = arith.index_cast %71 : i32 to index
    %c2688 = arith.constant 2688 : index
    %242 = vector.load %arg8[%241, %c2688] : memref<8x3584xf32, #tpu.memory_space<vmem>>, vector<8x784xf32>
    tpu.vector_store %arg8[%241, %c2688], %240 {strides = array<i32>} : memref<8x3584xf32, #tpu.memory_space<vmem>>, vector<8x784xf32>,
    %c1_i32_103 = arith.constant 1 : i32
    %c0_104 = arith.constant 0 : index
    %c0_105 = arith.constant 0 : index
    %243 = vector.load %arg8[%c0_104, %c0_105] : memref<8x3584xf32, #tpu.memory_space<vmem>>, vector<8x3584xf32>
    %244 = arith.truncf %243 : vector<8x3584xf32> to vector<8x3584xbf16>
    %c0_106 = arith.constant 0 : index
    %c0_107 = arith.constant 0 : index
    %245 = vector.load %arg4[%c0_106, %c0_107] : memref<3584x128xbf16, #tpu.memory_space<vmem>>, vector<3584x128xbf16>
    %cst_108 = arith.constant dense<0.000000e+00> : vector<8x128xf32>
    %246 = tpu.matmul %244, %245, %cst_108 {dimension_numbers = #tpu.dot_dimension_numbers<[1], [0], [0], [1], [0, 0, 1, 1], [], []>} : vector<8x3584xbf16>, vector<3584x128xbf16>, vector<8x128xf32> -> vector<8x128xf32>
    %c0_109 = arith.constant 0 : index
    %c0_110 = arith.constant 0 : index
    %247 = vector.load %arg5[%c0_109, %c0_110] : memref<1x128xf32, #tpu.memory_space<vmem>>, vector<1x128xf32>
    %248 = vector.broadcast %247 : vector<1x128xf32> to vector<8x128xf32>
    %249 = arith.addf %246, %248 : vector<8x128xf32>
    %cst_111 = arith.constant dense<0xFF800000> : vector<8xf32>
    %250 = vector.multi_reduction <maximumf>, %249, %cst_111 [1] : vector<8x128xf32> to vector<8xf32>
    %251 = vector.shape_cast %250 : vector<8xf32> to vector<8x1xf32>
    %252 = vector.broadcast %251 : vector<8x1xf32> to vector<8x128xf32>
    %253 = arith.subf %249, %252 : vector<8x128xf32>
    %254 = math.exp %253 : vector<8x128xf32>
    %cst_112 = arith.constant dense<0.000000e+00> : vector<8xf32>
    %255 = vector.multi_reduction <add>, %254, %cst_112 [1] : vector<8x128xf32> to vector<8xf32>
    %256 = vector.shape_cast %255 : vector<8xf32> to vector<8x1xf32>
    %257 = tpu.reciprocal %256 {approx = true} : vector<8x1xf32> -> vector<8x1xf32>
    %258 = arith.mulf %256, %257 : vector<8x1xf32>
    %cst_113 = arith.constant 2.000000e+00 : f32
    %259 = vector.broadcast %cst_113 : f32 to vector<8x1xf32>
    %260 = arith.subf %259, %258 : vector<8x1xf32>
    %261 = arith.mulf %257, %260 : vector<8x1xf32>
    %262 = vector.broadcast %261 : vector<8x1xf32> to vector<8x128xf32>
    %263 = arith.mulf %254, %262 : vector<8x128xf32>
    %c0_114 = arith.constant 0 : index
    %c0_115 = arith.constant 0 : index
    %264 = vector.load %arg6[%c0_114, %c0_115] : memref<8x128xf32, #tpu.memory_space<vmem>>, vector<8x128xf32>
    tpu.vector_store %arg6[%c0_114, %c0_115], %263 {strides = array<i32>} : memref<8x128xf32, #tpu.memory_space<vmem>>, vector<8x128xf32>,
    return
  }
  func.func @transform_0(%arg0: i32) -> (i32, i32) {
    %c0_i32 = arith.constant 0 : i32
    %c0_i32_0 = arith.constant 0 : i32
    return %arg0, %c0_i32 : i32, i32
  }
  func.func @transform_1(%arg0: i32) -> (i32, i32) {
    %c0_i32 = arith.constant 0 : i32
    %c0_i32_0 = arith.constant 0 : i32
    %c0_i32_1 = arith.constant 0 : i32
    return %c0_i32, %c0_i32_0 : i32, i32
  }
  func.func @transform_2(%arg0: i32) -> (i32, i32) {
    %c0_i32 = arith.constant 0 : i32
    %c0_i32_0 = arith.constant 0 : i32
    %c0_i32_1 = arith.constant 0 : i32
    return %c0_i32, %c0_i32_0 : i32, i32
  }
  func.func @transform_3(%arg0: i32) -> (i32, i32) {
    %c0_i32 = arith.constant 0 : i32
    %c0_i32_0 = arith.constant 0 : i32
    %c0_i32_1 = arith.constant 0 : i32
    return %c0_i32, %c0_i32_0 : i32, i32
  }
  func.func @transform_4(%arg0: i32) -> (i32, i32) {
    %c0_i32 = arith.constant 0 : i32
    %c0_i32_0 = arith.constant 0 : i32
    %c0_i32_1 = arith.constant 0 : i32
    return %c0_i32, %c0_i32_0 : i32, i32
  }
  func.func @transform_5(%arg0: i32) -> (i32, i32) {
    %c0_i32 = arith.constant 0 : i32
    %c0_i32_0 = arith.constant 0 : i32
    return %arg0, %c0_i32 : i32, i32
  }
}

</mosaic_0001>

<llo_original>
// kernel: snow_classifier_forward.1
$region0: #{snow_classifier_forward.1}
  #allocation0 [shape = 'u32[]', space=smem, size = 0x4, offset = 0x4, fixed_abs, tag = 'smem constant byte address 0x4 - core index']
  #allocation1 [shape = 'u32[144,128]{1,0:T(1,128)}', space=vmem, size = 0x12000, scoped, tag = 'internal scratch']
  #allocation2 [shape = 'f32[8,1024]{1,0:T(8,128)}', space=vmem, size = 0x8000, scoped, tag = 'scratch operand']
  #allocation3 [shape = 'f32[8,3584]{1,0:T(8,128)}', space=vmem, size = 0x1c000, scoped, tag = 'scratch operand']
  %s0 = inlined_call_operand.vmem [shape: f32[8,784], index: 0, kind: input, shape index: {}]
  %s1 = inlined_call_operand.vmem [shape: f32[4,9], index: 1, kind: input, shape index: {}]
  %s2 = inlined_call_operand.vmem [shape: f32[1,4], index: 2, kind: input, shape index: {}]
  %s3 = inlined_call_operand.vmem [shape: bf16[3584,128], index: 3, kind: input, shape index: {}]
  %s4 = inlined_call_operand.vmem [shape: f32[1,128], index: 4, kind: input, shape index: {}]
  %s5 = inlined_call_operand.vmem [shape: f32[8,128], index: 5, kind: output, shape index: {}]
  %s6 = sld [smem:[#allocation0]]
  $region38: #{snow_classifier_forward.1} parent=0
    _
  %s8 = ssub.s32 1, %s6
  %s9 = scalar_select 0, %s8, %s6
  $region1: #{snow_classifier_forward.1} parent=0
    #allocation4 [shape = 'u8[2048]{0}', space=smem, size = 0x800, scoped, tag = 'input window, operand 1, single buffered']
    #allocation5 [shape = 's32[1]{0}', space=sflag, size = 0x4, scoped, tag = 'scoped memory for snow_classifier_forward.1']
    #allocation6 [shape = 'u8[512]{0}', space=smem, size = 0x200, scoped, tag = 'input window, operand 2, single buffered']
    #allocation7 [shape = 's32[1]{0}', space=sflag, size = 0x4, scoped, tag = 'scoped memory for snow_classifier_forward.1']
    %10 = vsyncpa [#allocation5], 0
    %11 = vsyncpa [#allocation7], 0
    // Predicated region
    $region2: #{snow_classifier_forward.1} parent=1 // pred_check
      _
    $region3: #{snow_classifier_forward.1} parent=1 // pred_check_branch
      %13 = sbr.rel (0) target = $region5
    $region4: #{snow_classifier_forward.1} parent=1 // pred_region
      _
    $region5: #{snow_classifier_forward.1} parent=1 // pred_fallthru
      _
    // Predicated region
    $region6: #{snow_classifier_forward.1} parent=1 // pred_check
      _
    $region7: #{snow_classifier_forward.1} parent=1 // pred_check_branch
      %15 = sbr.rel (0) target = $region9
    $region8: #{snow_classifier_forward.1} parent=1 // pred_region
      %s17 = ssub.s32 64, 64
      %18 = vsyncadd [#allocation5], %s17
      %s20 = sshll.u32 %s1, 4
      %s21 = int_to_ptr.vmem [resolvable:$true] %s20
      %23 = dma.vmem_to_smem %s21, 64, [#allocation4], [#allocation5]
    $region9: #{snow_classifier_forward.1} parent=1 // pred_fallthru
      _
    // Predicated region
    $region10: #{snow_classifier_forward.1} parent=1 // pred_check
      _
    $region11: #{snow_classifier_forward.1} parent=1 // pred_check_branch
      %25 = sbr.rel (0) target = $region13
    $region12: #{snow_classifier_forward.1} parent=1 // pred_region
      %s27 = ssub.s32 16, 16
      %28 = vsyncadd [#allocation7], %s27
      %s30 = sshll.u32 %s2, 4
      %s31 = int_to_ptr.vmem [resolvable:$true] %s30
      %33 = dma.vmem_to_smem %s31, 16, [#allocation6], [#allocation7]
    $region13: #{snow_classifier_forward.1} parent=1 // pred_fallthru
      _
    // Predicated region
    $region14: #{snow_classifier_forward.1} parent=1 // pred_check
      _
    $region15: #{snow_classifier_forward.1} parent=1 // pred_check_branch
      %35 = sbr.rel (0) target = $region17
    $region16: #{snow_classifier_forward.1} parent=1 // pred_region
      _
    $region17: #{snow_classifier_forward.1} parent=1 // pred_fallthru
      _
    // Predicated region
    $region18: #{snow_classifier_forward.1} parent=1 // pred_check
      _
    $region19: #{snow_classifier_forward.1} parent=1 // pred_check_branch
      %37 = sbr.rel (0) target = $region21
    $region20: #{snow_classifier_forward.1} parent=1 // pred_region
      _
    $region21: #{snow_classifier_forward.1} parent=1 // pred_fallthru
      _
    // Predicated region
    $region22: #{snow_classifier_forward.1} parent=1 // pred_check
      _
    $region23: #{snow_classifier_forward.1} parent=1 // pred_check_branch
      %39 = sbr.rel (0) target = $region25
    $region24: #{snow_classifier_forward.1} parent=1 // pred_region
      %40 = dma.done [#allocation5], 64
    $region25: #{snow_classifier_forward.1} parent=1 // pred_fallthru
      _
    // Predicated region
    $region26: #{snow_classifier_forward.1} parent=1 // pred_check
      _
    $region27: #{snow_classifier_forward.1} parent=1 // pred_check_branch
      %42 = sbr.rel (0) target = $region29
    $region28: #{snow_classifier_forward.1} parent=1 // pred_region
      %43 = dma.done [#allocation7], 16
    $region29: #{snow_classifier_forward.1} parent=1 // pred_fallthru
      _
    %44 = sfence
    %46 = vst [vmem:[#allocation2] sm:$0xff] 0.0
    %47 = vst [vmem:[#allocation2 + $0x38] sm:$0xff] 0.0
    %v48 = vld [vmem:[%s0] sm:$0xff]
    %v49 = vld [vmem:[%s0 + $0x8] sm:$0xff]
    %v50 = vld [vmem:[%s0 + $0x10] sm:$0xff]
    %v51 = vld [vmem:[%s0 + $0x18] sm:$0xff]
    %v52 = vld [vmem:[%s0 + $0x20] sm:$0xff]
    %v53 = vld [vmem:[%s0 + $0x28] sm:$0xff]
    %v54 = vld [vmem:[%s0 + $0x30] sm:$0xff]
    %55 = vst [vmem:[#allocation2 + $0x8] sm:$0xff] %v48
    %56 = vst [vmem:[#allocation2 + $0x10] sm:$0xff] %v49
    %57 = vst [vmem:[#allocation2 + $0x18] sm:$0xff] %v50
    %58 = vst [vmem:[#allocation2 + $0x20] sm:$0xff] %v51
    %59 = vst [vmem:[#allocation2 + $0x28] sm:$0xff] %v52
    %60 = vst [vmem:[#allocation2 + $0x30] sm:$0xff] %v53
    %vm61 = vcmask 130048
    %62 = vst.msk [vmem:[#allocation2 + $0x38] sm:$0xff] %vm61, %v54
    %63 = vst [vmem:[#allocation3 + $0x30] sm:$0xff] 0.0
    %64 = vst [vmem:[#allocation3 + $0x68] sm:$0xff] 0.0
    %65 = vst [vmem:[#allocation3 + $0xa0] sm:$0xff] 0.0
    %66 = vst [vmem:[#allocation3 + $0xd8] sm:$0xff] 0.0
    %v67 = vlaneseq
    %v68 = vand.u32 %v67, 127
    %v69 = vadd.s32 %v68, 128
    %v70 = vadd.s32 %v68, 256
    %v71 = vadd.s32 %v68, 384
    %v72 = vadd.s32 %v68, 512
    %v73 = vadd.s32 %v68, 640
    %v74 = vadd.s32 %v68, 768
    %vm75 = vcmp.lt.s32.totalorder %v68, 0
    %v76 = vsub.s32 0, %v68
    %v77 = vsel %vm75, %v76, %v68
    %v78 = vmul.u32.u64.compose %v77, 2454267026
    %v79 = vextract.low.u32 %v78
    %v80 = vextract.high.u32 %v78
    %vm81 = vc.u32 %v79, 2454267026
    %v82 = vsel %vm81, 1, 0
    %v83 = vadd.s32 %v80, %v82
    %v84 = vshrl.u32 %v83, 4
    %v85 = vmul.u32 %v84, 28
    %v86 = vsub.s32 %v77, %v85
    %v87 = vsub.s32 0, %v86
    %v88 = vsel %vm75, %v87, %v86
    %vm89 = vcmp.lt.s32.totalorder %v69, 0
    %v90 = vsub.s32 0, %v69
    %v91 = vsel %vm89, %v90, %v69
    %v92 = vmul.u32.u64.compose %v91, 2454267026
    %v93 = vextract.low.u32 %v92
    %v94 = vextract.high.u32 %v92
    %vm95 = vc.u32 %v93, 2454267026
    %v96 = vsel %vm95, 1, 0
    %v97 = vadd.s32 %v94, %v96
    %v98 = vshrl.u32 %v97, 4
    %v99 = vmul.u32 %v98, 28
    %v100 = vsub.s32 %v91, %v99
    %v101 = vsub.s32 0, %v100
    %v102 = vsel %vm89, %v101, %v100
    %vm103 = vcmp.lt.s32.totalorder %v70, 0
    %v104 = vsub.s32 0, %v70
    %v105 = vsel %vm103, %v104, %v70
    %v106 = vmul.u32.u64.compose %v105, 2454267026
    %v107 = vextract.low.u32 %v106
    %v108 = vextract.high.u32 %v106
    %vm109 = vc.u32 %v107, 2454267026
    %v110 = vsel %vm109, 1, 0
    %v111 = vadd.s32 %v108, %v110
    %v112 = vshrl.u32 %v111, 4
    %v113 = vmul.u32 %v112, 28
    %v114 = vsub.s32 %v105, %v113
    %v115 = vsub.s32 0, %v114
    %v116 = vsel %vm103, %v115, %v114
    %vm117 = vcmp.lt.s32.totalorder %v71, 0
    %v118 = vsub.s32 0, %v71
    %v119 = vsel %vm117, %v118, %v71
    %v120 = vmul.u32.u64.compose %v119, 2454267026
    %v121 = vextract.low.u32 %v120
    %v122 = vextract.high.u32 %v120
    %vm123 = vc.u32 %v121, 2454267026
    %v124 = vsel %vm123, 1, 0
    %v125 = vadd.s32 %v122, %v124
    %v126 = vshrl.u32 %v125, 4
    %v127 = vmul.u32 %v126, 28
    %v128 = vsub.s32 %v119, %v127
    %v129 = vsub.s32 0, %v128
    %v130 = vsel %vm117, %v129, %v128
    %vm131 = vcmp.lt.s32.totalorder %v72, 0
    %v132 = vsub.s32 0, %v72
    %v133 = vsel %vm131, %v132, %v72
    %v134 = vmul.u32.u64.compose %v133, 2454267026
    %v135 = vextract.low.u32 %v134
    %v136 = vextract.high.u32 %v134
    %vm137 = vc.u32 %v135, 2454267026
    %v138 = vsel %vm137, 1, 0
    %v139 = vadd.s32 %v136, %v138
    %v140 = vshrl.u32 %v139, 4
    %v141 = vmul.u32 %v140, 28
    %v142 = vsub.s32 %v133, %v141
    %v143 = vsub.s32 0, %v142
    %v144 = vsel %vm131, %v143, %v142
    %vm145 = vcmp.lt.s32.totalorder %v73, 0
    %v146 = vsub.s32 0, %v73
    %v147 = vsel %vm145, %v146, %v73
    %v148 = vmul.u32.u64.compose %v147, 2454267026
    %v149 = vextract.low.u32 %v148
    %v150 = vextract.high.u32 %v148
    %vm151 = vc.u32 %v149, 2454267026
    %v152 = vsel %vm151, 1, 0
    %v153 = vadd.s32 %v150, %v152
    %v154 = vshrl.u32 %v153, 4
    %v155 = vmul.u32 %v154, 28
    %v156 = vsub.s32 %v147, %v155
    %v157 = vsub.s32 0, %v156
    %v158 = vsel %vm145, %v157, %v156
    %vm159 = vcmp.lt.s32.totalorder %v74, 0
    %v160 = vsub.s32 0, %v74
    %v161 = vsel %vm159, %v160, %v74
    %v162 = vmul.u32.u64.compose %v161, 2454267026
    %v163 = vextract.low.u32 %v162
    %v164 = vextract.high.u32 %v162
    %vm165 = vc.u32 %v163, 2454267026
    %v166 = vsel %vm165, 1, 0
    %v167 = vadd.s32 %v164, %v166
    %v168 = vshrl.u32 %v167, 4
    %v169 = vmul.u32 %v168, 28
    %v170 = vsub.s32 %v161, %v169
    %v171 = vsub.s32 0, %v170
    %v172 = vsel %vm159, %v171, %v170
    %vm173 = vcmp.ne.s32.totalorder %v88, 0
    %vm174 = vcmp.ne.s32.totalorder %v102, 0
    %vm175 = vcmp.ne.s32.totalorder %v116, 0
    %vm176 = vcmp.ne.s32.totalorder %v130, 0
    %vm177 = vcmp.ne.s32.totalorder %v144, 0
    %vm178 = vcmp.ne.s32.totalorder %v158, 0
    %vm179 = vcmp.ne.s32.totalorder %v172, 0
    %vm180 = vcmp.lt.s32.totalorder %v88, 0
    %vm181 = vcmp.lt.s32.totalorder %v102, 0
    %vm182 = vcmp.lt.s32.totalorder %v116, 0
    %vm183 = vcmp.lt.s32.totalorder %v130, 0
    %vm184 = vcmp.lt.s32.totalorder %v144, 0
    %vm185 = vcmp.lt.s32.totalorder %v158, 0
    %vm186 = vcmp.lt.s32.totalorder %v172, 0
    %vm187 = vmand %vm180, %vm173
    %vm188 = vmand %vm181, %vm174
    %vm189 = vmand %vm182, %vm175
    %vm190 = vmand %vm183, %vm176
    %vm191 = vmand %vm184, %vm177
    %vm192 = vmand %vm185, %vm178
    %vm193 = vmand %vm186, %vm179
    %v194 = vadd.s32 %v88, 28
    %v195 = vadd.s32 %v102, 28
    %v196 = vadd.s32 %v116, 28
    %v197 = vadd.s32 %v130, 28
    %v198 = vadd.s32 %v144, 28
    %v199 = vadd.s32 %v158, 28
    %v200 = vadd.s32 %v172, 28
    %v201 = vsel %vm187, %v194, %v88
    %v202 = vsel %vm188, %v195, %v102
    %v203 = vsel %vm189, %v196, %v116
    %v204 = vsel %vm190, %v197, %v130
    %v205 = vsel %vm191, %v198, %v144
    %v206 = vsel %vm192, %v199, %v158
    %v207 = vsel %vm193, %v200, %v172
    %vm208 = vcmp.gt.s32.totalorder %v201, 0
    %vm209 = vcmp.gt.s32.totalorder %v202, 0
    %vm210 = vcmp.gt.s32.totalorder %v203, 0
    %vm211 = vcmp.gt.s32.totalorder %v204, 0
    %vm212 = vcmp.gt.s32.totalorder %v205, 0
    %vm213 = vcmp.gt.s32.totalorder %v206, 0
    %vm214 = vcmp.gt.s32.totalorder %v207, 0
    %vm215 = vcmp.lt.s32.totalorder %v201, 27
    %vm216 = vcmp.lt.s32.totalorder %v202, 27
    %vm217 = vcmp.lt.s32.totalorder %v203, 27
    %vm218 = vcmp.lt.s32.totalorder %v204, 27
    %vm219 = vcmp.lt.s32.totalorder %v205, 27
    %vm220 = vcmp.lt.s32.totalorder %v206, 27
    %vm221 = vcmp.lt.s32.totalorder %v207, 27
    %s222 = sld [smem:[#allocation4]]
    %s223 = sld [smem:[#allocation4 + $0x1]]
    %s224 = sld [smem:[#allocation4 + $0x2]]
    %s225 = sld [smem:[#allocation4 + $0x3]]
    %s226 = sld [smem:[#allocation4 + $0x4]]
    %s227 = sld [smem:[#allocation4 + $0x5]]
    %s228 = sld [smem:[#allocation4 + $0x6]]
    %s229 = sld [smem:[#allocation4 + $0x7]]
    %s230 = sld [smem:[#allocation4 + $0x8]]
    %s231 = sld [smem:[#allocation4 + $0x80]]
    %s232 = sld [smem:[#allocation4 + $0x81]]
    %s233 = sld [smem:[#allocation4 + $0x82]]
    %s234 = sld [smem:[#allocation4 + $0x83]]
    %s235 = sld [smem:[#allocation4 + $0x84]]
    %s236 = sld [smem:[#allocation4 + $0x85]]
    %s237 = sld [smem:[#allocation4 + $0x86]]
    %s238 = sld [smem:[#allocation4 + $0x87]]
    %s239 = sld [smem:[#allocation4 + $0x88]]
    %s240 = sld [smem:[#allocation4 + $0x100]]
    %s241 = sld [smem:[#allocation4 + $0x101]]
    %s242 = sld [smem:[#allocation4 + $0x102]]
    %s243 = sld [smem:[#allocation4 + $0x103]]
    %s244 = sld [smem:[#allocation4 + $0x104]]
    %s245 = sld [smem:[#allocation4 + $0x105]]
    %s246 = sld [smem:[#allocation4 + $0x106]]
    %s247 = sld [smem:[#allocation4 + $0x107]]
    %s248 = sld [smem:[#allocation4 + $0x108]]
    %s249 = sld [smem:[#allocation4 + $0x180]]
    %s250 = sld [smem:[#allocation4 + $0x181]]
    %s251 = sld [smem:[#allocation4 + $0x182]]
    %s252 = sld [smem:[#allocation4 + $0x183]]
    %s253 = sld [smem:[#allocation4 + $0x184]]
    %s254 = sld [smem:[#allocation4 + $0x185]]
    %s255 = sld [smem:[#allocation4 + $0x186]]
    %s256 = sld [smem:[#allocation4 + $0x187]]
    %s257 = sld [smem:[#allocation4 + $0x188]]
    %s258 = sld [smem:[#allocation6]]
    %s259 = sld [smem:[#allocation6 + $0x1]]
    %s260 = sld [smem:[#allocation6 + $0x2]]
    %s261 = sld [smem:[#allocation6 + $0x3]]
    %s262 = smul.u32 0, 8
    %s263 = smul.addr %s262, 8
    %s264 = scalar_lea.vmem [#allocation2], %s263
    %v265 = vld [vmem:[%s264] sm:$0xff]
    %v266 = vld [vmem:[%s264 + $0x8] sm:$0xff]
    %v267 = vld [vmem:[%s264 + $0x10] sm:$0xff]
    %v268 = vld [vmem:[%s264 + $0x18] sm:$0xff]
    %v269 = vld [vmem:[%s264 + $0x20] sm:$0xff]
    %v270 = vld [vmem:[%s264 + $0x28] sm:$0xff]
    %v271 = vld [vmem:[%s264 + $0x30] sm:$0xff]
    %v272 = vld [vmem:[%s264 + $0x38] sm:$0xff]
    %v273 = vstv %s258
    %v274 = vadd.f32 %v273, 0.0
    %v275 = vstv %s259
    %v276 = vadd.f32 %v275, 0.0
    %v277 = vstv %s260
    %v278 = vadd.f32 %v277, 0.0
    %v279 = vstv %s261
    %v280 = vadd.f32 %v279, 0.0
    %v281 = vsel %vm208, 1, 0
    %v282 = vsel %vm209, 1, 0
    %v283 = vsel %vm210, 1, 0
    %v284 = vsel %vm211, 1, 0
    %v285 = vsel %vm212, 1, 0
    %v286 = vsel %vm213, 1, 0
    %v287 = vsel %vm214, 1, 0
    %vm288 = vcmp.eq.s32.totalorder %v281, 1
    %vm289 = vcmp.eq.s32.totalorder %v282, 1
    %vm290 = vcmp.eq.s32.totalorder %v283, 1
    %vm291 = vcmp.eq.s32.totalorder %v284, 1
    %vm292 = vcmp.eq.s32.totalorder %v285, 1
    %vm293 = vcmp.eq.s32.totalorder %v286, 1
    %vm294 = vcmp.eq.s32.totalorder %v287, 1
    %302 = vrot.lane.b32.xlu0 %v265, 29
    %v303 = vpop.permute.xlu0 %302
    %304 = vrot.lane.b32.xlu0 %v266, 29
    %v305 = vpop.permute.xlu0 %304
    %306 = vrot.lane.b32.xlu0 %v267, 29
    %v307 = vpop.permute.xlu0 %306
    %308 = vrot.lane.b32.xlu0 %v268, 29
    %v309 = vpop.permute.xlu0 %308
    %310 = vrot.lane.b32.xlu0 %v269, 29
    %v311 = vpop.permute.xlu0 %310
    %312 = vrot.lane.b32.xlu0 %v270, 29
    %v313 = vpop.permute.xlu0 %312
    %314 = vrot.lane.b32.xlu0 %v271, 29
    %v315 = vpop.permute.xlu0 %314
    %vm316 = vcmask 236544
    %v317 = vsel %vm316, %v303, %v305
    %v318 = vsel %vm316, %v305, %v307
    %v319 = vsel %vm316, %v307, %v309
    %v320 = vsel %vm316, %v309, %v311
    %v321 = vsel %vm316, %v311, %v313
    %v322 = vsel %vm316, %v313, %v315
    %v330 = vsel %vm288, %v317, 0.0
    %v331 = vsel %vm289, %v318, 0.0
    %v332 = vsel %vm290, %v319, 0.0
    %v333 = vsel %vm291, %v320, 0.0
    %v334 = vsel %vm292, %v321, 0.0
    %v335 = vsel %vm293, %v322, 0.0
    %v336 = vsel %vm294, %v315, 0.0
    %v337 = vstv %s222
    %v338 = vmul.f32 %v337, %v330
    %v339 = vmul.f32 %v337, %v331
    %v340 = vmul.f32 %v337, %v332
    %v341 = vmul.f32 %v337, %v333
    %v342 = vmul.f32 %v337, %v334
    %v343 = vmul.f32 %v337, %v335
    %v344 = vmul.f32 %v337, %v336
    %v345 = vadd.f32 %v274, %v338
    %v346 = vadd.f32 %v274, %v339
    %v347 = vadd.f32 %v274, %v340
    %v348 = vadd.f32 %v274, %v341
    %v349 = vadd.f32 %v274, %v342
    %v350 = vadd.f32 %v274, %v343
    %v351 = vadd.f32 %v274, %v344
    %v352 = vstv %s231
    %v353 = vmul.f32 %v352, %v330
    %v354 = vmul.f32 %v352, %v331
    %v355 = vmul.f32 %v352, %v332
    %v356 = vmul.f32 %v352, %v333
    %v357 = vmul.f32 %v352, %v334
    %v358 = vmul.f32 %v352, %v335
    %v359 = vmul.f32 %v352, %v336
    %v360 = vadd.f32 %v276, %v353
    %v361 = vadd.f32 %v276, %v354
    %v362 = vadd.f32 %v276, %v355
    %v363 = vadd.f32 %v276, %v356
    %v364 = vadd.f32 %v276, %v357
    %v365 = vadd.f32 %v276, %v358
    %v366 = vadd.f32 %v276, %v359
    %v367 = vstv %s240
    %v368 = vmul.f32 %v367, %v330
    %v369 = vmul.f32 %v367, %v331
    %v370 = vmul.f32 %v367, %v332
    %v371 = vmul.f32 %v367, %v333
    %v372 = vmul.f32 %v367, %v334
    %v373 = vmul.f32 %v367, %v335
    %v374 = vmul.f32 %v367, %v336
    %v375 = vadd.f32 %v278, %v368
    %v376 = vadd.f32 %v278, %v369
    %v377 = vadd.f32 %v278, %v370
    %v378 = vadd.f32 %v278, %v371
    %v379 = vadd.f32 %v278, %v372
    %v380 = vadd.f32 %v278, %v373
    %v381 = vadd.f32 %v278, %v374
    %v382 = vstv %s249
    %v383 = vmul.f32 %v382, %v330
    %v384 = vmul.f32 %v382, %v331
    %v385 = vmul.f32 %v382, %v332
    %v386 = vmul.f32 %v382, %v333
    %v387 = vmul.f32 %v382, %v334
    %v388 = vmul.f32 %v382, %v335
    %v389 = vmul.f32 %v382, %v336
    %v390 = vadd.f32 %v280, %v383
    %v391 = vadd.f32 %v280, %v384
    %v392 = vadd.f32 %v280, %v385
    %v393 = vadd.f32 %v280, %v386
    %v394 = vadd.f32 %v280, %v387
    %v395 = vadd.f32 %v280, %v388
    %v396 = vadd.f32 %v280, %v389
    %v397 = vstv %s223
    %v398 = vmul.f32 %v397, %v265
    %v399 = vmul.f32 %v397, %v266
    %v400 = vmul.f32 %v397, %v267
    %v401 = vmul.f32 %v397, %v268
    %v402 = vmul.f32 %v397, %v269
    %v403 = vmul.f32 %v397, %v270
    %v404 = vmul.f32 %v397, %v271
    %412 = vrot.lane.b32.xlu0 %v398, 28
    %v413 = vpop.permute.xlu0 %412
    %414 = vrot.lane.b32.xlu0 %v399, 28
    %v415 = vpop.permute.xlu0 %414
    %416 = vrot.lane.b32.xlu0 %v400, 28
    %v417 = vpop.permute.xlu0 %416
    %418 = vrot.lane.b32.xlu0 %v401, 28
    %v419 = vpop.permute.xlu0 %418
    %420 = vrot.lane.b32.xlu0 %v402, 28
    %v421 = vpop.permute.xlu0 %420
    %422 = vrot.lane.b32.xlu0 %v403, 28
    %v423 = vpop.permute.xlu0 %422
    %424 = vrot.lane.b32.xlu0 %v404, 28
    %v425 = vpop.permute.xlu0 %424
    %vm426 = vcmask 228352
    %v427 = vsel %vm426, %v413, %v415
    %v428 = vsel %vm426, %v415, %v417
    %v429 = vsel %vm426, %v417, %v419
    %v430 = vsel %vm426, %v419, %v421
    %v431 = vsel %vm426, %v421, %v423
    %v432 = vsel %vm426, %v423, %v425
    %v440 = vadd.f32 %v345, %v427
    %v441 = vadd.f32 %v346, %v428
    %v442 = vadd.f32 %v347, %v429
    %v443 = vadd.f32 %v348, %v430
    %v444 = vadd.f32 %v349, %v431
    %v445 = vadd.f32 %v350, %v432
    %v446 = vadd.f32 %v351, %v425
    %v447 = vstv %s232
    %v448 = vmul.f32 %v447, %v265
    %v449 = vmul.f32 %v447, %v266
    %v450 = vmul.f32 %v447, %v267
    %v451 = vmul.f32 %v447, %v268
    %v452 = vmul.f32 %v447, %v269
    %v453 = vmul.f32 %v447, %v270
    %v454 = vmul.f32 %v447, %v271
    %462 = vrot.lane.b32.xlu0 %v448, 28
    %v463 = vpop.permute.xlu0 %462
    %464 = vrot.lane.b32.xlu0 %v449, 28
    %v465 = vpop.permute.xlu0 %464
    %466 = vrot.lane.b32.xlu0 %v450, 28
    %v467 = vpop.permute.xlu0 %466
    %468 = vrot.lane.b32.xlu0 %v451, 28
    %v469 = vpop.permute.xlu0 %468
    %470 = vrot.lane.b32.xlu0 %v452, 28
    %v471 = vpop.permute.xlu0 %470
    %472 = vrot.lane.b32.xlu0 %v453, 28
    %v473 = vpop.permute.xlu0 %472
    %474 = vrot.lane.b32.xlu0 %v454, 28
    %v475 = vpop.permute.xlu0 %474
    %v476 = vsel %vm426, %v463, %v465
    %v477 = vsel %vm426, %v465, %v467
    %v478 = vsel %vm426, %v467, %v469
    %v479 = vsel %vm426, %v469, %v471
    %v480 = vsel %vm426, %v471, %v473
    %v481 = vsel %vm426, %v473, %v475
    %v489 = vadd.f32 %v360, %v476
    %v490 = vadd.f32 %v361, %v477
    %v491 = vadd.f32 %v362, %v478
    %v492 = vadd.f32 %v363, %v479
    %v493 = vadd.f32 %v364, %v480
    %v494 = vadd.f32 %v365, %v481
    %v495 = vadd.f32 %v366, %v475
    %v496 = vstv %s241
    %v497 = vmul.f32 %v496, %v265
    %v498 = vmul.f32 %v496, %v266
    %v499 = vmul.f32 %v496, %v267
    %v500 = vmul.f32 %v496, %v268
    %v501 = vmul.f32 %v496, %v269
    %v502 = vmul.f32 %v496, %v270
    %v503 = vmul.f32 %v496, %v271
    %511 = vrot.lane.b32.xlu0 %v497, 28
    %v512 = vpop.permute.xlu0 %511
    %513 = vrot.lane.b32.xlu0 %v498, 28
    %v514 = vpop.permute.xlu0 %513
    %515 = vrot.lane.b32.xlu0 %v499, 28
    %v516 = vpop.permute.xlu0 %515
    %517 = vrot.lane.b32.xlu0 %v500, 28
    %v518 = vpop.permute.xlu0 %517
    %519 = vrot.lane.b32.xlu0 %v501, 28
    %v520 = vpop.permute.xlu0 %519
    %521 = vrot.lane.b32.xlu0 %v502, 28
    %v522 = vpop.permute.xlu0 %521
    %523 = vrot.lane.b32.xlu0 %v503, 28
    %v524 = vpop.permute.xlu0 %523
    %v525 = vsel %vm426, %v512, %v514
    %v526 = vsel %vm426, %v514, %v516
    %v527 = vsel %vm426, %v516, %v518
    %v528 = vsel %vm426, %v518, %v520
    %v529 = vsel %vm426, %v520, %v522
    %v530 = vsel %vm426, %v522, %v524
    %v538 = vadd.f32 %v375, %v525
    %v539 = vadd.f32 %v376, %v526
    %v540 = vadd.f32 %v377, %v527
    %v541 = vadd.f32 %v378, %v528
    %v542 = vadd.f32 %v379, %v529
    %v543 = vadd.f32 %v380, %v530
    %v544 = vadd.f32 %v381, %v524
    %v545 = vstv %s250
    %v546 = vmul.f32 %v545, %v265
    %v547 = vmul.f32 %v545, %v266
    %v548 = vmul.f32 %v545, %v267
    %v549 = vmul.f32 %v545, %v268
    %v550 = vmul.f32 %v545, %v269
    %v551 = vmul.f32 %v545, %v270
    %v552 = vmul.f32 %v545, %v271
    %560 = vrot.lane.b32.xlu0 %v546, 28
    %v561 = vpop.permute.xlu0 %560
    %562 = vrot.lane.b32.xlu0 %v547, 28
    %v563 = vpop.permute.xlu0 %562
    %564 = vrot.lane.b32.xlu0 %v548, 28
    %v565 = vpop.permute.xlu0 %564
    %566 = vrot.lane.b32.xlu0 %v549, 28
    %v567 = vpop.permute.xlu0 %566
    %568 = vrot.lane.b32.xlu0 %v550, 28
    %v569 = vpop.permute.xlu0 %568
    %570 = vrot.lane.b32.xlu0 %v551, 28
    %v571 = vpop.permute.xlu0 %570
    %572 = vrot.lane.b32.xlu0 %v552, 28
    %v573 = vpop.permute.xlu0 %572
    %v574 = vsel %vm426, %v561, %v563
    %v575 = vsel %vm426, %v563, %v565
    %v576 = vsel %vm426, %v565, %v567
    %v577 = vsel %vm426, %v567, %v569
    %v578 = vsel %vm426, %v569, %v571
    %v579 = vsel %vm426, %v571, %v573
    %v587 = vadd.f32 %v390, %v574
    %v588 = vadd.f32 %v391, %v575
    %v589 = vadd.f32 %v392, %v576
    %v590 = vadd.f32 %v393, %v577
    %v591 = vadd.f32 %v394, %v578
    %v592 = vadd.f32 %v395, %v579
    %v593 = vadd.f32 %v396, %v573
    %v594 = vsel %vm215, 1, 0
    %v595 = vsel %vm216, 1, 0
    %v596 = vsel %vm217, 1, 0
    %v597 = vsel %vm218, 1, 0
    %v598 = vsel %vm219, 1, 0
    %v599 = vsel %vm220, 1, 0
    %v600 = vsel %vm221, 1, 0
    %vm601 = vcmp.eq.s32.totalorder %v594, 1
    %vm602 = vcmp.eq.s32.totalorder %v595, 1
    %vm603 = vcmp.eq.s32.totalorder %v596, 1
    %vm604 = vcmp.eq.s32.totalorder %v597, 1
    %vm605 = vcmp.eq.s32.totalorder %v598, 1
    %vm606 = vcmp.eq.s32.totalorder %v599, 1
    %vm607 = vcmp.eq.s32.totalorder %v600, 1
    %608 = vrot.lane.b32.xlu0 %v265, 27
    %v609 = vpop.permute.xlu0 %608
    %610 = vrot.lane.b32.xlu0 %v266, 27
    %v611 = vpop.permute.xlu0 %610
    %612 = vrot.lane.b32.xlu0 %v267, 27
    %v613 = vpop.permute.xlu0 %612
    %614 = vrot.lane.b32.xlu0 %v268, 27
    %v615 = vpop.permute.xlu0 %614
    %616 = vrot.lane.b32.xlu0 %v269, 27
    %v617 = vpop.permute.xlu0 %616
    %618 = vrot.lane.b32.xlu0 %v270, 27
    %v619 = vpop.permute.xlu0 %618
    %620 = vrot.lane.b32.xlu0 %v271, 27
    %v621 = vpop.permute.xlu0 %620
    %vm622 = vcmask 220160
    %v623 = vsel %vm622, %v609, %v611
    %v624 = vsel %vm622, %v611, %v613
    %v625 = vsel %vm622, %v613, %v615
    %v626 = vsel %vm622, %v615, %v617
    %v627 = vsel %vm622, %v617, %v619
    %v628 = vsel %vm622, %v619, %v621
    %v636 = vsel %vm601, %v623, 0.0
    %v637 = vsel %vm602, %v624, 0.0
    %v638 = vsel %vm603, %v625, 0.0
    %v639 = vsel %vm604, %v626, 0.0
    %v640 = vsel %vm605, %v627, 0.0
    %v641 = vsel %vm606, %v628, 0.0
    %v642 = vsel %vm607, %v621, 0.0
    %v643 = vstv %s224
    %v644 = vmul.f32 %v643, %v636
    %v645 = vmul.f32 %v643, %v637
    %v646 = vmul.f32 %v643, %v638
    %v647 = vmul.f32 %v643, %v639
    %v648 = vmul.f32 %v643, %v640
    %v649 = vmul.f32 %v643, %v641
    %v650 = vmul.f32 %v643, %v642
    %v651 = vadd.f32 %v440, %v644
    %v652 = vadd.f32 %v441, %v645
    %v653 = vadd.f32 %v442, %v646
    %v654 = vadd.f32 %v443, %v647
    %v655 = vadd.f32 %v444, %v648
    %v656 = vadd.f32 %v445, %v649
    %v657 = vadd.f32 %v446, %v650
    %v658 = vstv %s233
    %v659 = vmul.f32 %v658, %v636
    %v660 = vmul.f32 %v658, %v637
    %v661 = vmul.f32 %v658, %v638
    %v662 = vmul.f32 %v658, %v639
    %v663 = vmul.f32 %v658, %v640
    %v664 = vmul.f32 %v658, %v641
    %v665 = vmul.f32 %v658, %v642
    %v666 = vadd.f32 %v489, %v659
    %v667 = vadd.f32 %v490, %v660
    %v668 = vadd.f32 %v491, %v661
    %v669 = vadd.f32 %v492, %v662
    %v670 = vadd.f32 %v493, %v663
    %v671 = vadd.f32 %v494, %v664
    %v672 = vadd.f32 %v495, %v665
    %v673 = vstv %s242
    %v674 = vmul.f32 %v673, %v636
    %v675 = vmul.f32 %v673, %v637
    %v676 = vmul.f32 %v673, %v638
    %v677 = vmul.f32 %v673, %v639
    %v678 = vmul.f32 %v673, %v640
    %v679 = vmul.f32 %v673, %v641
    %v680 = vmul.f32 %v673, %v642
    %v681 = vadd.f32 %v538, %v674
    %v682 = vadd.f32 %v539, %v675
    %v683 = vadd.f32 %v540, %v676
    %v684 = vadd.f32 %v541, %v677
    %v685 = vadd.f32 %v542, %v678
    %v686 = vadd.f32 %v543, %v679
    %v687 = vadd.f32 %v544, %v680
    %v688 = vstv %s251
    %v689 = vmul.f32 %v688, %v636
    %v690 = vmul.f32 %v688, %v637
    %v691 = vmul.f32 %v688, %v638
    %v692 = vmul.f32 %v688, %v639
    %v693 = vmul.f32 %v688, %v640
    %v694 = vmul.f32 %v688, %v641
    %v695 = vmul.f32 %v688, %v642
    %v696 = vadd.f32 %v587, %v689
    %v697 = vadd.f32 %v588, %v690
    %v698 = vadd.f32 %v589, %v691
    %v699 = vadd.f32 %v590, %v692
    %v700 = vadd.f32 %v591, %v693
    %v701 = vadd.f32 %v592, %v694
    %v702 = vadd.f32 %v593, %v695
    %704 = vrot.lane.b32.xlu0 %v265, 1
    %v705 = vpop.permute.xlu0 %704
    %706 = vrot.lane.b32.xlu0 %v266, 1
    %v707 = vpop.permute.xlu0 %706
    %708 = vrot.lane.b32.xlu0 %v267, 1
    %v709 = vpop.permute.xlu0 %708
    %710 = vrot.lane.b32.xlu0 %v268, 1
    %v711 = vpop.permute.xlu0 %710
    %712 = vrot.lane.b32.xlu0 %v269, 1
    %v713 = vpop.permute.xlu0 %712
    %714 = vrot.lane.b32.xlu0 %v270, 1
    %v715 = vpop.permute.xlu0 %714
    %716 = vrot.lane.b32.xlu0 %v271, 1
    %v717 = vpop.permute.xlu0 %716
    %718 = vrot.lane.b32.xlu0 %v272, 1
    %v719 = vpop.permute.xlu0 %718
    %vm720 = vcmask 7168
    %v721 = vsel %vm720, %v705, %v707
    %v722 = vsel %vm720, %v707, %v709
    %v723 = vsel %vm720, %v709, %v711
    %v724 = vsel %vm720, %v711, %v713
    %v725 = vsel %vm720, %v713, %v715
    %v726 = vsel %vm720, %v715, %v717
    %v727 = vsel %vm720, %v717, %v719
    %v735 = vsel %vm288, %v721, 0.0
    %v736 = vsel %vm289, %v722, 0.0
    %v737 = vsel %vm290, %v723, 0.0
    %v738 = vsel %vm291, %v724, 0.0
    %v739 = vsel %vm292, %v725, 0.0
    %v740 = vsel %vm293, %v726, 0.0
    %v741 = vsel %vm294, %v727, 0.0
    %v742 = vstv %s225
    %v743 = vmul.f32 %v742, %v735
    %v744 = vmul.f32 %v742, %v736
    %v745 = vmul.f32 %v742, %v737
    %v746 = vmul.f32 %v742, %v738
    %v747 = vmul.f32 %v742, %v739
    %v748 = vmul.f32 %v742, %v740
    %v749 = vmul.f32 %v742, %v741
    %v750 = vadd.f32 %v651, %v743
    %v751 = vadd.f32 %v652, %v744
    %v752 = vadd.f32 %v653, %v745
    %v753 = vadd.f32 %v654, %v746
    %v754 = vadd.f32 %v655, %v747
    %v755 = vadd.f32 %v656, %v748
    %v756 = vadd.f32 %v657, %v749
    %v757 = vstv %s234
    %v758 = vmul.f32 %v757, %v735
    %v759 = vmul.f32 %v757, %v736
    %v760 = vmul.f32 %v757, %v737
    %v761 = vmul.f32 %v757, %v738
    %v762 = vmul.f32 %v757, %v739
    %v763 = vmul.f32 %v757, %v740
    %v764 = vmul.f32 %v757, %v741
    %v765 = vadd.f32 %v666, %v758
    %v766 = vadd.f32 %v667, %v759
    %v767 = vadd.f32 %v668, %v760
    %v768 = vadd.f32 %v669, %v761
    %v769 = vadd.f32 %v670, %v762
    %v770 = vadd.f32 %v671, %v763
    %v771 = vadd.f32 %v672, %v764
    %v772 = vstv %s243
    %v773 = vmul.f32 %v772, %v735
    %v774 = vmul.f32 %v772, %v736
    %v775 = vmul.f32 %v772, %v737
    %v776 = vmul.f32 %v772, %v738
    %v777 = vmul.f32 %v772, %v739
    %v778 = vmul.f32 %v772, %v740
    %v779 = vmul.f32 %v772, %v741
    %v780 = vadd.f32 %v681, %v773
    %v781 = vadd.f32 %v682, %v774
    %v782 = vadd.f32 %v683, %v775
    %v783 = vadd.f32 %v684, %v776
    %v784 = vadd.f32 %v685, %v777
    %v785 = vadd.f32 %v686, %v778
    %v786 = vadd.f32 %v687, %v779
    %v787 = vstv %s252
    %v788 = vmul.f32 %v787, %v735
    %v789 = vmul.f32 %v787, %v736
    %v790 = vmul.f32 %v787, %v737
    %v791 = vmul.f32 %v787, %v738
    %v792 = vmul.f32 %v787, %v739
    %v793 = vmul.f32 %v787, %v740
    %v794 = vmul.f32 %v787, %v741
    %v795 = vadd.f32 %v696, %v788
    %v796 = vadd.f32 %v697, %v789
    %v797 = vadd.f32 %v698, %v790
    %v798 = vadd.f32 %v699, %v791
    %v799 = vadd.f32 %v700, %v792
    %v800 = vadd.f32 %v701, %v793
    %v801 = vadd.f32 %v702, %v794
    %v802 = vstv %s226
    %v803 = vmul.f32 %v802, %v266
    %v804 = vmul.f32 %v802, %v267
    %v805 = vmul.f32 %v802, %v268
    %v806 = vmul.f32 %v802, %v269
    %v807 = vmul.f32 %v802, %v270
    %v808 = vmul.f32 %v802, %v271
    %v809 = vmul.f32 %v802, %v272
    %v810 = vadd.f32 %v750, %v803
    %v811 = vadd.f32 %v751, %v804
    %v812 = vadd.f32 %v752, %v805
    %v813 = vadd.f32 %v753, %v806
    %v814 = vadd.f32 %v754, %v807
    %v815 = vadd.f32 %v755, %v808
    %v816 = vadd.f32 %v756, %v809
    %v817 = vstv %s235
    %v818 = vmul.f32 %v817, %v266
    %v819 = vmul.f32 %v817, %v267
    %v820 = vmul.f32 %v817, %v268
    %v821 = vmul.f32 %v817, %v269
    %v822 = vmul.f32 %v817, %v270
    %v823 = vmul.f32 %v817, %v271
    %v824 = vmul.f32 %v817, %v272
    %v825 = vadd.f32 %v765, %v818
    %v826 = vadd.f32 %v766, %v819
    %v827 = vadd.f32 %v767, %v820
    %v828 = vadd.f32 %v768, %v821
    %v829 = vadd.f32 %v769, %v822
    %v830 = vadd.f32 %v770, %v823
    %v831 = vadd.f32 %v771, %v824
    %v832 = vstv %s244
    %v833 = vmul.f32 %v832, %v266
    %v834 = vmul.f32 %v832, %v267
    %v835 = vmul.f32 %v832, %v268
    %v836 = vmul.f32 %v832, %v269
    %v837 = vmul.f32 %v832, %v270
    %v838 = vmul.f32 %v832, %v271
    %v839 = vmul.f32 %v832, %v272
    %v840 = vadd.f32 %v780, %v833
    %v841 = vadd.f32 %v781, %v834
    %v842 = vadd.f32 %v782, %v835
    %v843 = vadd.f32 %v783, %v836
    %v844 = vadd.f32 %v784, %v837
    %v845 = vadd.f32 %v785, %v838
    %v846 = vadd.f32 %v786, %v839
    %v847 = vstv %s253
    %v848 = vmul.f32 %v847, %v266
    %v849 = vmul.f32 %v847, %v267
    %v850 = vmul.f32 %v847, %v268
    %v851 = vmul.f32 %v847, %v269
    %v852 = vmul.f32 %v847, %v270
    %v853 = vmul.f32 %v847, %v271
    %v854 = vmul.f32 %v847, %v272
    %v855 = vadd.f32 %v795, %v848
    %v856 = vadd.f32 %v796, %v849
    %v857 = vadd.f32 %v797, %v850
    %v858 = vadd.f32 %v798, %v851
    %v859 = vadd.f32 %v799, %v852
    %v860 = vadd.f32 %v800, %v853
    %v861 = vadd.f32 %v801, %v854
    %862 = vrot.lane.b32.xlu0 %v266, 127
    %v863 = vpop.permute.xlu0 %862
    %864 = vrot.lane.b32.xlu0 %v267, 127
    %v865 = vpop.permute.xlu0 %864
    %866 = vrot.lane.b32.xlu0 %v268, 127
    %v867 = vpop.permute.xlu0 %866
    %868 = vrot.lane.b32.xlu0 %v269, 127
    %v869 = vpop.permute.xlu0 %868
    %870 = vrot.lane.b32.xlu0 %v270, 127
    %v871 = vpop.permute.xlu0 %870
    %872 = vrot.lane.b32.xlu0 %v271, 127
    %v873 = vpop.permute.xlu0 %872
    %874 = vrot.lane.b32.xlu0 %v272, 127
    %v875 = vpop.permute.xlu0 %874
    %vm876 = vcmask 1039360
    %v877 = vsel %vm876, %v863, %v865
    %v878 = vsel %vm876, %v865, %v867
    %v879 = vsel %vm876, %v867, %v869
    %v880 = vsel %vm876, %v869, %v871
    %v881 = vsel %vm876, %v871, %v873
    %v882 = vsel %vm876, %v873, %v875
    %v890 = vsel %vm601, %v877, 0.0
    %v891 = vsel %vm602, %v878, 0.0
    %v892 = vsel %vm603, %v879, 0.0
    %v893 = vsel %vm604, %v880, 0.0
    %v894 = vsel %vm605, %v881, 0.0
    %v895 = vsel %vm606, %v882, 0.0
    %v896 = vsel %vm607, %v875, 0.0
    %v897 = vstv %s227
    %v898 = vmul.f32 %v897, %v890
    %v899 = vmul.f32 %v897, %v891
    %v900 = vmul.f32 %v897, %v892
    %v901 = vmul.f32 %v897, %v893
    %v902 = vmul.f32 %v897, %v894
    %v903 = vmul.f32 %v897, %v895
    %v904 = vmul.f32 %v897, %v896
    %v905 = vadd.f32 %v810, %v898
    %v906 = vadd.f32 %v811, %v899
    %v907 = vadd.f32 %v812, %v900
    %v908 = vadd.f32 %v813, %v901
    %v909 = vadd.f32 %v814, %v902
    %v910 = vadd.f32 %v815, %v903
    %v911 = vadd.f32 %v816, %v904
    %v912 = vstv %s236
    %v913 = vmul.f32 %v912, %v890
    %v914 = vmul.f32 %v912, %v891
    %v915 = vmul.f32 %v912, %v892
    %v916 = vmul.f32 %v912, %v893
    %v917 = vmul.f32 %v912, %v894
    %v918 = vmul.f32 %v912, %v895
    %v919 = vmul.f32 %v912, %v896
    %v920 = vadd.f32 %v825, %v913
    %v921 = vadd.f32 %v826, %v914
    %v922 = vadd.f32 %v827, %v915
    %v923 = vadd.f32 %v828, %v916
    %v924 = vadd.f32 %v829, %v917
    %v925 = vadd.f32 %v830, %v918
    %v926 = vadd.f32 %v831, %v919
    %v927 = vstv %s245
    %v928 = vmul.f32 %v927, %v890
    %v929 = vmul.f32 %v927, %v891
    %v930 = vmul.f32 %v927, %v892
    %v931 = vmul.f32 %v927, %v893
    %v932 = vmul.f32 %v927, %v894
    %v933 = vmul.f32 %v927, %v895
    %v934 = vmul.f32 %v927, %v896
    %v935 = vadd.f32 %v840, %v928
    %v936 = vadd.f32 %v841, %v929
    %v937 = vadd.f32 %v842, %v930
    %v938 = vadd.f32 %v843, %v931
    %v939 = vadd.f32 %v844, %v932
    %v940 = vadd.f32 %v845, %v933
    %v941 = vadd.f32 %v846, %v934
    %v942 = vstv %s254
    %v943 = vmul.f32 %v942, %v890
    %v944 = vmul.f32 %v942, %v891
    %v945 = vmul.f32 %v942, %v892
    %v946 = vmul.f32 %v942, %v893
    %v947 = vmul.f32 %v942, %v894
    %v948 = vmul.f32 %v942, %v895
    %v949 = vmul.f32 %v942, %v896
    %v950 = vadd.f32 %v855, %v943
    %v951 = vadd.f32 %v856, %v944
    %v952 = vadd.f32 %v857, %v945
    %v953 = vadd.f32 %v858, %v946
    %v954 = vadd.f32 %v859, %v947
    %v955 = vadd.f32 %v860, %v948
    %v956 = vadd.f32 %v861, %v949
    %957 = vrot.lane.b32.xlu0 %v266, 101
    %v958 = vpop.permute.xlu0 %957
    %959 = vrot.lane.b32.xlu0 %v267, 101
    %v960 = vpop.permute.xlu0 %959
    %961 = vrot.lane.b32.xlu0 %v268, 101
    %v962 = vpop.permute.xlu0 %961
    %963 = vrot.lane.b32.xlu0 %v269, 101
    %v964 = vpop.permute.xlu0 %963
    %965 = vrot.lane.b32.xlu0 %v270, 101
    %v966 = vpop.permute.xlu0 %965
    %967 = vrot.lane.b32.xlu0 %v271, 101
    %v968 = vpop.permute.xlu0 %967
    %969 = vrot.lane.b32.xlu0 %v272, 101
    %v970 = vpop.permute.xlu0 %969
    %vm971 = vcmask 826368
    %v972 = vsel %vm971, %v958, %v960
    %v973 = vsel %vm971, %v960, %v962
    %v974 = vsel %vm971, %v962, %v964
    %v975 = vsel %vm971, %v964, %v966
    %v976 = vsel %vm971, %v966, %v968
    %v977 = vsel %vm971, %v968, %v970
    %v985 = vsel %vm288, %v972, 0.0
    %v986 = vsel %vm289, %v973, 0.0
    %v987 = vsel %vm290, %v974, 0.0
    %v988 = vsel %vm291, %v975, 0.0
    %v989 = vsel %vm292, %v976, 0.0
    %v990 = vsel %vm293, %v977, 0.0
    %v991 = vsel %vm294, %v970, 0.0
    %v992 = vstv %s228
    %v993 = vmul.f32 %v992, %v985
    %v994 = vmul.f32 %v992, %v986
    %v995 = vmul.f32 %v992, %v987
    %v996 = vmul.f32 %v992, %v988
    %v997 = vmul.f32 %v992, %v989
    %v998 = vmul.f32 %v992, %v990
    %v999 = vmul.f32 %v992, %v991
    %v1000 = vadd.f32 %v905, %v993
    %v1001 = vadd.f32 %v906, %v994
    %v1002 = vadd.f32 %v907, %v995
    %v1003 = vadd.f32 %v908, %v996
    %v1004 = vadd.f32 %v909, %v997
    %v1005 = vadd.f32 %v910, %v998
    %v1006 = vadd.f32 %v911, %v999
    %v1007 = vstv %s237
    %v1008 = vmul.f32 %v1007, %v985
    %v1009 = vmul.f32 %v1007, %v986
    %v1010 = vmul.f32 %v1007, %v987
    %v1011 = vmul.f32 %v1007, %v988
    %v1012 = vmul.f32 %v1007, %v989
    %v1013 = vmul.f32 %v1007, %v990
    %v1014 = vmul.f32 %v1007, %v991
    %v1015 = vadd.f32 %v920, %v1008
    %v1016 = vadd.f32 %v921, %v1009
    %v1017 = vadd.f32 %v922, %v1010
    %v1018 = vadd.f32 %v923, %v1011
    %v1019 = vadd.f32 %v924, %v1012
    %v1020 = vadd.f32 %v925, %v1013
    %v1021 = vadd.f32 %v926, %v1014
    %v1022 = vstv %s246
    %v1023 = vmul.f32 %v1022, %v985
    %v1024 = vmul.f32 %v1022, %v986
    %v1025 = vmul.f32 %v1022, %v987
    %v1026 = vmul.f32 %v1022, %v988
    %v1027 = vmul.f32 %v1022, %v989
    %v1028 = vmul.f32 %v1022, %v990
    %v1029 = vmul.f32 %v1022, %v991
    %v1030 = vadd.f32 %v935, %v1023
    %v1031 = vadd.f32 %v936, %v1024
    %v1032 = vadd.f32 %v937, %v1025
    %v1033 = vadd.f32 %v938, %v1026
    %v1034 = vadd.f32 %v939, %v1027
    %v1035 = vadd.f32 %v940, %v1028
    %v1036 = vadd.f32 %v941, %v1029
    %v1037 = vstv %s255
    %v1038 = vmul.f32 %v1037, %v985
    %v1039 = vmul.f32 %v1037, %v986
    %v1040 = vmul.f32 %v1037, %v987
    %v1041 = vmul.f32 %v1037, %v988
    %v1042 = vmul.f32 %v1037, %v989
    %v1043 = vmul.f32 %v1037, %v990
    %v1044 = vmul.f32 %v1037, %v991
    %v1045 = vadd.f32 %v950, %v1038
    %v1046 = vadd.f32 %v951, %v1039
    %v1047 = vadd.f32 %v952, %v1040
    %v1048 = vadd.f32 %v953, %v1041
    %v1049 = vadd.f32 %v954, %v1042
    %v1050 = vadd.f32 %v955, %v1043
    %v1051 = vadd.f32 %v956, %v1044
    %v1052 = vstv %s229
    %v1053 = vmul.f32 %v1052, %v266
    %v1054 = vmul.f32 %v1052, %v267
    %v1055 = vmul.f32 %v1052, %v268
    %v1056 = vmul.f32 %v1052, %v269
    %v1057 = vmul.f32 %v1052, %v270
    %v1058 = vmul.f32 %v1052, %v271
    %v1059 = vmul.f32 %v1052, %v272
    %1067 = vrot.lane.b32.xlu0 %v1053, 100
    %v1068 = vpop.permute.xlu0 %1067
    %1069 = vrot.lane.b32.xlu0 %v1054, 100
    %v1070 = vpop.permute.xlu0 %1069
    %1071 = vrot.lane.b32.xlu0 %v1055, 100
    %v1072 = vpop.permute.xlu0 %1071
    %1073 = vrot.lane.b32.xlu0 %v1056, 100
    %v1074 = vpop.permute.xlu0 %1073
    %1075 = vrot.lane.b32.xlu0 %v1057, 100
    %v1076 = vpop.permute.xlu0 %1075
    %1077 = vrot.lane.b32.xlu0 %v1058, 100
    %v1078 = vpop.permute.xlu0 %1077
    %1079 = vrot.lane.b32.xlu0 %v1059, 100
    %v1080 = vpop.permute.xlu0 %1079
    %vm1081 = vcmask 818176
    %v1082 = vsel %vm1081, %v1068, %v1070
    %v1083 = vsel %vm1081, %v1070, %v1072
    %v1084 = vsel %vm1081, %v1072, %v1074
    %v1085 = vsel %vm1081, %v1074, %v1076
    %v1086 = vsel %vm1081, %v1076, %v1078
    %v1087 = vsel %vm1081, %v1078, %v1080
    %v1095 = vadd.f32 %v1000, %v1082
    %v1096 = vadd.f32 %v1001, %v1083
    %v1097 = vadd.f32 %v1002, %v1084
    %v1098 = vadd.f32 %v1003, %v1085
    %v1099 = vadd.f32 %v1004, %v1086
    %v1100 = vadd.f32 %v1005, %v1087
    %v1101 = vadd.f32 %v1006, %v1080
    %v1102 = vstv %s238
    %v1103 = vmul.f32 %v1102, %v266
    %v1104 = vmul.f32 %v1102, %v267
    %v1105 = vmul.f32 %v1102, %v268
    %v1106 = vmul.f32 %v1102, %v269
    %v1107 = vmul.f32 %v1102, %v270
    %v1108 = vmul.f32 %v1102, %v271
    %v1109 = vmul.f32 %v1102, %v272
    %1117 = vrot.lane.b32.xlu0 %v1103, 100
    %v1118 = vpop.permute.xlu0 %1117
    %1119 = vrot.lane.b32.xlu0 %v1104, 100
    %v1120 = vpop.permute.xlu0 %1119
    %1121 = vrot.lane.b32.xlu0 %v1105, 100
    %v1122 = vpop.permute.xlu0 %1121
    %1123 = vrot.lane.b32.xlu0 %v1106, 100
    %v1124 = vpop.permute.xlu0 %1123
    %1125 = vrot.lane.b32.xlu0 %v1107, 100
    %v1126 = vpop.permute.xlu0 %1125
    %1127 = vrot.lane.b32.xlu0 %v1108, 100
    %v1128 = vpop.permute.xlu0 %1127
    %1129 = vrot.lane.b32.xlu0 %v1109, 100
    %v1130 = vpop.permute.xlu0 %1129
    %v1131 = vsel %vm1081, %v1118, %v1120
    %v1132 = vsel %vm1081, %v1120, %v1122
    %v1133 = vsel %vm1081, %v1122, %v1124
    %v1134 = vsel %vm1081, %v1124, %v1126
    %v1135 = vsel %vm1081, %v1126, %v1128
    %v1136 = vsel %vm1081, %v1128, %v1130
    %v1144 = vadd.f32 %v1015, %v1131
    %v1145 = vadd.f32 %v1016, %v1132
    %v1146 = vadd.f32 %v1017, %v1133
    %v1147 = vadd.f32 %v1018, %v1134
    %v1148 = vadd.f32 %v1019, %v1135
    %v1149 = vadd.f32 %v1020, %v1136
    %v1150 = vadd.f32 %v1021, %v1130
    %v1151 = vstv %s247
    %v1152 = vmul.f32 %v1151, %v266
    %v1153 = vmul.f32 %v1151, %v267
    %v1154 = vmul.f32 %v1151, %v268
    %v1155 = vmul.f32 %v1151, %v269
    %v1156 = vmul.f32 %v1151, %v270
    %v1157 = vmul.f32 %v1151, %v271
    %v1158 = vmul.f32 %v1151, %v272
    %1166 = vrot.lane.b32.xlu0 %v1152, 100
    %v1167 = vpop.permute.xlu0 %1166
    %1168 = vrot.lane.b32.xlu0 %v1153, 100
    %v1169 = vpop.permute.xlu0 %1168
    %1170 = vrot.lane.b32.xlu0 %v1154, 100
    %v1171 = vpop.permute.xlu0 %1170
    %1172 = vrot.lane.b32.xlu0 %v1155, 100
    %v1173 = vpop.permute.xlu0 %1172
    %1174 = vrot.lane.b32.xlu0 %v1156, 100
    %v1175 = vpop.permute.xlu0 %1174
    %1176 = vrot.lane.b32.xlu0 %v1157, 100
    %v1177 = vpop.permute.xlu0 %1176
    %1178 = vrot.lane.b32.xlu0 %v1158, 100
    %v1179 = vpop.permute.xlu0 %1178
    %v1180 = vsel %vm1081, %v1167, %v1169
    %v1181 = vsel %vm1081, %v1169, %v1171
    %v1182 = vsel %vm1081, %v1171, %v1173
    %v1183 = vsel %vm1081, %v1173, %v1175
    %v1184 = vsel %vm1081, %v1175, %v1177
    %v1185 = vsel %vm1081, %v1177, %v1179
    %v1193 = vadd.f32 %v1030, %v1180
    %v1194 = vadd.f32 %v1031, %v1181
    %v1195 = vadd.f32 %v1032, %v1182
    %v1196 = vadd.f32 %v1033, %v1183
    %v1197 = vadd.f32 %v1034, %v1184
    %v1198 = vadd.f32 %v1035, %v1185
    %v1199 = vadd.f32 %v1036, %v1179
    %v1200 = vstv %s256
    %v1201 = vmul.f32 %v1200, %v266
    %v1202 = vmul.f32 %v1200, %v267
    %v1203 = vmul.f32 %v1200, %v268
    %v1204 = vmul.f32 %v1200, %v269
    %v1205 = vmul.f32 %v1200, %v270
    %v1206 = vmul.f32 %v1200, %v271
    %v1207 = vmul.f32 %v1200, %v272
    %1215 = vrot.lane.b32.xlu0 %v1201, 100
    %v1216 = vpop.permute.xlu0 %1215
    %1217 = vrot.lane.b32.xlu0 %v1202, 100
    %v1218 = vpop.permute.xlu0 %1217
    %1219 = vrot.lane.b32.xlu0 %v1203, 100
    %v1220 = vpop.permute.xlu0 %1219
    %1221 = vrot.lane.b32.xlu0 %v1204, 100
    %v1222 = vpop.permute.xlu0 %1221
    %1223 = vrot.lane.b32.xlu0 %v1205, 100
    %v1224 = vpop.permute.xlu0 %1223
    %1225 = vrot.lane.b32.xlu0 %v1206, 100
    %v1226 = vpop.permute.xlu0 %1225
    %1227 = vrot.lane.b32.xlu0 %v1207, 100
    %v1228 = vpop.permute.xlu0 %1227
    %v1229 = vsel %vm1081, %v1216, %v1218
    %v1230 = vsel %vm1081, %v1218, %v1220
    %v1231 = vsel %vm1081, %v1220, %v1222
    %v1232 = vsel %vm1081, %v1222, %v1224
    %v1233 = vsel %vm1081, %v1224, %v1226
    %v1234 = vsel %vm1081, %v1226, %v1228
    %v1242 = vadd.f32 %v1045, %v1229
    %v1243 = vadd.f32 %v1046, %v1230
    %v1244 = vadd.f32 %v1047, %v1231
    %v1245 = vadd.f32 %v1048, %v1232
    %v1246 = vadd.f32 %v1049, %v1233
    %v1247 = vadd.f32 %v1050, %v1234
    %v1248 = vadd.f32 %v1051, %v1228
    %1249 = vrot.lane.b32.xlu0 %v266, 99
    %v1250 = vpop.permute.xlu0 %1249
    %1251 = vrot.lane.b32.xlu0 %v267, 99
    %v1252 = vpop.permute.xlu0 %1251
    %1253 = vrot.lane.b32.xlu0 %v268, 99
    %v1254 = vpop.permute.xlu0 %1253
    %1255 = vrot.lane.b32.xlu0 %v269, 99
    %v1256 = vpop.permute.xlu0 %1255
    %1257 = vrot.lane.b32.xlu0 %v270, 99
    %v1258 = vpop.permute.xlu0 %1257
    %1259 = vrot.lane.b32.xlu0 %v271, 99
    %v1260 = vpop.permute.xlu0 %1259
    %1261 = vrot.lane.b32.xlu0 %v272, 99
    %v1262 = vpop.permute.xlu0 %1261
    %vm1263 = vcmask 809984
    %v1264 = vsel %vm1263, %v1250, %v1252
    %v1265 = vsel %vm1263, %v1252, %v1254
    %v1266 = vsel %vm1263, %v1254, %v1256
    %v1267 = vsel %vm1263, %v1256, %v1258
    %v1268 = vsel %vm1263, %v1258, %v1260
    %v1269 = vsel %vm1263, %v1260, %v1262
    %v1277 = vsel %vm601, %v1264, 0.0
    %v1278 = vsel %vm602, %v1265, 0.0
    %v1279 = vsel %vm603, %v1266, 0.0
    %v1280 = vsel %vm604, %v1267, 0.0
    %v1281 = vsel %vm605, %v1268, 0.0
    %v1282 = vsel %vm606, %v1269, 0.0
    %v1283 = vsel %vm607, %v1262, 0.0
    %v1284 = vstv %s230
    %v1285 = vmul.f32 %v1284, %v1277
    %v1286 = vmul.f32 %v1284, %v1278
    %v1287 = vmul.f32 %v1284, %v1279
    %v1288 = vmul.f32 %v1284, %v1280
    %v1289 = vmul.f32 %v1284, %v1281
    %v1290 = vmul.f32 %v1284, %v1282
    %v1291 = vmul.f32 %v1284, %v1283
    %v1292 = vadd.f32 %v1095, %v1285
    %v1293 = vadd.f32 %v1096, %v1286
    %v1294 = vadd.f32 %v1097, %v1287
    %v1295 = vadd.f32 %v1098, %v1288
    %v1296 = vadd.f32 %v1099, %v1289
    %v1297 = vadd.f32 %v1100, %v1290
    %v1298 = vadd.f32 %v1101, %v1291
    %v1299 = vstv %s239
    %v1300 = vmul.f32 %v1299, %v1277
    %v1301 = vmul.f32 %v1299, %v1278
    %v1302 = vmul.f32 %v1299, %v1279
    %v1303 = vmul.f32 %v1299, %v1280
    %v1304 = vmul.f32 %v1299, %v1281
    %v1305 = vmul.f32 %v1299, %v1282
    %v1306 = vmul.f32 %v1299, %v1283
    %v1307 = vadd.f32 %v1144, %v1300
    %v1308 = vadd.f32 %v1145, %v1301
    %v1309 = vadd.f32 %v1146, %v1302
    %v1310 = vadd.f32 %v1147, %v1303
    %v1311 = vadd.f32 %v1148, %v1304
    %v1312 = vadd.f32 %v1149, %v1305
    %v1313 = vadd.f32 %v1150, %v1306
    %v1314 = vstv %s248
    %v1315 = vmul.f32 %v1314, %v1277
    %v1316 = vmul.f32 %v1314, %v1278
    %v1317 = vmul.f32 %v1314, %v1279
    %v1318 = vmul.f32 %v1314, %v1280
    %v1319 = vmul.f32 %v1314, %v1281
    %v1320 = vmul.f32 %v1314, %v1282
    %v1321 = vmul.f32 %v1314, %v1283
    %v1322 = vadd.f32 %v1193, %v1315
    %v1323 = vadd.f32 %v1194, %v1316
    %v1324 = vadd.f32 %v1195, %v1317
    %v1325 = vadd.f32 %v1196, %v1318
    %v1326 = vadd.f32 %v1197, %v1319
    %v1327 = vadd.f32 %v1198, %v1320
    %v1328 = vadd.f32 %v1199, %v1321
    %v1329 = vstv %s257
    %v1330 = vmul.f32 %v1329, %v1277
    %v1331 = vmul.f32 %v1329, %v1278
    %v1332 = vmul.f32 %v1329, %v1279
    %v1333 = vmul.f32 %v1329, %v1280
    %v1334 = vmul.f32 %v1329, %v1281
    %v1335 = vmul.f32 %v1329, %v1282
    %v1336 = vmul.f32 %v1329, %v1283
    %v1337 = vadd.f32 %v1242, %v1330
    %v1338 = vadd.f32 %v1243, %v1331
    %v1339 = vadd.f32 %v1244, %v1332
    %v1340 = vadd.f32 %v1245, %v1333
    %v1341 = vadd.f32 %v1246, %v1334
    %v1342 = vadd.f32 %v1247, %v1335
    %v1343 = vadd.f32 %v1248, %v1336
    %v1344 = vmax.f32 %v1292, 0.0
    %v1345 = vmax.f32 %v1293, 0.0
    %v1346 = vmax.f32 %v1294, 0.0
    %v1347 = vmax.f32 %v1295, 0.0
    %v1348 = vmax.f32 %v1296, 0.0
    %v1349 = vmax.f32 %v1297, 0.0
    %v1350 = vmax.f32 %v1298, 0.0
    %s1351 = smul.u32 0, 28
    %s1352 = smul.addr %s1351, 8
    %s1353 = scalar_lea.vmem [#allocation3], %s1352
    %1354 = vst [vmem:[%s1353] sm:$0xff] %v1344
    %1355 = vst [vmem:[%s1353 + $0x8] sm:$0xff] %v1345
    %1356 = vst [vmem:[%s1353 + $0x10] sm:$0xff] %v1346
    %1357 = vst [vmem:[%s1353 + $0x18] sm:$0xff] %v1347
    %1358 = vst [vmem:[%s1353 + $0x20] sm:$0xff] %v1348
    %1359 = vst [vmem:[%s1353 + $0x28] sm:$0xff] %v1349
    %1360 = vst.msk [vmem:[%s1353 + $0x30] sm:$0xff] %vm61, %v1350
    %v1361 = vmax.f32 %v1307, 0.0
    %v1362 = vmax.f32 %v1308, 0.0
    %v1363 = vmax.f32 %v1309, 0.0
    %v1364 = vmax.f32 %v1310, 0.0
    %v1365 = vmax.f32 %v1311, 0.0
    %v1366 = vmax.f32 %v1312, 0.0
    %v1367 = vmax.f32 %v1313, 0.0
    %1368 = vst [vmem:[%s1353 + $0x38] sm:$0xff] %v1361
    %1369 = vst [vmem:[%s1353 + $0x40] sm:$0xff] %v1362
    %1370 = vst [vmem:[%s1353 + $0x48] sm:$0xff] %v1363
    %1371 = vst [vmem:[%s1353 + $0x50] sm:$0xff] %v1364
    %1372 = vst [vmem:[%s1353 + $0x58] sm:$0xff] %v1365
    %1373 = vst [vmem:[%s1353 + $0x60] sm:$0xff] %v1366
    %1374 = vst.msk [vmem:[%s1353 + $0x68] sm:$0xff] %vm61, %v1367
    %v1375 = vmax.f32 %v1322, 0.0
    %v1376 = vmax.f32 %v1323, 0.0
    %v1377 = vmax.f32 %v1324, 0.0
    %v1378 = vmax.f32 %v1325, 0.0
    %v1379 = vmax.f32 %v1326, 0.0
    %v1380 = vmax.f32 %v1327, 0.0
    %v1381 = vmax.f32 %v1328, 0.0
    %1382 = vst [vmem:[%s1353 + $0x70] sm:$0xff] %v1375
    %1383 = vst [vmem:[%s1353 + $0x78] sm:$0xff] %v1376
    %1384 = vst [vmem:[%s1353 + $0x80] sm:$0xff] %v1377
    %1385 = vst [vmem:[%s1353 + $0x88] sm:$0xff] %v1378
    %1386 = vst [vmem:[%s1353 + $0x90] sm:$0xff] %v1379
    %1387 = vst [vmem:[%s1353 + $0x98] sm:$0xff] %v1380
    %1388 = vst.msk [vmem:[%s1353 + $0xa0] sm:$0xff] %vm61, %v1381
    %v1389 = vmax.f32 %v1337, 0.0
    %v1390 = vmax.f32 %v1338, 0.0
    %v1391 = vmax.f32 %v1339, 0.0
    %v1392 = vmax.f32 %v1340, 0.0
    %v1393 = vmax.f32 %v1341, 0.0
    %v1394 = vmax.f32 %v1342, 0.0
    %v1395 = vmax.f32 %v1343, 0.0
    %1396 = vst [vmem:[%s1353 + $0xa8] sm:$0xff] %v1389
    %1397 = vst [vmem:[%s1353 + $0xb0] sm:$0xff] %v1390
    %1398 = vst [vmem:[%s1353 + $0xb8] sm:$0xff] %v1391
    %1399 = vst [vmem:[%s1353 + $0xc0] sm:$0xff] %v1392
    %1400 = vst [vmem:[%s1353 + $0xc8] sm:$0xff] %v1393
    %1401 = vst [vmem:[%s1353 + $0xd0] sm:$0xff] %v1394
    %1402 = vst.msk [vmem:[%s1353 + $0xd8] sm:$0xff] %vm61, %v1395
    %v1403 = vld [vmem:[#allocation3] sm:$0xff]
    %v1404 = vld [vmem:[#allocation3 + $0x8] sm:$0xff]
    %v1405 = vld [vmem:[#allocation3 + $0x10] sm:$0xff]
    %v1406 = vld [vmem:[#allocation3 + $0x18] sm:$0xff]
    %v1407 = vld [vmem:[#allocation3 + $0x20] sm:$0xff]
    %v1408 = vld [vmem:[#allocation3 + $0x28] sm:$0xff]
    %v1409 = vld [vmem:[#allocation3 + $0x30] sm:$0xff]
    %v1410 = vld [vmem:[#allocation3 + $0x38] sm:$0xff]
    %v1411 = vld [vmem:[#allocation3 + $0x40] sm:$0xff]
    %v1412 = vld [vmem:[#allocation3 + $0x48] sm:$0xff]
    %v1413 = vld [vmem:[#allocation3 + $0x50] sm:$0xff]
    %v1414 = vld [vmem:[#allocation3 + $0x58] sm:$0xff]
    %v1415 = vld [vmem:[#allocation3 + $0x60] sm:$0xff]
    %v1416 = vld [vmem:[#allocation3 + $0x68] sm:$0xff]
    %v1417 = vld [vmem:[#allocation3 + $0x70] sm:$0xff]
    %v1418 = vld [vmem:[#allocation3 + $0x78] sm:$0xff]
    %v1419 = vld [vmem:[#allocation3 + $0x80] sm:$0xff]
    %v1420 = vld [vmem:[#allocation3 + $0x88] sm:$0xff]
    %v1421 = vld [vmem:[#allocation3 + $0x90] sm:$0xff]
    %v1422 = vld [vmem:[#allocation3 + $0x98] sm:$0xff]
    %v1423 = vld [vmem:[#allocation3 + $0xa0] sm:$0xff]
    %v1424 = vld [vmem:[#allocation3 + $0xa8] sm:$0xff]
    %v1425 = vld [vmem:[#allocation3 + $0xb0] sm:$0xff]
    %v1426 = vld [vmem:[#allocation3 + $0xb8] sm:$0xff]
    %v1427 = vld [vmem:[#allocation3 + $0xc0] sm:$0xff]
    %v1428 = vld [vmem:[#allocation3 + $0xc8] sm:$0xff]
    %v1429 = vld [vmem:[#allocation3 + $0xd0] sm:$0xff]
    %v1430 = vld [vmem:[#allocation3 + $0xd8] sm:$0xff]
    %v1431 = vpack.c.bf16 %v1403, %v1403
    %v1432 = vpack.c.bf16 %v1404, %v1404
    %v1433 = vpack.c.bf16 %v1405, %v1405
    %v1434 = vpack.c.bf16 %v1406, %v1406
    %v1435 = vpack.c.bf16 %v1407, %v1407
    %v1436 = vpack.c.bf16 %v1408, %v1408
    %v1437 = vpack.c.bf16 %v1409, %v1409
    %v1438 = vpack.c.bf16 %v1410, %v1410
    %v1439 = vpack.c.bf16 %v1411, %v1411
    %v1440 = vpack.c.bf16 %v1412, %v1412
    %v1441 = vpack.c.bf16 %v1413, %v1413
    %v1442 = vpack.c.bf16 %v1414, %v1414
    %v1443 = vpack.c.bf16 %v1415, %v1415
    %v1444 = vpack.c.bf16 %v1416, %v1416
    %v1445 = vpack.c.bf16 %v1417, %v1417
    %v1446 = vpack.c.bf16 %v1418, %v1418
    %v1447 = vpack.c.bf16 %v1419, %v1419
    %v1448 = vpack.c.bf16 %v1420, %v1420
    %v1449 = vpack.c.bf16 %v1421, %v1421
    %v1450 = vpack.c.bf16 %v1422, %v1422
    %v1451 = vpack.c.bf16 %v1423, %v1423
    %v1452 = vpack.c.bf16 %v1424, %v1424
    %v1453 = vpack.c.bf16 %v1425, %v1425
    %v1454 = vpack.c.bf16 %v1426, %v1426
    %v1455 = vpack.c.bf16 %v1427, %v1427
    %v1456 = vpack.c.bf16 %v1428, %v1428
    %v1457 = vpack.c.bf16 %v1429, %v1429
    %v1458 = vpack.c.bf16 %v1430, %v1430
    %v1459 = vld [vmem:[%s3] sm:$0xf]
    %v1460 = vld [vmem:[%s3 + $0x4] sm:$0xf]
    %v1461 = vld [vmem:[%s3 + $0x8] sm:$0xf]
    %v1462 = vld [vmem:[%s3 + $0xc] sm:$0xf]
    %v1463 = vld [vmem:[%s3 + $0x10] sm:$0xf]
    %v1464 = vld [vmem:[%s3 + $0x14] sm:$0xf]
    %v1465 = vld [vmem:[%s3 + $0x18] sm:$0xf]
    %v1466 = vld [vmem:[%s3 + $0x1c] sm:$0xf]
    %v1467 = vld [vmem:[%s3 + $0x20] sm:$0xf]
    %v1468 = vld [vmem:[%s3 + $0x24] sm:$0xf]
    %v1469 = vld [vmem:[%s3 + $0x28] sm:$0xf]
    %v1470 = vld [vmem:[%s3 + $0x2c] sm:$0xf]
    %v1471 = vld [vmem:[%s3 + $0x30] sm:$0xf]
    %v1472 = vld [vmem:[%s3 + $0x34] sm:$0xf]
    %v1473 = vld [vmem:[%s3 + $0x38] sm:$0xf]
    %v1474 = vld [vmem:[%s3 + $0x3c] sm:$0xf]
    %v1475 = vld [vmem:[%s3 + $0x40] sm:$0xf]
    %v1476 = vld [vmem:[%s3 + $0x44] sm:$0xf]
    %v1477 = vld [vmem:[%s3 + $0x48] sm:$0xf]
    %v1478 = vld [vmem:[%s3 + $0x4c] sm:$0xf]
    %v1479 = vld [vmem:[%s3 + $0x50] sm:$0xf]
    %v1480 = vld [vmem:[%s3 + $0x54] sm:$0xf]
    %v1481 = vld [vmem:[%s3 + $0x58] sm:$0xf]
    %v1482 = vld [vmem:[%s3 + $0x5c] sm:$0xf]
    %v1483 = vld [vmem:[%s3 + $0x60] sm:$0xf]
    %v1484 = vld [vmem:[%s3 + $0x64] sm:$0xf]
    %v1485 = vld [vmem:[%s3 + $0x68] sm:$0xf]
    %v1486 = vld [vmem:[%s3 + $0x6c] sm:$0xf]
    %v1487 = vld [vmem:[%s3 + $0x70] sm:$0xf]
    %v1488 = vld [vmem:[%s3 + $0x74] sm:$0xf]
    %v1489 = vld [vmem:[%s3 + $0x78] sm:$0xf]
    %v1490 = vld [vmem:[%s3 + $0x7c] sm:$0xf]
    %v1491 = vld [vmem:[%s3 + $0x80] sm:$0xf]
    %v1492 = vld [vmem:[%s3 + $0x84] sm:$0xf]
    %v1493 = vld [vmem:[%s3 + $0x88] sm:$0xf]
    %v1494 = vld [vmem:[%s3 + $0x8c] sm:$0xf]
    %v1495 = vld [vmem:[%s3 + $0x90] sm:$0xf]
    %v1496 = vld [vmem:[%s3 + $0x94] sm:$0xf]
    %v1497 = vld [vmem:[%s3 + $0x98] sm:$0xf]
    %v1498 = vld [vmem:[%s3 + $0x9c] sm:$0xf]
    %v1499 = vld [vmem:[%s3 + $0xa0] sm:$0xf]
    %v1500 = vld [vmem:[%s3 + $0xa4] sm:$0xf]
    %v1501 = vld [vmem:[%s3 + $0xa8] sm:$0xf]
    %v1502 = vld [vmem:[%s3 + $0xac] sm:$0xf]
    %v1503 = vld [vmem:[%s3 + $0xb0] sm:$0xf]
    %v1504 = vld [vmem:[%s3 + $0xb4] sm:$0xf]
    %v1505 = vld [vmem:[%s3 + $0xb8] sm:$0xf]
    %v1506 = vld [vmem:[%s3 + $0xbc] sm:$0xf]
    %v1507 = vld [vmem:[%s3 + $0xc0] sm:$0xf]
    %v1508 = vld [vmem:[%s3 + $0xc4] sm:$0xf]
    %v1509 = vld [vmem:[%s3 + $0xc8] sm:$0xf]
    %v1510 = vld [vmem:[%s3 + $0xcc] sm:$0xf]
    %v1511 = vld [vmem:[%s3 + $0xd0] sm:$0xf]
    %v1512 = vld [vmem:[%s3 + $0xd4] sm:$0xf]
    %v1513 = vld [vmem:[%s3 + $0xd8] sm:$0xf]
    %v1514 = vld [vmem:[%s3 + $0xdc] sm:$0xf]
    %v1515 = vld [vmem:[%s3 + $0xe0] sm:$0xf]
    %v1516 = vld [vmem:[%s3 + $0xe4] sm:$0xf]
    %v1517 = vld [vmem:[%s3 + $0xe8] sm:$0xf]
    %v1518 = vld [vmem:[%s3 + $0xec] sm:$0xf]
    %v1519 = vld [vmem:[%s3 + $0xf0] sm:$0xf]
    %v1520 = vld [vmem:[%s3 + $0xf4] sm:$0xf]
    %v1521 = vld [vmem:[%s3 + $0xf8] sm:$0xf]
    %v1522 = vld [vmem:[%s3 + $0xfc] sm:$0xf]
    %v1523 = vld [vmem:[%s3 + $0x100] sm:$0xf]
    %v1524 = vld [vmem:[%s3 + $0x104] sm:$0xf]
    %v1525 = vld [vmem:[%s3 + $0x108] sm:$0xf]
    %v1526 = vld [vmem:[%s3 + $0x10c] sm:$0xf]
    %v1527 = vld [vmem:[%s3 + $0x110] sm:$0xf]
    %v1528 = vld [vmem:[%s3 + $0x114] sm:$0xf]
    %v1529 = vld [vmem:[%s3 + $0x118] sm:$0xf]
    %v1530 = vld [vmem:[%s3 + $0x11c] sm:$0xf]
    %v1531 = vld [vmem:[%s3 + $0x120] sm:$0xf]
    %v1532 = vld [vmem:[%s3 + $0x124] sm:$0xf]
    %v1533 = vld [vmem:[%s3 + $0x128] sm:$0xf]
    %v1534 = vld [vmem:[%s3 + $0x12c] sm:$0xf]
    %v1535 = vld [vmem:[%s3 + $0x130] sm:$0xf]
    %v1536 = vld [vmem:[%s3 + $0x134] sm:$0xf]
    %v1537 = vld [vmem:[%s3 + $0x138] sm:$0xf]
    %v1538 = vld [vmem:[%s3 + $0x13c] sm:$0xf]
    %v1539 = vld [vmem:[%s3 + $0x140] sm:$0xf]
    %v1540 = vld [vmem:[%s3 + $0x144] sm:$0xf]
    %v1541 = vld [vmem:[%s3 + $0x148] sm:$0xf]
    %v1542 = vld [vmem:[%s3 + $0x14c] sm:$0xf]
    %v1543 = vld [vmem:[%s3 + $0x150] sm:$0xf]
    %v1544 = vld [vmem:[%s3 + $0x154] sm:$0xf]
    %v1545 = vld [vmem:[%s3 + $0x158] sm:$0xf]
    %v1546 = vld [vmem:[%s3 + $0x15c] sm:$0xf]
    %v1547 = vld [vmem:[%s3 + $0x160] sm:$0xf]
    %v1548 = vld [vmem:[%s3 + $0x164] sm:$0xf]
    %v1549 = vld [vmem:[%s3 + $0x168] sm:$0xf]
    %v1550 = vld [vmem:[%s3 + $0x16c] sm:$0xf]
    %v1551 = vld [vmem:[%s3 + $0x170] sm:$0xf]
    %v1552 = vld [vmem:[%s3 + $0x174] sm:$0xf]
    %v1553 = vld [vmem:[%s3 + $0x178] sm:$0xf]
    %v1554 = vld [vmem:[%s3 + $0x17c] sm:$0xf]
    %v1555 = vld [vmem:[%s3 + $0x180] sm:$0xf]
    %v1556 = vld [vmem:[%s3 + $0x184] sm:$0xf]
    %v1557 = vld [vmem:[%s3 + $0x188] sm:$0xf]
    %v1558 = vld [vmem:[%s3 + $0x18c] sm:$0xf]
    %v1559 = vld [vmem:[%s3 + $0x190] sm:$0xf]
    %v1560 = vld [vmem:[%s3 + $0x194] sm:$0xf]
    %v1561 = vld [vmem:[%s3 + $0x198] sm:$0xf]
    %v1562 = vld [vmem:[%s3 + $0x19c] sm:$0xf]
    %v1563 = vld [vmem:[%s3 + $0x1a0] sm:$0xf]
    %v1564 = vld [vmem:[%s3 + $0x1a4] sm:$0xf]
    %v1565 = vld [vmem:[%s3 + $0x1a8] sm:$0xf]
    %v1566 = vld [vmem:[%s3 + $0x1ac] sm:$0xf]
    %v1567 = vld [vmem:[%s3 + $0x1b0] sm:$0xf]
    %v1568 = vld [vmem:[%s3 + $0x1b4] sm:$0xf]
    %v1569 = vld [vmem:[%s3 + $0x1b8] sm:$0xf]
    %v1570 = vld [vmem:[%s3 + $0x1bc] sm:$0xf]
    %v1571 = vld [vmem:[%s3 + $0x1c0] sm:$0xf]
    %v1572 = vld [vmem:[%s3 + $0x1c4] sm:$0xf]
    %v1573 = vld [vmem:[%s3 + $0x1c8] sm:$0xf]
    %v1574 = vld [vmem:[%s3 + $0x1cc] sm:$0xf]
    %v1575 = vld [vmem:[%s3 + $0x1d0] sm:$0xf]
    %v1576 = vld [vmem:[%s3 + $0x1d4] sm:$0xf]
    %v1577 = vld [vmem:[%s3 + $0x1d8] sm:$0xf]
    %v1578 = vld [vmem:[%s3 + $0x1dc] sm:$0xf]
    %v1579 = vld [vmem:[%s3 + $0x1e0] sm:$0xf]
    %v1580 = vld [vmem:[%s3 + $0x1e4] sm:$0xf]
    %v1581 = vld [vmem:[%s3 + $0x1e8] sm:$0xf]
    %v1582 = vld [vmem:[%s3 + $0x1ec] sm:$0xf]
    %v1583 = vld [vmem:[%s3 + $0x1f0] sm:$0xf]
    %v1584 = vld [vmem:[%s3 + $0x1f4] sm:$0xf]
    %v1585 = vld [vmem:[%s3 + $0x1f8] sm:$0xf]
    %v1586 = vld [vmem:[%s3 + $0x1fc] sm:$0xf]
    %v1587 = vld [vmem:[%s3 + $0x200] sm:$0xf]
    %v1588 = vld [vmem:[%s3 + $0x204] sm:$0xf]
    %v1589 = vld [vmem:[%s3 + $0x208] sm:$0xf]
    %v1590 = vld [vmem:[%s3 + $0x20c] sm:$0xf]
    %v1591 = vld [vmem:[%s3 + $0x210] sm:$0xf]
    %v1592 = vld [vmem:[%s3 + $0x214] sm:$0xf]
    %v1593 = vld [vmem:[%s3 + $0x218] sm:$0xf]
    %v1594 = vld [vmem:[%s3 + $0x21c] sm:$0xf]
    %v1595 = vld [vmem:[%s3 + $0x220] sm:$0xf]
    %v1596 = vld [vmem:[%s3 + $0x224] sm:$0xf]
    %v1597 = vld [vmem:[%s3 + $0x228] sm:$0xf]
    %v1598 = vld [vmem:[%s3 + $0x22c] sm:$0xf]
    %v1599 = vld [vmem:[%s3 + $0x230] sm:$0xf]
    %v1600 = vld [vmem:[%s3 + $0x234] sm:$0xf]
    %v1601 = vld [vmem:[%s3 + $0x238] sm:$0xf]
    %v1602 = vld [vmem:[%s3 + $0x23c] sm:$0xf]
    %v1603 = vld [vmem:[%s3 + $0x240] sm:$0xf]
    %v1604 = vld [vmem:[%s3 + $0x244] sm:$0xf]
    %v1605 = vld [vmem:[%s3 + $0x248] sm:$0xf]
    %v1606 = vld [vmem:[%s3 + $0x24c] sm:$0xf]
    %v1607 = vld [vmem:[%s3 + $0x250] sm:$0xf]
    %v1608 = vld [vmem:[%s3 + $0x254] sm:$0xf]
    %v1609 = vld [vmem:[%s3 + $0x258] sm:$0xf]
    %v1610 = vld [vmem:[%s3 + $0x25c] sm:$0xf]
    %v1611 = vld [vmem:[%s3 + $0x260] sm:$0xf]
    %v1612 = vld [vmem:[%s3 + $0x264] sm:$0xf]
    %v1613 = vld [vmem:[%s3 + $0x268] sm:$0xf]
    %v1614 = vld [vmem:[%s3 + $0x26c] sm:$0xf]
    %v1615 = vld [vmem:[%s3 + $0x270] sm:$0xf]
    %v1616 = vld [vmem:[%s3 + $0x274] sm:$0xf]
    %v1617 = vld [vmem:[%s3 + $0x278] sm:$0xf]
    %v1618 = vld [vmem:[%s3 + $0x27c] sm:$0xf]
    %v1619 = vld [vmem:[%s3 + $0x280] sm:$0xf]
    %v1620 = vld [vmem:[%s3 + $0x284] sm:$0xf]
    %v1621 = vld [vmem:[%s3 + $0x288] sm:$0xf]
    %v1622 = vld [vmem:[%s3 + $0x28c] sm:$0xf]
    %v1623 = vld [vmem:[%s3 + $0x290] sm:$0xf]
    %v1624 = vld [vmem:[%s3 + $0x294] sm:$0xf]
    %v1625 = vld [vmem:[%s3 + $0x298] sm:$0xf]
    %v1626 = vld [vmem:[%s3 + $0x29c] sm:$0xf]
    %v1627 = vld [vmem:[%s3 + $0x2a0] sm:$0xf]
    %v1628 = vld [vmem:[%s3 + $0x2a4] sm:$0xf]
    %v1629 = vld [vmem:[%s3 + $0x2a8] sm:$0xf]
    %v1630 = vld [vmem:[%s3 + $0x2ac] sm:$0xf]
    %v1631 = vld [vmem:[%s3 + $0x2b0] sm:$0xf]
    %v1632 = vld [vmem:[%s3 + $0x2b4] sm:$0xf]
    %v1633 = vld [vmem:[%s3 + $0x2b8] sm:$0xf]
    %v1634 = vld [vmem:[%s3 + $0x2bc] sm:$0xf]
    %v1635 = vld [vmem:[%s3 + $0x2c0] sm:$0xf]
    %v1636 = vld [vmem:[%s3 + $0x2c4] sm:$0xf]
    %v1637 = vld [vmem:[%s3 + $0x2c8] sm:$0xf]
    %v1638 = vld [vmem:[%s3 + $0x2cc] sm:$0xf]
    %v1639 = vld [vmem:[%s3 + $0x2d0] sm:$0xf]
    %v1640 = vld [vmem:[%s3 + $0x2d4] sm:$0xf]
    %v1641 = vld [vmem:[%s3 + $0x2d8] sm:$0xf]
    %v1642 = vld [vmem:[%s3 + $0x2dc] sm:$0xf]
    %v1643 = vld [vmem:[%s3 + $0x2e0] sm:$0xf]
    %v1644 = vld [vmem:[%s3 + $0x2e4] sm:$0xf]
    %v1645 = vld [vmem:[%s3 + $0x2e8] sm:$0xf]
    %v1646 = vld [vmem:[%s3 + $0x2ec] sm:$0xf]
    %v1647 = vld [vmem:[%s3 + $0x2f0] sm:$0xf]
    %v1648 = vld [vmem:[%s3 + $0x2f4] sm:$0xf]
    %v1649 = vld [vmem:[%s3 + $0x2f8] sm:$0xf]
    %v1650 = vld [vmem:[%s3 + $0x2fc] sm:$0xf]
    %v1651 = vld [vmem:[%s3 + $0x300] sm:$0xf]
    %v1652 = vld [vmem:[%s3 + $0x304] sm:$0xf]
    %v1653 = vld [vmem:[%s3 + $0x308] sm:$0xf]
    %v1654 = vld [vmem:[%s3 + $0x30c] sm:$0xf]
    %v1655 = vld [vmem:[%s3 + $0x310] sm:$0xf]
    %v1656 = vld [vmem:[%s3 + $0x314] sm:$0xf]
    %v1657 = vld [vmem:[%s3 + $0x318] sm:$0xf]
    %v1658 = vld [vmem:[%s3 + $0x31c] sm:$0xf]
    %v1659 = vld [vmem:[%s3 + $0x320] sm:$0xf]
    %v1660 = vld [vmem:[%s3 + $0x324] sm:$0xf]
    %v1661 = vld [vmem:[%s3 + $0x328] sm:$0xf]
    %v1662 = vld [vmem:[%s3 + $0x32c] sm:$0xf]
    %v1663 = vld [vmem:[%s3 + $0x330] sm:$0xf]
    %v1664 = vld [vmem:[%s3 + $0x334] sm:$0xf]
    %v1665 = vld [vmem:[%s3 + $0x338] sm:$0xf]
    %v1666 = vld [vmem:[%s3 + $0x33c] sm:$0xf]
    %v1667 = vld [vmem:[%s3 + $0x340] sm:$0xf]
    %v1668 = vld [vmem:[%s3 + $0x344] sm:$0xf]
    %v1669 = vld [vmem:[%s3 + $0x348] sm:$0xf]
    %v1670 = vld [vmem:[%s3 + $0x34c] sm:$0xf]
    %v1671 = vld [vmem:[%s3 + $0x350] sm:$0xf]
    %v1672 = vld [vmem:[%s3 + $0x354] sm:$0xf]
    %v1673 = vld [vmem:[%s3 + $0x358] sm:$0xf]
    %v1674 = vld [vmem:[%s3 + $0x35c] sm:$0xf]
    %v1675 = vld [vmem:[%s3 + $0x360] sm:$0xf]
    %v1676 = vld [vmem:[%s3 + $0x364] sm:$0xf]
    %v1677 = vld [vmem:[%s3 + $0x368] sm:$0xf]
    %v1678 = vld [vmem:[%s3 + $0x36c] sm:$0xf]
    %v1679 = vld [vmem:[%s3 + $0x370] sm:$0xf]
    %v1680 = vld [vmem:[%s3 + $0x374] sm:$0xf]
    %v1681 = vld [vmem:[%s3 + $0x378] sm:$0xf]
    %v1682 = vld [vmem:[%s3 + $0x37c] sm:$0xf]
    %v1683 = vld [vmem:[%s3 + $0x380] sm:$0xf]
    %v1684 = vld [vmem:[%s3 + $0x384] sm:$0xf]
    %v1685 = vld [vmem:[%s3 + $0x388] sm:$0xf]
    %v1686 = vld [vmem:[%s3 + $0x38c] sm:$0xf]
    %v1687 = vld [vmem:[%s3 + $0x390] sm:$0xf]
    %v1688 = vld [vmem:[%s3 + $0x394] sm:$0xf]
    %v1689 = vld [vmem:[%s3 + $0x398] sm:$0xf]
    %v1690 = vld [vmem:[%s3 + $0x39c] sm:$0xf]
    %v1691 = vld [vmem:[%s3 + $0x3a0] sm:$0xf]
    %v1692 = vld [vmem:[%s3 + $0x3a4] sm:$0xf]
    %v1693 = vld [vmem:[%s3 + $0x3a8] sm:$0xf]
    %v1694 = vld [vmem:[%s3 + $0x3ac] sm:$0xf]
    %v1695 = vld [vmem:[%s3 + $0x3b0] sm:$0xf]
    %v1696 = vld [vmem:[%s3 + $0x3b4] sm:$0xf]
    %v1697 = vld [vmem:[%s3 + $0x3b8] sm:$0xf]
    %v1698 = vld [vmem:[%s3 + $0x3bc] sm:$0xf]
    %v1699 = vld [vmem:[%s3 + $0x3c0] sm:$0xf]
    %v1700 = vld [vmem:[%s3 + $0x3c4] sm:$0xf]
    %v1701 = vld [vmem:[%s3 + $0x3c8] sm:$0xf]
    %v1702 = vld [vmem:[%s3 + $0x3cc] sm:$0xf]
    %v1703 = vld [vmem:[%s3 + $0x3d0] sm:$0xf]
    %v1704 = vld [vmem:[%s3 + $0x3d4] sm:$0xf]
    %v1705 = vld [vmem:[%s3 + $0x3d8] sm:$0xf]
    %v1706 = vld [vmem:[%s3 + $0x3dc] sm:$0xf]
    %v1707 = vld [vmem:[%s3 + $0x3e0] sm:$0xf]
    %v1708 = vld [vmem:[%s3 + $0x3e4] sm:$0xf]
    %v1709 = vld [vmem:[%s3 + $0x3e8] sm:$0xf]
    %v1710 = vld [vmem:[%s3 + $0x3ec] sm:$0xf]
    %v1711 = vld [vmem:[%s3 + $0x3f0] sm:$0xf]
    %v1712 = vld [vmem:[%s3 + $0x3f4] sm:$0xf]
    %v1713 = vld [vmem:[%s3 + $0x3f8] sm:$0xf]
    %v1714 = vld [vmem:[%s3 + $0x3fc] sm:$0xf]
    %v1715 = vld [vmem:[%s3 + $0x400] sm:$0xf]
    %v1716 = vld [vmem:[%s3 + $0x404] sm:$0xf]
    %v1717 = vld [vmem:[%s3 + $0x408] sm:$0xf]
    %v1718 = vld [vmem:[%s3 + $0x40c] sm:$0xf]
    %v1719 = vld [vmem:[%s3 + $0x410] sm:$0xf]
    %v1720 = vld [vmem:[%s3 + $0x414] sm:$0xf]
    %v1721 = vld [vmem:[%s3 + $0x418] sm:$0xf]
    %v1722 = vld [vmem:[%s3 + $0x41c] sm:$0xf]
    %v1723 = vld [vmem:[%s3 + $0x420] sm:$0xf]
    %v1724 = vld [vmem:[%s3 + $0x424] sm:$0xf]
    %v1725 = vld [vmem:[%s3 + $0x428] sm:$0xf]
    %v1726 = vld [vmem:[%s3 + $0x42c] sm:$0xf]
    %v1727 = vld [vmem:[%s3 + $0x430] sm:$0xf]
    %v1728 = vld [vmem:[%s3 + $0x434] sm:$0xf]
    %v1729 = vld [vmem:[%s3 + $0x438] sm:$0xf]
    %v1730 = vld [vmem:[%s3 + $0x43c] sm:$0xf]
    %v1731 = vld [vmem:[%s3 + $0x440] sm:$0xf]
    %v1732 = vld [vmem:[%s3 + $0x444] sm:$0xf]
    %v1733 = vld [vmem:[%s3 + $0x448] sm:$0xf]
    %v1734 = vld [vmem:[%s3 + $0x44c] sm:$0xf]
    %v1735 = vld [vmem:[%s3 + $0x450] sm:$0xf]
    %v1736 = vld [vmem:[%s3 + $0x454] sm:$0xf]
    %v1737 = vld [vmem:[%s3 + $0x458] sm:$0xf]
    %v1738 = vld [vmem:[%s3 + $0x45c] sm:$0xf]
    %v1739 = vld [vmem:[%s3 + $0x460] sm:$0xf]
    %v1740 = vld [vmem:[%s3 + $0x464] sm:$0xf]
    %v1741 = vld [vmem:[%s3 + $0x468] sm:$0xf]
    %v1742 = vld [vmem:[%s3 + $0x46c] sm:$0xf]
    %v1743 = vld [vmem:[%s3 + $0x470] sm:$0xf]
    %v1744 = vld [vmem:[%s3 + $0x474] sm:$0xf]
    %v1745 = vld [vmem:[%s3 + $0x478] sm:$0xf]
    %v1746 = vld [vmem:[%s3 + $0x47c] sm:$0xf]
    %v1747 = vld [vmem:[%s3 + $0x480] sm:$0xf]
    %v1748 = vld [vmem:[%s3 + $0x484] sm:$0xf]
    %v1749 = vld [vmem:[%s3 + $0x488] sm:$0xf]
    %v1750 = vld [vmem:[%s3 + $0x48c] sm:$0xf]
    %v1751 = vld [vmem:[%s3 + $0x490] sm:$0xf]
    %v1752 = vld [vmem:[%s3 + $0x494] sm:$0xf]
    %v1753 = vld [vmem:[%s3 + $0x498] sm:$0xf]
    %v1754 = vld [vmem:[%s3 + $0x49c] sm:$0xf]
    %v1755 = vld [vmem:[%s3 + $0x4a0] sm:$0xf]
    %v1756 = vld [vmem:[%s3 + $0x4a4] sm:$0xf]
    %v1757 = vld [vmem:[%s3 + $0x4a8] sm:$0xf]
    %v1758 = vld [vmem:[%s3 + $0x4ac] sm:$0xf]
    %v1759 = vld [vmem:[%s3 + $0x4b0] sm:$0xf]
    %v1760 = vld [vmem:[%s3 + $0x4b4] sm:$0xf]
    %v1761 = vld [vmem:[%s3 + $0x4b8] sm:$0xf]
    %v1762 = vld [vmem:[%s3 + $0x4bc] sm:$0xf]
    %v1763 = vld [vmem:[%s3 + $0x4c0] sm:$0xf]
    %v1764 = vld [vmem:[%s3 + $0x4c4] sm:$0xf]
    %v1765 = vld [vmem:[%s3 + $0x4c8] sm:$0xf]
    %v1766 = vld [vmem:[%s3 + $0x4cc] sm:$0xf]
    %v1767 = vld [vmem:[%s3 + $0x4d0] sm:$0xf]
    %v1768 = vld [vmem:[%s3 + $0x4d4] sm:$0xf]
    %v1769 = vld [vmem:[%s3 + $0x4d8] sm:$0xf]
    %v1770 = vld [vmem:[%s3 + $0x4dc] sm:$0xf]
    %v1771 = vld [vmem:[%s3 + $0x4e0] sm:$0xf]
    %v1772 = vld [vmem:[%s3 + $0x4e4] sm:$0xf]
    %v1773 = vld [vmem:[%s3 + $0x4e8] sm:$0xf]
    %v1774 = vld [vmem:[%s3 + $0x4ec] sm:$0xf]
    %v1775 = vld [vmem:[%s3 + $0x4f0] sm:$0xf]
    %v1776 = vld [vmem:[%s3 + $0x4f4] sm:$0xf]
    %v1777 = vld [vmem:[%s3 + $0x4f8] sm:$0xf]
    %v1778 = vld [vmem:[%s3 + $0x4fc] sm:$0xf]
    %v1779 = vld [vmem:[%s3 + $0x500] sm:$0xf]
    %v1780 = vld [vmem:[%s3 + $0x504] sm:$0xf]
    %v1781 = vld [vmem:[%s3 + $0x508] sm:$0xf]
    %v1782 = vld [vmem:[%s3 + $0x50c] sm:$0xf]
    %v1783 = vld [vmem:[%s3 + $0x510] sm:$0xf]
    %v1784 = vld [vmem:[%s3 + $0x514] sm:$0xf]
    %v1785 = vld [vmem:[%s3 + $0x518] sm:$0xf]
    %v1786 = vld [vmem:[%s3 + $0x51c] sm:$0xf]
    %v1787 = vld [vmem:[%s3 + $0x520] sm:$0xf]
    %v1788 = vld [vmem:[%s3 + $0x524] sm:$0xf]
    %v1789 = vld [vmem:[%s3 + $0x528] sm:$0xf]
    %v1790 = vld [vmem:[%s3 + $0x52c] sm:$0xf]
    %v1791 = vld [vmem:[%s3 + $0x530] sm:$0xf]
    %v1792 = vld [vmem:[%s3 + $0x534] sm:$0xf]
    %v1793 = vld [vmem:[%s3 + $0x538] sm:$0xf]
    %v1794 = vld [vmem:[%s3 + $0x53c] sm:$0xf]
    %v1795 = vld [vmem:[%s3 + $0x540] sm:$0xf]
    %v1796 = vld [vmem:[%s3 + $0x544] sm:$0xf]
    %v1797 = vld [vmem:[%s3 + $0x548] sm:$0xf]
    %v1798 = vld [vmem:[%s3 + $0x54c] sm:$0xf]
    %v1799 = vld [vmem:[%s3 + $0x550] sm:$0xf]
    %v1800 = vld [vmem:[%s3 + $0x554] sm:$0xf]
    %v1801 = vld [vmem:[%s3 + $0x558] sm:$0xf]
    %v1802 = vld [vmem:[%s3 + $0x55c] sm:$0xf]
    %v1803 = vld [vmem:[%s3 + $0x560] sm:$0xf]
    %v1804 = vld [vmem:[%s3 + $0x564] sm:$0xf]
    %v1805 = vld [vmem:[%s3 + $0x568] sm:$0xf]
    %v1806 = vld [vmem:[%s3 + $0x56c] sm:$0xf]
    %v1807 = vld [vmem:[%s3 + $0x570] sm:$0xf]
    %v1808 = vld [vmem:[%s3 + $0x574] sm:$0xf]
    %v1809 = vld [vmem:[%s3 + $0x578] sm:$0xf]
    %v1810 = vld [vmem:[%s3 + $0x57c] sm:$0xf]
    %v1811 = vld [vmem:[%s3 + $0x580] sm:$0xf]
    %v1812 = vld [vmem:[%s3 + $0x584] sm:$0xf]
    %v1813 = vld [vmem:[%s3 + $0x588] sm:$0xf]
    %v1814 = vld [vmem:[%s3 + $0x58c] sm:$0xf]
    %v1815 = vld [vmem:[%s3 + $0x590] sm:$0xf]
    %v1816 = vld [vmem:[%s3 + $0x594] sm:$0xf]
    %v1817 = vld [vmem:[%s3 + $0x598] sm:$0xf]
    %v1818 = vld [vmem:[%s3 + $0x59c] sm:$0xf]
    %v1819 = vld [vmem:[%s3 + $0x5a0] sm:$0xf]
    %v1820 = vld [vmem:[%s3 + $0x5a4] sm:$0xf]
    %v1821 = vld [vmem:[%s3 + $0x5a8] sm:$0xf]
    %v1822 = vld [vmem:[%s3 + $0x5ac] sm:$0xf]
    %v1823 = vld [vmem:[%s3 + $0x5b0] sm:$0xf]
    %v1824 = vld [vmem:[%s3 + $0x5b4] sm:$0xf]
    %v1825 = vld [vmem:[%s3 + $0x5b8] sm:$0xf]
    %v1826 = vld [vmem:[%s3 + $0x5bc] sm:$0xf]
    %v1827 = vld [vmem:[%s3 + $0x5c0] sm:$0xf]
    %v1828 = vld [vmem:[%s3 + $0x5c4] sm:$0xf]
    %v1829 = vld [vmem:[%s3 + $0x5c8] sm:$0xf]
    %v1830 = vld [vmem:[%s3 + $0x5cc] sm:$0xf]
    %v1831 = vld [vmem:[%s3 + $0x5d0] sm:$0xf]
    %v1832 = vld [vmem:[%s3 + $0x5d4] sm:$0xf]
    %v1833 = vld [vmem:[%s3 + $0x5d8] sm:$0xf]
    %v1834 = vld [vmem:[%s3 + $0x5dc] sm:$0xf]
    %v1835 = vld [vmem:[%s3 + $0x5e0] sm:$0xf]
    %v1836 = vld [vmem:[%s3 + $0x5e4] sm:$0xf]
    %v1837 = vld [vmem:[%s3 + $0x5e8] sm:$0xf]
    %v1838 = vld [vmem:[%s3 + $0x5ec] sm:$0xf]
    %v1839 = vld [vmem:[%s3 + $0x5f0] sm:$0xf]
    %v1840 = vld [vmem:[%s3 + $0x5f4] sm:$0xf]
    %v1841 = vld [vmem:[%s3 + $0x5f8] sm:$0xf]
    %v1842 = vld [vmem:[%s3 + $0x5fc] sm:$0xf]
    %v1843 = vld [vmem:[%s3 + $0x600] sm:$0xf]
    %v1844 = vld [vmem:[%s3 + $0x604] sm:$0xf]
    %v1845 = vld [vmem:[%s3 + $0x608] sm:$0xf]
    %v1846 = vld [vmem:[%s3 + $0x60c] sm:$0xf]
    %v1847 = vld [vmem:[%s3 + $0x610] sm:$0xf]
    %v1848 = vld [vmem:[%s3 + $0x614] sm:$0xf]
    %v1849 = vld [vmem:[%s3 + $0x618] sm:$0xf]
    %v1850 = vld [vmem:[%s3 + $0x61c] sm:$0xf]
    %v1851 = vld [vmem:[%s3 + $0x620] sm:$0xf]
    %v1852 = vld [vmem:[%s3 + $0x624] sm:$0xf]
    %v1853 = vld [vmem:[%s3 + $0x628] sm:$0xf]
    %v1854 = vld [vmem:[%s3 + $0x62c] sm:$0xf]
    %v1855 = vld [vmem:[%s3 + $0x630] sm:$0xf]
    %v1856 = vld [vmem:[%s3 + $0x634] sm:$0xf]
    %v1857 = vld [vmem:[%s3 + $0x638] sm:$0xf]
    %v1858 = vld [vmem:[%s3 + $0x63c] sm:$0xf]
    %v1859 = vld [vmem:[%s3 + $0x640] sm:$0xf]
    %v1860 = vld [vmem:[%s3 + $0x644] sm:$0xf]
    %v1861 = vld [vmem:[%s3 + $0x648] sm:$0xf]
    %v1862 = vld [vmem:[%s3 + $0x64c] sm:$0xf]
    %v1863 = vld [vmem:[%s3 + $0x650] sm:$0xf]
    %v1864 = vld [vmem:[%s3 + $0x654] sm:$0xf]
    %v1865 = vld [vmem:[%s3 + $0x658] sm:$0xf]
    %v1866 = vld [vmem:[%s3 + $0x65c] sm:$0xf]
    %v1867 = vld [vmem:[%s3 + $0x660] sm:$0xf]
    %v1868 = vld [vmem:[%s3 + $0x664] sm:$0xf]
    %v1869 = vld [vmem:[%s3 + $0x668] sm:$0xf]
    %v1870 = vld [vmem:[%s3 + $0x66c] sm:$0xf]
    %v1871 = vld [vmem:[%s3 + $0x670] sm:$0xf]
    %v1872 = vld [vmem:[%s3 + $0x674] sm:$0xf]
    %v1873 = vld [vmem:[%s3 + $0x678] sm:$0xf]
    %v1874 = vld [vmem:[%s3 + $0x67c] sm:$0xf]
    %v1875 = vld [vmem:[%s3 + $0x680] sm:$0xf]
    %v1876 = vld [vmem:[%s3 + $0x684] sm:$0xf]
    %v1877 = vld [vmem:[%s3 + $0x688] sm:$0xf]
    %v1878 = vld [vmem:[%s3 + $0x68c] sm:$0xf]
    %v1879 = vld [vmem:[%s3 + $0x690] sm:$0xf]
    %v1880 = vld [vmem:[%s3 + $0x694] sm:$0xf]
    %v1881 = vld [vmem:[%s3 + $0x698] sm:$0xf]
    %v1882 = vld [vmem:[%s3 + $0x69c] sm:$0xf]
    %v1883 = vld [vmem:[%s3 + $0x6a0] sm:$0xf]
    %v1884 = vld [vmem:[%s3 + $0x6a4] sm:$0xf]
    %v1885 = vld [vmem:[%s3 + $0x6a8] sm:$0xf]
    %v1886 = vld [vmem:[%s3 + $0x6ac] sm:$0xf]
    %v1887 = vld [vmem:[%s3 + $0x6b0] sm:$0xf]
    %v1888 = vld [vmem:[%s3 + $0x6b4] sm:$0xf]
    %v1889 = vld [vmem:[%s3 + $0x6b8] sm:$0xf]
    %v1890 = vld [vmem:[%s3 + $0x6bc] sm:$0xf]
    %v1891 = vld [vmem:[%s3 + $0x6c0] sm:$0xf]
    %v1892 = vld [vmem:[%s3 + $0x6c4] sm:$0xf]
    %v1893 = vld [vmem:[%s3 + $0x6c8] sm:$0xf]
    %v1894 = vld [vmem:[%s3 + $0x6cc] sm:$0xf]
    %v1895 = vld [vmem:[%s3 + $0x6d0] sm:$0xf]
    %v1896 = vld [vmem:[%s3 + $0x6d4] sm:$0xf]
    %v1897 = vld [vmem:[%s3 + $0x6d8] sm:$0xf]
    %v1898 = vld [vmem:[%s3 + $0x6dc] sm:$0xf]
    %v1899 = vld [vmem:[%s3 + $0x6e0] sm:$0xf]
    %v1900 = vld [vmem:[%s3 + $0x6e4] sm:$0xf]
    %v1901 = vld [vmem:[%s3 + $0x6e8] sm:$0xf]
    %v1902 = vld [vmem:[%s3 + $0x6ec] sm:$0xf]
    %v1903 = vld [vmem:[%s3 + $0x6f0] sm:$0xf]
    %v1904 = vld [vmem:[%s3 + $0x6f4] sm:$0xf]
    %v1905 = vld [vmem:[%s3 + $0x6f8] sm:$0xf]
    %v1906 = vld [vmem:[%s3 + $0x6fc] sm:$0xf]
    %v1907 = vld [vmem:[%s4] sm:$0x1]
    %v1909 = vlaneseq
    %v1910 = vshrl.u32 %v1909, 7
    %v1911 = vsub.s32 0, %v1910
    %v1912 = vrot.slane %v1907, %v1911
    %v2362 = vunpack.c.l.b16 %v1459
    %v2363 = vunpack.c.l.b16 %v1460
    %v2364 = vunpack.c.l.b16 %v1461
    %v2365 = vunpack.c.l.b16 %v1462
    %v2366 = vunpack.c.l.b16 %v1463
    %v2367 = vunpack.c.l.b16 %v1464
    %v2368 = vunpack.c.l.b16 %v1465
    %v2369 = vunpack.c.l.b16 %v1466
    %v2370 = vunpack.c.l.b16 %v1467
    %v2371 = vunpack.c.l.b16 %v1468
    %v2372 = vunpack.c.l.b16 %v1469
    %v2373 = vunpack.c.l.b16 %v1470
    %v2374 = vunpack.c.l.b16 %v1471
    %v2375 = vunpack.c.l.b16 %v1472
    %v2376 = vunpack.c.l.b16 %v1473
    %v2377 = vunpack.c.l.b16 %v1474
    %v2378 = vunpack.c.l.b16 %v1475
    %v2379 = vunpack.c.l.b16 %v1476
    %v2380 = vunpack.c.l.b16 %v1477
    %v2381 = vunpack.c.l.b16 %v1478
    %v2382 = vunpack.c.l.b16 %v1479
    %v2383 = vunpack.c.l.b16 %v1480
    %v2384 = vunpack.c.l.b16 %v1481
    %v2385 = vunpack.c.l.b16 %v1482
    %v2386 = vunpack.c.l.b16 %v1483
    %v2387 = vunpack.c.l.b16 %v1484
    %v2388 = vunpack.c.l.b16 %v1485
    %v2389 = vunpack.c.l.b16 %v1486
    %v2390 = vunpack.c.l.b16 %v1487
    %v2391 = vunpack.c.l.b16 %v1488
    %v2392 = vunpack.c.l.b16 %v1489
    %v2393 = vunpack.c.l.b16 %v1490
    %v2394 = vunpack.c.l.b16 %v1491
    %v2395 = vunpack.c.l.b16 %v1492
    %v2396 = vunpack.c.l.b16 %v1493
    %v2397 = vunpack.c.l.b16 %v1494
    %v2398 = vunpack.c.l.b16 %v1495
    %v2399 = vunpack.c.l.b16 %v1496
    %v2400 = vunpack.c.l.b16 %v1497
    %v2401 = vunpack.c.l.b16 %v1498
    %v2402 = vunpack.c.l.b16 %v1499
    %v2403 = vunpack.c.l.b16 %v1500
    %v2404 = vunpack.c.l.b16 %v1501
    %v2405 = vunpack.c.l.b16 %v1502
    %v2406 = vunpack.c.l.b16 %v1503
    %v2407 = vunpack.c.l.b16 %v1504
    %v2408 = vunpack.c.l.b16 %v1505
    %v2409 = vunpack.c.l.b16 %v1506
    %v2410 = vunpack.c.l.b16 %v1507
    %v2411 = vunpack.c.l.b16 %v1508
    %v2412 = vunpack.c.l.b16 %v1509
    %v2413 = vunpack.c.l.b16 %v1510
    %v2414 = vunpack.c.l.b16 %v1511
    %v2415 = vunpack.c.l.b16 %v1512
    %v2416 = vunpack.c.l.b16 %v1513
    %v2417 = vunpack.c.l.b16 %v1514
    %v2418 = vunpack.c.l.b16 %v1515
    %v2419 = vunpack.c.l.b16 %v1516
    %v2420 = vunpack.c.l.b16 %v1517
    %v2421 = vunpack.c.l.b16 %v1518
    %v2422 = vunpack.c.l.b16 %v1519
    %v2423 = vunpack.c.l.b16 %v1520
    %v2424 = vunpack.c.l.b16 %v1521
    %v2425 = vunpack.c.l.b16 %v1522
    %v2426 = vunpack.c.l.b16 %v1523
    %v2427 = vunpack.c.l.b16 %v1524
    %v2428 = vunpack.c.l.b16 %v1525
    %v2429 = vunpack.c.l.b16 %v1526
    %v2430 = vunpack.c.l.b16 %v1527
    %v2431 = vunpack.c.l.b16 %v1528
    %v2432 = vunpack.c.l.b16 %v1529
    %v2433 = vunpack.c.l.b16 %v1530
    %v2434 = vunpack.c.l.b16 %v1531
    %v2435 = vunpack.c.l.b16 %v1532
    %v2436 = vunpack.c.l.b16 %v1533
    %v2437 = vunpack.c.l.b16 %v1534
    %v2438 = vunpack.c.l.b16 %v1535
    %v2439 = vunpack.c.l.b16 %v1536
    %v2440 = vunpack.c.l.b16 %v1537
    %v2441 = vunpack.c.l.b16 %v1538
    %v2442 = vunpack.c.l.b16 %v1539
    %v2443 = vunpack.c.l.b16 %v1540
    %v2444 = vunpack.c.l.b16 %v1541
    %v2445 = vunpack.c.l.b16 %v1542
    %v2446 = vunpack.c.l.b16 %v1543
    %v2447 = vunpack.c.l.b16 %v1544
    %v2448 = vunpack.c.l.b16 %v1545
    %v2449 = vunpack.c.l.b16 %v1546
    %v2450 = vunpack.c.l.b16 %v1547
    %v2451 = vunpack.c.l.b16 %v1548
    %v2452 = vunpack.c.l.b16 %v1549
    %v2453 = vunpack.c.l.b16 %v1550
    %v2454 = vunpack.c.l.b16 %v1551
    %v2455 = vunpack.c.l.b16 %v1552
    %v2456 = vunpack.c.l.b16 %v1553
    %v2457 = vunpack.c.l.b16 %v1554
    %v2458 = vunpack.c.l.b16 %v1555
    %v2459 = vunpack.c.l.b16 %v1556
    %v2460 = vunpack.c.l.b16 %v1557
    %v2461 = vunpack.c.l.b16 %v1558
    %v2462 = vunpack.c.l.b16 %v1559
    %v2463 = vunpack.c.l.b16 %v1560
    %v2464 = vunpack.c.l.b16 %v1561
    %v2465 = vunpack.c.l.b16 %v1562
    %v2466 = vunpack.c.l.b16 %v1563
    %v2467 = vunpack.c.l.b16 %v1564
    %v2468 = vunpack.c.l.b16 %v1565
    %v2469 = vunpack.c.l.b16 %v1566
    %v2470 = vunpack.c.l.b16 %v1567
    %v2471 = vunpack.c.l.b16 %v1568
    %v2472 = vunpack.c.l.b16 %v1569
    %v2473 = vunpack.c.l.b16 %v1570
    %v2474 = vunpack.c.l.b16 %v1571
    %v2475 = vunpack.c.l.b16 %v1572
    %v2476 = vunpack.c.l.b16 %v1573
    %v2477 = vunpack.c.l.b16 %v1574
    %v2478 = vunpack.c.l.b16 %v1575
    %v2479 = vunpack.c.l.b16 %v1576
    %v2480 = vunpack.c.l.b16 %v1577
    %v2481 = vunpack.c.l.b16 %v1578
    %v2482 = vunpack.c.l.b16 %v1579
    %v2483 = vunpack.c.l.b16 %v1580
    %v2484 = vunpack.c.l.b16 %v1581
    %v2485 = vunpack.c.l.b16 %v1582
    %v2486 = vunpack.c.l.b16 %v1583
    %v2487 = vunpack.c.l.b16 %v1584
    %v2488 = vunpack.c.l.b16 %v1585
    %v2489 = vunpack.c.l.b16 %v1586
    %v2490 = vunpack.c.l.b16 %v1587
    %v2491 = vunpack.c.l.b16 %v1588
    %v2492 = vunpack.c.l.b16 %v1589
    %v2493 = vunpack.c.l.b16 %v1590
    %v2494 = vunpack.c.l.b16 %v1591
    %v2495 = vunpack.c.l.b16 %v1592
    %v2496 = vunpack.c.l.b16 %v1593
    %v2497 = vunpack.c.l.b16 %v1594
    %v2498 = vunpack.c.l.b16 %v1595
    %v2499 = vunpack.c.l.b16 %v1596
    %v2500 = vunpack.c.l.b16 %v1597
    %v2501 = vunpack.c.l.b16 %v1598
    %v2502 = vunpack.c.l.b16 %v1599
    %v2503 = vunpack.c.l.b16 %v1600
    %v2504 = vunpack.c.l.b16 %v1601
    %v2505 = vunpack.c.l.b16 %v1602
    %v2506 = vunpack.c.l.b16 %v1603
    %v2507 = vunpack.c.l.b16 %v1604
    %v2508 = vunpack.c.l.b16 %v1605
    %v2509 = vunpack.c.l.b16 %v1606
    %v2510 = vunpack.c.l.b16 %v1607
    %v2511 = vunpack.c.l.b16 %v1608
    %v2512 = vunpack.c.l.b16 %v1609
    %v2513 = vunpack.c.l.b16 %v1610
    %v2514 = vunpack.c.l.b16 %v1611
    %v2515 = vunpack.c.l.b16 %v1612
    %v2516 = vunpack.c.l.b16 %v1613
    %v2517 = vunpack.c.l.b16 %v1614
    %v2518 = vunpack.c.l.b16 %v1615
    %v2519 = vunpack.c.l.b16 %v1616
    %v2520 = vunpack.c.l.b16 %v1617
    %v2521 = vunpack.c.l.b16 %v1618
    %v2522 = vunpack.c.l.b16 %v1619
    %v2523 = vunpack.c.l.b16 %v1620
    %v2524 = vunpack.c.l.b16 %v1621
    %v2525 = vunpack.c.l.b16 %v1622
    %v2526 = vunpack.c.l.b16 %v1623
    %v2527 = vunpack.c.l.b16 %v1624
    %v2528 = vunpack.c.l.b16 %v1625
    %v2529 = vunpack.c.l.b16 %v1626
    %v2530 = vunpack.c.l.b16 %v1627
    %v2531 = vunpack.c.l.b16 %v1628
    %v2532 = vunpack.c.l.b16 %v1629
    %v2533 = vunpack.c.l.b16 %v1630
    %v2534 = vunpack.c.l.b16 %v1631
    %v2535 = vunpack.c.l.b16 %v1632
    %v2536 = vunpack.c.l.b16 %v1633
    %v2537 = vunpack.c.l.b16 %v1634
    %v2538 = vunpack.c.l.b16 %v1635
    %v2539 = vunpack.c.l.b16 %v1636
    %v2540 = vunpack.c.l.b16 %v1637
    %v2541 = vunpack.c.l.b16 %v1638
    %v2542 = vunpack.c.l.b16 %v1639
    %v2543 = vunpack.c.l.b16 %v1640
    %v2544 = vunpack.c.l.b16 %v1641
    %v2545 = vunpack.c.l.b16 %v1642
    %v2546 = vunpack.c.l.b16 %v1643
    %v2547 = vunpack.c.l.b16 %v1644
    %v2548 = vunpack.c.l.b16 %v1645
    %v2549 = vunpack.c.l.b16 %v1646
    %v2550 = vunpack.c.l.b16 %v1647
    %v2551 = vunpack.c.l.b16 %v1648
    %v2552 = vunpack.c.l.b16 %v1649
    %v2553 = vunpack.c.l.b16 %v1650
    %v2554 = vunpack.c.l.b16 %v1651
    %v2555 = vunpack.c.l.b16 %v1652
    %v2556 = vunpack.c.l.b16 %v1653
    %v2557 = vunpack.c.l.b16 %v1654
    %v2558 = vunpack.c.l.b16 %v1655
    %v2559 = vunpack.c.l.b16 %v1656
    %v2560 = vunpack.c.l.b16 %v1657
    %v2561 = vunpack.c.l.b16 %v1658
    %v2562 = vunpack.c.l.b16 %v1659
    %v2563 = vunpack.c.l.b16 %v1660
    %v2564 = vunpack.c.l.b16 %v1661
    %v2565 = vunpack.c.l.b16 %v1662
    %v2566 = vunpack.c.l.b16 %v1663
    %v2567 = vunpack.c.l.b16 %v1664
    %v2568 = vunpack.c.l.b16 %v1665
    %v2569 = vunpack.c.l.b16 %v1666
    %v2570 = vunpack.c.l.b16 %v1667
    %v2571 = vunpack.c.l.b16 %v1668
    %v2572 = vunpack.c.l.b16 %v1669
    %v2573 = vunpack.c.l.b16 %v1670
    %v2574 = vunpack.c.l.b16 %v1671
    %v2575 = vunpack.c.l.b16 %v1672
    %v2576 = vunpack.c.l.b16 %v1673
    %v2577 = vunpack.c.l.b16 %v1674
    %v2578 = vunpack.c.l.b16 %v1675
    %v2579 = vunpack.c.l.b16 %v1676
    %v2580 = vunpack.c.l.b16 %v1677
    %v2581 = vunpack.c.l.b16 %v1678
    %v2582 = vunpack.c.l.b16 %v1679
    %v2583 = vunpack.c.l.b16 %v1680
    %v2584 = vunpack.c.l.b16 %v1681
    %v2585 = vunpack.c.l.b16 %v1682
    %v2586 = vunpack.c.l.b16 %v1683
    %v2587 = vunpack.c.l.b16 %v1684
    %v2588 = vunpack.c.l.b16 %v1685
    %v2589 = vunpack.c.l.b16 %v1686
    %v2590 = vunpack.c.l.b16 %v1687
    %v2591 = vunpack.c.l.b16 %v1688
    %v2592 = vunpack.c.l.b16 %v1689
    %v2593 = vunpack.c.l.b16 %v1690
    %v2594 = vunpack.c.l.b16 %v1691
    %v2595 = vunpack.c.l.b16 %v1692
    %v2596 = vunpack.c.l.b16 %v1693
    %v2597 = vunpack.c.l.b16 %v1694
    %v2598 = vunpack.c.l.b16 %v1695
    %v2599 = vunpack.c.l.b16 %v1696
    %v2600 = vunpack.c.l.b16 %v1697
    %v2601 = vunpack.c.l.b16 %v1698
    %v2602 = vunpack.c.l.b16 %v1699
    %v2603 = vunpack.c.l.b16 %v1700
    %v2604 = vunpack.c.l.b16 %v1701
    %v2605 = vunpack.c.l.b16 %v1702
    %v2606 = vunpack.c.l.b16 %v1703
    %v2607 = vunpack.c.l.b16 %v1704
    %v2608 = vunpack.c.l.b16 %v1705
    %v2609 = vunpack.c.l.b16 %v1706
    %v2610 = vunpack.c.l.b16 %v1707
    %v2611 = vunpack.c.l.b16 %v1708
    %v2612 = vunpack.c.l.b16 %v1709
    %v2613 = vunpack.c.l.b16 %v1710
    %v2614 = vunpack.c.l.b16 %v1711
    %v2615 = vunpack.c.l.b16 %v1712
    %v2616 = vunpack.c.l.b16 %v1713
    %v2617 = vunpack.c.l.b16 %v1714
    %v2618 = vunpack.c.l.b16 %v1715
    %v2619 = vunpack.c.l.b16 %v1716
    %v2620 = vunpack.c.l.b16 %v1717
    %v2621 = vunpack.c.l.b16 %v1718
    %v2622 = vunpack.c.l.b16 %v1719
    %v2623 = vunpack.c.l.b16 %v1720
    %v2624 = vunpack.c.l.b16 %v1721
    %v2625 = vunpack.c.l.b16 %v1722
    %v2626 = vunpack.c.l.b16 %v1723
    %v2627 = vunpack.c.l.b16 %v1724
    %v2628 = vunpack.c.l.b16 %v1725
    %v2629 = vunpack.c.l.b16 %v1726
    %v2630 = vunpack.c.l.b16 %v1727
    %v2631 = vunpack.c.l.b16 %v1728
    %v2632 = vunpack.c.l.b16 %v1729
    %v2633 = vunpack.c.l.b16 %v1730
    %v2634 = vunpack.c.l.b16 %v1731
    %v2635 = vunpack.c.l.b16 %v1732
    %v2636 = vunpack.c.l.b16 %v1733
    %v2637 = vunpack.c.l.b16 %v1734
    %v2638 = vunpack.c.l.b16 %v1735
    %v2639 = vunpack.c.l.b16 %v1736
    %v2640 = vunpack.c.l.b16 %v1737
    %v2641 = vunpack.c.l.b16 %v1738
    %v2642 = vunpack.c.l.b16 %v1739
    %v2643 = vunpack.c.l.b16 %v1740
    %v2644 = vunpack.c.l.b16 %v1741
    %v2645 = vunpack.c.l.b16 %v1742
    %v2646 = vunpack.c.l.b16 %v1743
    %v2647 = vunpack.c.l.b16 %v1744
    %v2648 = vunpack.c.l.b16 %v1745
    %v2649 = vunpack.c.l.b16 %v1746
    %v2650 = vunpack.c.l.b16 %v1747
    %v2651 = vunpack.c.l.b16 %v1748
    %v2652 = vunpack.c.l.b16 %v1749
    %v2653 = vunpack.c.l.b16 %v1750
    %v2654 = vunpack.c.l.b16 %v1751
    %v2655 = vunpack.c.l.b16 %v1752
    %v2656 = vunpack.c.l.b16 %v1753
    %v2657 = vunpack.c.l.b16 %v1754
    %v2658 = vunpack.c.l.b16 %v1755
    %v2659 = vunpack.c.l.b16 %v1756
    %v2660 = vunpack.c.l.b16 %v1757
    %v2661 = vunpack.c.l.b16 %v1758
    %v2662 = vunpack.c.l.b16 %v1759
    %v2663 = vunpack.c.l.b16 %v1760
    %v2664 = vunpack.c.l.b16 %v1761
    %v2665 = vunpack.c.l.b16 %v1762
    %v2666 = vunpack.c.l.b16 %v1763
    %v2667 = vunpack.c.l.b16 %v1764
    %v2668 = vunpack.c.l.b16 %v1765
    %v2669 = vunpack.c.l.b16 %v1766
    %v2670 = vunpack.c.l.b16 %v1767
    %v2671 = vunpack.c.l.b16 %v1768
    %v2672 = vunpack.c.l.b16 %v1769
    %v2673 = vunpack.c.l.b16 %v1770
    %v2674 = vunpack.c.l.b16 %v1771
    %v2675 = vunpack.c.l.b16 %v1772
    %v2676 = vunpack.c.l.b16 %v1773
    %v2677 = vunpack.c.l.b16 %v1774
    %v2678 = vunpack.c.l.b16 %v1775
    %v2679 = vunpack.c.l.b16 %v1776
    %v2680 = vunpack.c.l.b16 %v1777
    %v2681 = vunpack.c.l.b16 %v1778
    %v2682 = vunpack.c.l.b16 %v1779
    %v2683 = vunpack.c.l.b16 %v1780
    %v2684 = vunpack.c.l.b16 %v1781
    %v2685 = vunpack.c.l.b16 %v1782
    %v2686 = vunpack.c.l.b16 %v1783
    %v2687 = vunpack.c.l.b16 %v1784
    %v2688 = vunpack.c.l.b16 %v1785
    %v2689 = vunpack.c.l.b16 %v1786
    %v2690 = vunpack.c.l.b16 %v1787
    %v2691 = vunpack.c.l.b16 %v1788
    %v2692 = vunpack.c.l.b16 %v1789
    %v2693 = vunpack.c.l.b16 %v1790
    %v2694 = vunpack.c.l.b16 %v1791
    %v2695 = vunpack.c.l.b16 %v1792
    %v2696 = vunpack.c.l.b16 %v1793
    %v2697 = vunpack.c.l.b16 %v1794
    %v2698 = vunpack.c.l.b16 %v1795
    %v2699 = vunpack.c.l.b16 %v1796
    %v2700 = vunpack.c.l.b16 %v1797
    %v2701 = vunpack.c.l.b16 %v1798
    %v2702 = vunpack.c.l.b16 %v1799
    %v2703 = vunpack.c.l.b16 %v1800
    %v2704 = vunpack.c.l.b16 %v1801
    %v2705 = vunpack.c.l.b16 %v1802
    %v2706 = vunpack.c.l.b16 %v1803
    %v2707 = vunpack.c.l.b16 %v1804
    %v2708 = vunpack.c.l.b16 %v1805
    %v2709 = vunpack.c.l.b16 %v1806
    %v2710 = vunpack.c.l.b16 %v1807
    %v2711 = vunpack.c.l.b16 %v1808
    %v2712 = vunpack.c.l.b16 %v1809
    %v2713 = vunpack.c.l.b16 %v1810
    %v2714 = vunpack.c.l.b16 %v1811
    %v2715 = vunpack.c.l.b16 %v1812
    %v2716 = vunpack.c.l.b16 %v1813
    %v2717 = vunpack.c.l.b16 %v1814
    %v2718 = vunpack.c.l.b16 %v1815
    %v2719 = vunpack.c.l.b16 %v1816
    %v2720 = vunpack.c.l.b16 %v1817
    %v2721 = vunpack.c.l.b16 %v1818
    %v2722 = vunpack.c.l.b16 %v1819
    %v2723 = vunpack.c.l.b16 %v1820
    %v2724 = vunpack.c.l.b16 %v1821
    %v2725 = vunpack.c.l.b16 %v1822
    %v2726 = vunpack.c.l.b16 %v1823
    %v2727 = vunpack.c.l.b16 %v1824
    %v2728 = vunpack.c.l.b16 %v1825
    %v2729 = vunpack.c.l.b16 %v1826
    %v2730 = vunpack.c.l.b16 %v1827
    %v2731 = vunpack.c.l.b16 %v1828
    %v2732 = vunpack.c.l.b16 %v1829
    %v2733 = vunpack.c.l.b16 %v1830
    %v2734 = vunpack.c.l.b16 %v1831
    %v2735 = vunpack.c.l.b16 %v1832
    %v2736 = vunpack.c.l.b16 %v1833
    %v2737 = vunpack.c.l.b16 %v1834
    %v2738 = vunpack.c.l.b16 %v1835
    %v2739 = vunpack.c.l.b16 %v1836
    %v2740 = vunpack.c.l.b16 %v1837
    %v2741 = vunpack.c.l.b16 %v1838
    %v2742 = vunpack.c.l.b16 %v1839
    %v2743 = vunpack.c.l.b16 %v1840
    %v2744 = vunpack.c.l.b16 %v1841
    %v2745 = vunpack.c.l.b16 %v1842
    %v2746 = vunpack.c.l.b16 %v1843
    %v2747 = vunpack.c.l.b16 %v1844
    %v2748 = vunpack.c.l.b16 %v1845
    %v2749 = vunpack.c.l.b16 %v1846
    %v2750 = vunpack.c.l.b16 %v1847
    %v2751 = vunpack.c.l.b16 %v1848
    %v2752 = vunpack.c.l.b16 %v1849
    %v2753 = vunpack.c.l.b16 %v1850
    %v2754 = vunpack.c.l.b16 %v1851
    %v2755 = vunpack.c.l.b16 %v1852
    %v2756 = vunpack.c.l.b16 %v1853
    %v2757 = vunpack.c.l.b16 %v1854
    %v2758 = vunpack.c.l.b16 %v1855
    %v2759 = vunpack.c.l.b16 %v1856
    %v2760 = vunpack.c.l.b16 %v1857
    %v2761 = vunpack.c.l.b16 %v1858
    %v2762 = vunpack.c.l.b16 %v1859
    %v2763 = vunpack.c.l.b16 %v1860
    %v2764 = vunpack.c.l.b16 %v1861
    %v2765 = vunpack.c.l.b16 %v1862
    %v2766 = vunpack.c.l.b16 %v1863
    %v2767 = vunpack.c.l.b16 %v1864
    %v2768 = vunpack.c.l.b16 %v1865
    %v2769 = vunpack.c.l.b16 %v1866
    %v2770 = vunpack.c.l.b16 %v1867
    %v2771 = vunpack.c.l.b16 %v1868
    %v2772 = vunpack.c.l.b16 %v1869
    %v2773 = vunpack.c.l.b16 %v1870
    %v2774 = vunpack.c.l.b16 %v1871
    %v2775 = vunpack.c.l.b16 %v1872
    %v2776 = vunpack.c.l.b16 %v1873
    %v2777 = vunpack.c.l.b16 %v1874
    %v2778 = vunpack.c.l.b16 %v1875
    %v2779 = vunpack.c.l.b16 %v1876
    %v2780 = vunpack.c.l.b16 %v1877
    %v2781 = vunpack.c.l.b16 %v1878
    %v2782 = vunpack.c.l.b16 %v1879
    %v2783 = vunpack.c.l.b16 %v1880
    %v2784 = vunpack.c.l.b16 %v1881
    %v2785 = vunpack.c.l.b16 %v1882
    %v2786 = vunpack.c.l.b16 %v1883
    %v2787 = vunpack.c.l.b16 %v1884
    %v2788 = vunpack.c.l.b16 %v1885
    %v2789 = vunpack.c.l.b16 %v1886
    %v2790 = vunpack.c.l.b16 %v1887
    %v2791 = vunpack.c.l.b16 %v1888
    %v2792 = vunpack.c.l.b16 %v1889
    %v2793 = vunpack.c.l.b16 %v1890
    %v2794 = vunpack.c.l.b16 %v1891
    %v2795 = vunpack.c.l.b16 %v1892
    %v2796 = vunpack.c.l.b16 %v1893
    %v2797 = vunpack.c.l.b16 %v1894
    %v2798 = vunpack.c.l.b16 %v1895
    %v2799 = vunpack.c.l.b16 %v1896
    %v2800 = vunpack.c.l.b16 %v1897
    %v2801 = vunpack.c.l.b16 %v1898
    %v2802 = vunpack.c.l.b16 %v1899
    %v2803 = vunpack.c.l.b16 %v1900
    %v2804 = vunpack.c.l.b16 %v1901
    %v2805 = vunpack.c.l.b16 %v1902
    %v2806 = vunpack.c.l.b16 %v1903
    %v2807 = vunpack.c.l.b16 %v1904
    %v2808 = vunpack.c.l.b16 %v1905
    %v2809 = vunpack.c.l.b16 %v1906
    %v2810 = vpack.c.b16 %v2363, %v2362
    %v2811 = vpack.c.b16 %v2365, %v2364
    %v2812 = vpack.c.b16 %v2367, %v2366
    %v2813 = vpack.c.b16 %v2369, %v2368
    %v2814 = vpack.c.b16 %v2371, %v2370
    %v2815 = vpack.c.b16 %v2373, %v2372
    %v2816 = vpack.c.b16 %v2375, %v2374
    %v2817 = vpack.c.b16 %v2377, %v2376
    %v2818 = vpack.c.b16 %v2379, %v2378
    %v2819 = vpack.c.b16 %v2381, %v2380
    %v2820 = vpack.c.b16 %v2383, %v2382
    %v2821 = vpack.c.b16 %v2385, %v2384
    %v2822 = vpack.c.b16 %v2387, %v2386
    %v2823 = vpack.c.b16 %v2389, %v2388
    %v2824 = vpack.c.b16 %v2391, %v2390
    %v2825 = vpack.c.b16 %v2393, %v2392
    %v2826 = vpack.c.b16 %v2395, %v2394
    %v2827 = vpack.c.b16 %v2397, %v2396
    %v2828 = vpack.c.b16 %v2399, %v2398
    %v2829 = vpack.c.b16 %v2401, %v2400
    %v2830 = vpack.c.b16 %v2403, %v2402
    %v2831 = vpack.c.b16 %v2405, %v2404
    %v2832 = vpack.c.b16 %v2407, %v2406
    %v2833 = vpack.c.b16 %v2409, %v2408
    %v2834 = vpack.c.b16 %v2411, %v2410
    %v2835 = vpack.c.b16 %v2413, %v2412
    %v2836 = vpack.c.b16 %v2415, %v2414
    %v2837 = vpack.c.b16 %v2417, %v2416
    %v2838 = vpack.c.b16 %v2419, %v2418
    %v2839 = vpack.c.b16 %v2421, %v2420
    %v2840 = vpack.c.b16 %v2423, %v2422
    %v2841 = vpack.c.b16 %v2425, %v2424
    %v2842 = vpack.c.b16 %v2427, %v2426
    %v2843 = vpack.c.b16 %v2429, %v2428
    %v2844 = vpack.c.b16 %v2431, %v2430
    %v2845 = vpack.c.b16 %v2433, %v2432
    %v2846 = vpack.c.b16 %v2435, %v2434
    %v2847 = vpack.c.b16 %v2437, %v2436
    %v2848 = vpack.c.b16 %v2439, %v2438
    %v2849 = vpack.c.b16 %v2441, %v2440
    %v2850 = vpack.c.b16 %v2443, %v2442
    %v2851 = vpack.c.b16 %v2445, %v2444
    %v2852 = vpack.c.b16 %v2447, %v2446
    %v2853 = vpack.c.b16 %v2449, %v2448
    %v2854 = vpack.c.b16 %v2451, %v2450
    %v2855 = vpack.c.b16 %v2453, %v2452
    %v2856 = vpack.c.b16 %v2455, %v2454
    %v2857 = vpack.c.b16 %v2457, %v2456
    %v2858 = vpack.c.b16 %v2459, %v2458
    %v2859 = vpack.c.b16 %v2461, %v2460
    %v2860 = vpack.c.b16 %v2463, %v2462
    %v2861 = vpack.c.b16 %v2465, %v2464
    %v2862 = vpack.c.b16 %v2467, %v2466
    %v2863 = vpack.c.b16 %v2469, %v2468
    %v2864 = vpack.c.b16 %v2471, %v2470
    %v2865 = vpack.c.b16 %v2473, %v2472
    %v2866 = vpack.c.b16 %v2475, %v2474
    %v2867 = vpack.c.b16 %v2477, %v2476
    %v2868 = vpack.c.b16 %v2479, %v2478
    %v2869 = vpack.c.b16 %v2481, %v2480
    %v2870 = vpack.c.b16 %v2483, %v2482
    %v2871 = vpack.c.b16 %v2485, %v2484
    %v2872 = vpack.c.b16 %v2487, %v2486
    %v2873 = vpack.c.b16 %v2489, %v2488
    %v2874 = vpack.c.b16 %v2491, %v2490
    %v2875 = vpack.c.b16 %v2493, %v2492
    %v2876 = vpack.c.b16 %v2495, %v2494
    %v2877 = vpack.c.b16 %v2497, %v2496
    %v2878 = vpack.c.b16 %v2499, %v2498
    %v2879 = vpack.c.b16 %v2501, %v2500
    %v2880 = vpack.c.b16 %v2503, %v2502
    %v2881 = vpack.c.b16 %v2505, %v2504
    %v2882 = vpack.c.b16 %v2507, %v2506
    %v2883 = vpack.c.b16 %v2509, %v2508
    %v2884 = vpack.c.b16 %v2511, %v2510
    %v2885 = vpack.c.b16 %v2513, %v2512
    %v2886 = vpack.c.b16 %v2515, %v2514
    %v2887 = vpack.c.b16 %v2517, %v2516
    %v2888 = vpack.c.b16 %v2519, %v2518
    %v2889 = vpack.c.b16 %v2521, %v2520
    %v2890 = vpack.c.b16 %v2523, %v2522
    %v2891 = vpack.c.b16 %v2525, %v2524
    %v2892 = vpack.c.b16 %v2527, %v2526
    %v2893 = vpack.c.b16 %v2529, %v2528
    %v2894 = vpack.c.b16 %v2531, %v2530
    %v2895 = vpack.c.b16 %v2533, %v2532
    %v2896 = vpack.c.b16 %v2535, %v2534
    %v2897 = vpack.c.b16 %v2537, %v2536
    %v2898 = vpack.c.b16 %v2539, %v2538
    %v2899 = vpack.c.b16 %v2541, %v2540
    %v2900 = vpack.c.b16 %v2543, %v2542
    %v2901 = vpack.c.b16 %v2545, %v2544
    %v2902 = vpack.c.b16 %v2547, %v2546
    %v2903 = vpack.c.b16 %v2549, %v2548
    %v2904 = vpack.c.b16 %v2551, %v2550
    %v2905 = vpack.c.b16 %v2553, %v2552
    %v2906 = vpack.c.b16 %v2555, %v2554
    %v2907 = vpack.c.b16 %v2557, %v2556
    %v2908 = vpack.c.b16 %v2559, %v2558
    %v2909 = vpack.c.b16 %v2561, %v2560
    %v2910 = vpack.c.b16 %v2563, %v2562
    %v2911 = vpack.c.b16 %v2565, %v2564
    %v2912 = vpack.c.b16 %v2567, %v2566
    %v2913 = vpack.c.b16 %v2569, %v2568
    %v2914 = vpack.c.b16 %v2571, %v2570
    %v2915 = vpack.c.b16 %v2573, %v2572
    %v2916 = vpack.c.b16 %v2575, %v2574
    %v2917 = vpack.c.b16 %v2577, %v2576
    %v2918 = vpack.c.b16 %v2579, %v2578
    %v2919 = vpack.c.b16 %v2581, %v2580
    %v2920 = vpack.c.b16 %v2583, %v2582
    %v2921 = vpack.c.b16 %v2585, %v2584
    %v2922 = vpack.c.b16 %v2587, %v2586
    %v2923 = vpack.c.b16 %v2589, %v2588
    %v2924 = vpack.c.b16 %v2591, %v2590
    %v2925 = vpack.c.b16 %v2593, %v2592
    %v2926 = vpack.c.b16 %v2595, %v2594
    %v2927 = vpack.c.b16 %v2597, %v2596
    %v2928 = vpack.c.b16 %v2599, %v2598
    %v2929 = vpack.c.b16 %v2601, %v2600
    %v2930 = vpack.c.b16 %v2603, %v2602
    %v2931 = vpack.c.b16 %v2605, %v2604
    %v2932 = vpack.c.b16 %v2607, %v2606
    %v2933 = vpack.c.b16 %v2609, %v2608
    %v2934 = vpack.c.b16 %v2611, %v2610
    %v2935 = vpack.c.b16 %v2613, %v2612
    %v2936 = vpack.c.b16 %v2615, %v2614
    %v2937 = vpack.c.b16 %v2617, %v2616
    %v2938 = vpack.c.b16 %v2619, %v2618
    %v2939 = vpack.c.b16 %v2621, %v2620
    %v2940 = vpack.c.b16 %v2623, %v2622
    %v2941 = vpack.c.b16 %v2625, %v2624
    %v2942 = vpack.c.b16 %v2627, %v2626
    %v2943 = vpack.c.b16 %v2629, %v2628
    %v2944 = vpack.c.b16 %v2631, %v2630
    %v2945 = vpack.c.b16 %v2633, %v2632
    %v2946 = vpack.c.b16 %v2635, %v2634
    %v2947 = vpack.c.b16 %v2637, %v2636
    %v2948 = vpack.c.b16 %v2639, %v2638
    %v2949 = vpack.c.b16 %v2641, %v2640
    %v2950 = vpack.c.b16 %v2643, %v2642
    %v2951 = vpack.c.b16 %v2645, %v2644
    %v2952 = vpack.c.b16 %v2647, %v2646
    %v2953 = vpack.c.b16 %v2649, %v2648
    %v2954 = vpack.c.b16 %v2651, %v2650
    %v2955 = vpack.c.b16 %v2653, %v2652
    %v2956 = vpack.c.b16 %v2655, %v2654
    %v2957 = vpack.c.b16 %v2657, %v2656
    %v2958 = vpack.c.b16 %v2659, %v2658
    %v2959 = vpack.c.b16 %v2661, %v2660
    %v2960 = vpack.c.b16 %v2663, %v2662
    %v2961 = vpack.c.b16 %v2665, %v2664
    %v2962 = vpack.c.b16 %v2667, %v2666
    %v2963 = vpack.c.b16 %v2669, %v2668
    %v2964 = vpack.c.b16 %v2671, %v2670
    %v2965 = vpack.c.b16 %v2673, %v2672
    %v2966 = vpack.c.b16 %v2675, %v2674
    %v2967 = vpack.c.b16 %v2677, %v2676
    %v2968 = vpack.c.b16 %v2679, %v2678
    %v2969 = vpack.c.b16 %v2681, %v2680
    %v2970 = vpack.c.b16 %v2683, %v2682
    %v2971 = vpack.c.b16 %v2685, %v2684
    %v2972 = vpack.c.b16 %v2687, %v2686
    %v2973 = vpack.c.b16 %v2689, %v2688
    %v2974 = vpack.c.b16 %v2691, %v2690
    %v2975 = vpack.c.b16 %v2693, %v2692
    %v2976 = vpack.c.b16 %v2695, %v2694
    %v2977 = vpack.c.b16 %v2697, %v2696
    %v2978 = vpack.c.b16 %v2699, %v2698
    %v2979 = vpack.c.b16 %v2701, %v2700
    %v2980 = vpack.c.b16 %v2703, %v2702
    %v2981 = vpack.c.b16 %v2705, %v2704
    %v2982 = vpack.c.b16 %v2707, %v2706
    %v2983 = vpack.c.b16 %v2709, %v2708
    %v2984 = vpack.c.b16 %v2711, %v2710
    %v2985 = vpack.c.b16 %v2713, %v2712
    %v2986 = vpack.c.b16 %v2715, %v2714
    %v2987 = vpack.c.b16 %v2717, %v2716
    %v2988 = vpack.c.b16 %v2719, %v2718
    %v2989 = vpack.c.b16 %v2721, %v2720
    %v2990 = vpack.c.b16 %v2723, %v2722
    %v2991 = vpack.c.b16 %v2725, %v2724
    %v2992 = vpack.c.b16 %v2727, %v2726
    %v2993 = vpack.c.b16 %v2729, %v2728
    %v2994 = vpack.c.b16 %v2731, %v2730
    %v2995 = vpack.c.b16 %v2733, %v2732
    %v2996 = vpack.c.b16 %v2735, %v2734
    %v2997 = vpack.c.b16 %v2737, %v2736
    %v2998 = vpack.c.b16 %v2739, %v2738
    %v2999 = vpack.c.b16 %v2741, %v2740
    %v3000 = vpack.c.b16 %v2743, %v2742
    %v3001 = vpack.c.b16 %v2745, %v2744
    %v3002 = vpack.c.b16 %v2747, %v2746
    %v3003 = vpack.c.b16 %v2749, %v2748
    %v3004 = vpack.c.b16 %v2751, %v2750
    %v3005 = vpack.c.b16 %v2753, %v2752
    %v3006 = vpack.c.b16 %v2755, %v2754
    %v3007 = vpack.c.b16 %v2757, %v2756
    %v3008 = vpack.c.b16 %v2759, %v2758
    %v3009 = vpack.c.b16 %v2761, %v2760
    %v3010 = vpack.c.b16 %v2763, %v2762
    %v3011 = vpack.c.b16 %v2765, %v2764
    %v3012 = vpack.c.b16 %v2767, %v2766
    %v3013 = vpack.c.b16 %v2769, %v2768
    %v3014 = vpack.c.b16 %v2771, %v2770
    %v3015 = vpack.c.b16 %v2773, %v2772
    %v3016 = vpack.c.b16 %v2775, %v2774
    %v3017 = vpack.c.b16 %v2777, %v2776
    %v3018 = vpack.c.b16 %v2779, %v2778
    %v3019 = vpack.c.b16 %v2781, %v2780
    %v3020 = vpack.c.b16 %v2783, %v2782
    %v3021 = vpack.c.b16 %v2785, %v2784
    %v3022 = vpack.c.b16 %v2787, %v2786
    %v3023 = vpack.c.b16 %v2789, %v2788
    %v3024 = vpack.c.b16 %v2791, %v2790
    %v3025 = vpack.c.b16 %v2793, %v2792
    %v3026 = vpack.c.b16 %v2795, %v2794
    %v3027 = vpack.c.b16 %v2797, %v2796
    %v3028 = vpack.c.b16 %v2799, %v2798
    %v3029 = vpack.c.b16 %v2801, %v2800
    %v3030 = vpack.c.b16 %v2803, %v2802
    %v3031 = vpack.c.b16 %v2805, %v2804
    %v3032 = vpack.c.b16 %v2807, %v2806
    %v3033 = vpack.c.b16 %v2809, %v2808
    %3258 = vmatprep.subr.bf16.mxu0 0
    %3259 = vmatpush1.bf16.msra.mxu0 %v2817
    %3260 = vmatprep.subr.bf16.mxu0 0
    %3261 = vmatpush1.bf16.msra.mxu0 %v2816
    %3262 = vmatprep.subr.bf16.mxu0 0
    %3263 = vmatpush1.bf16.msra.mxu0 %v2815
    %3264 = vmatprep.subr.bf16.mxu0 0
    %3265 = vmatpush1.bf16.msra.mxu0 %v2814
    %3266 = vmatprep.subr.bf16.mxu0 0
    %3267 = vmatpush1.bf16.msra.mxu0 %v2813
    %3268 = vmatprep.subr.bf16.mxu0 0
    %3269 = vmatpush1.bf16.msra.mxu0 %v2812
    %3270 = vmatprep.subr.bf16.mxu0 0
    %3271 = vmatpush1.bf16.msra.mxu0 %v2811
    %3272 = vmatprep.subr.bf16.mxu0 0
    %3273 = vmatpush1.bf16.msra.mxu0 %v2810
    %3274 = vmatprep.subr.bf16.mxu0 0
    %3275 = vmatpush2.bf16.msra.mxu0 %v2825
    %3276 = vmatprep.subr.bf16.mxu0 0
    %3277 = vmatpush2.bf16.msra.mxu0 %v2824
    %3278 = vmatprep.subr.bf16.mxu0 0
    %3279 = vmatpush2.bf16.msra.mxu0 %v2823
    %3280 = vmatprep.subr.bf16.mxu0 0
    %3281 = vmatpush2.bf16.msra.mxu0 %v2822
    %3282 = vmatprep.subr.bf16.mxu0 0
    %3283 = vmatpush2.bf16.msra.mxu0 %v2821
    %3284 = vmatprep.subr.bf16.mxu0 0
    %3285 = vmatpush2.bf16.msra.mxu0 %v2820
    %3286 = vmatprep.subr.bf16.mxu0 0
    %3287 = vmatpush2.bf16.msra.mxu0 %v2819
    %3288 = vmatprep.subr.bf16.mxu0 0
    %3289 = vmatpush2.bf16.msra.mxu0 %v2818
    %3290 = vmatprep.mubr.bf16.mxu0 %v1432
    %3291 = vmatmul.mubr.bf16.gmra.mxu0 %v1431
    %v3292 = vpop.f32.mrf.mxu0
    %v3293 = vadd.f32 %v1912, %v3292
    %v3294 = vpop.f32.mrf.mxu0
    %v3295 = vpop.f32.mrf.mxu0
    %v3296 = vpop.f32.mrf.mxu0
    %3297 = vdwg.mxu0
    %3298 = vmatprep.subr.bf16.mxu0 0
    %3299 = vmatpush1.bf16.msra.mxu0 %v2833
    %3300 = vmatprep.subr.bf16.mxu0 0
    %3301 = vmatpush1.bf16.msra.mxu0 %v2832
    %3302 = vmatprep.subr.bf16.mxu0 0
    %3303 = vmatpush1.bf16.msra.mxu0 %v2831
    %3304 = vmatprep.subr.bf16.mxu0 0
    %3305 = vmatpush1.bf16.msra.mxu0 %v2830
    %3306 = vmatprep.subr.bf16.mxu0 0
    %3307 = vmatpush1.bf16.msra.mxu0 %v2829
    %3308 = vmatprep.subr.bf16.mxu0 0
    %3309 = vmatpush1.bf16.msra.mxu0 %v2828
    %3310 = vmatprep.subr.bf16.mxu0 0
    %3311 = vmatpush1.bf16.msra.mxu0 %v2827
    %3312 = vmatprep.subr.bf16.mxu0 0
    %3313 = vmatpush1.bf16.msra.mxu0 %v2826
    %3314 = vmatprep.subr.bf16.mxu0 0
    %3315 = vmatpush2.bf16.msra.mxu0 %v2841
    %3316 = vmatprep.subr.bf16.mxu0 0
    %3317 = vmatpush2.bf16.msra.mxu0 %v2840
    %3318 = vmatprep.subr.bf16.mxu0 0
    %3319 = vmatpush2.bf16.msra.mxu0 %v2839
    %3320 = vmatprep.subr.bf16.mxu0 0
    %3321 = vmatpush2.bf16.msra.mxu0 %v2838
    %3322 = vmatprep.subr.bf16.mxu0 0
    %3323 = vmatpush2.bf16.msra.mxu0 %v2837
    %3324 = vmatprep.subr.bf16.mxu0 0
    %3325 = vmatpush2.bf16.msra.mxu0 %v2836
    %3326 = vmatprep.subr.bf16.mxu0 0
    %3327 = vmatpush2.bf16.msra.mxu0 %v2835
    %3328 = vmatprep.subr.bf16.mxu0 0
    %3329 = vmatpush2.bf16.msra.mxu0 %v2834
    %3330 = vmatprep.mubr.bf16.mxu0 %v1434
    %3331 = vmatmul.mubr.bf16.gmra.mxu0 %v1433
    %v3332 = vpop.f32.mrf.mxu0
    %v3333 = vadd.f32 %v3293, %v3332
    %v3334 = vpop.f32.mrf.mxu0
    %v3335 = vpop.f32.mrf.mxu0
    %v3336 = vpop.f32.mrf.mxu0
    %3337 = vdwg.mxu0
    %3338 = vmatprep.subr.bf16.mxu0 0
    %3339 = vmatpush1.bf16.msra.mxu0 %v2849
    %3340 = vmatprep.subr.bf16.mxu0 0
    %3341 = vmatpush1.bf16.msra.mxu0 %v2848
    %3342 = vmatprep.subr.bf16.mxu0 0
    %3343 = vmatpush1.bf16.msra.mxu0 %v2847
    %3344 = vmatprep.subr.bf16.mxu0 0
    %3345 = vmatpush1.bf16.msra.mxu0 %v2846
    %3346 = vmatprep.subr.bf16.mxu0 0
    %3347 = vmatpush1.bf16.msra.mxu0 %v2845
    %3348 = vmatprep.subr.bf16.mxu0 0
    %3349 = vmatpush1.bf16.msra.mxu0 %v2844
    %3350 = vmatprep.subr.bf16.mxu0 0
    %3351 = vmatpush1.bf16.msra.mxu0 %v2843
    %3352 = vmatprep.subr.bf16.mxu0 0
    %3353 = vmatpush1.bf16.msra.mxu0 %v2842
    %3354 = vmatprep.subr.bf16.mxu0 0
    %3355 = vmatpush2.bf16.msra.mxu0 %v2857
    %3356 = vmatprep.subr.bf16.mxu0 0
    %3357 = vmatpush2.bf16.msra.mxu0 %v2856
    %3358 = vmatprep.subr.bf16.mxu0 0
    %3359 = vmatpush2.bf16.msra.mxu0 %v2855
    %3360 = vmatprep.subr.bf16.mxu0 0
    %3361 = vmatpush2.bf16.msra.mxu0 %v2854
    %3362 = vmatprep.subr.bf16.mxu0 0
    %3363 = vmatpush2.bf16.msra.mxu0 %v2853
    %3364 = vmatprep.subr.bf16.mxu0 0
    %3365 = vmatpush2.bf16.msra.mxu0 %v2852
    %3366 = vmatprep.subr.bf16.mxu0 0
    %3367 = vmatpush2.bf16.msra.mxu0 %v2851
    %3368 = vmatprep.subr.bf16.mxu0 0
    %3369 = vmatpush2.bf16.msra.mxu0 %v2850
    %3370 = vmatprep.mubr.bf16.mxu0 %v1436
    %3371 = vmatmul.mubr.bf16.gmra.mxu0 %v1435
    %v3372 = vpop.f32.mrf.mxu0
    %v3373 = vadd.f32 %v3333, %v3372
    %v3374 = vpop.f32.mrf.mxu0
    %v3375 = vpop.f32.mrf.mxu0
    %v3376 = vpop.f32.mrf.mxu0
    %3377 = vdwg.mxu0
    %3378 = vmatprep.subr.bf16.mxu0 0
    %3379 = vmatpush1.bf16.msra.mxu0 %v2865
    %3380 = vmatprep.subr.bf16.mxu0 0
    %3381 = vmatpush1.bf16.msra.mxu0 %v2864
    %3382 = vmatprep.subr.bf16.mxu0 0
    %3383 = vmatpush1.bf16.msra.mxu0 %v2863
    %3384 = vmatprep.subr.bf16.mxu0 0
    %3385 = vmatpush1.bf16.msra.mxu0 %v2862
    %3386 = vmatprep.subr.bf16.mxu0 0
    %3387 = vmatpush1.bf16.msra.mxu0 %v2861
    %3388 = vmatprep.subr.bf16.mxu0 0
    %3389 = vmatpush1.bf16.msra.mxu0 %v2860
    %3390 = vmatprep.subr.bf16.mxu0 0
    %3391 = vmatpush1.bf16.msra.mxu0 %v2859
    %3392 = vmatprep.subr.bf16.mxu0 0
    %3393 = vmatpush1.bf16.msra.mxu0 %v2858
    %3394 = vmatprep.subr.bf16.mxu0 0
    %3395 = vmatpush2.bf16.msra.mxu0 %v2873
    %3396 = vmatprep.subr.bf16.mxu0 0
    %3397 = vmatpush2.bf16.msra.mxu0 %v2872
    %3398 = vmatprep.subr.bf16.mxu0 0
    %3399 = vmatpush2.bf16.msra.mxu0 %v2871
    %3400 = vmatprep.subr.bf16.mxu0 0
    %3401 = vmatpush2.bf16.msra.mxu0 %v2870
    %3402 = vmatprep.subr.bf16.mxu0 0
    %3403 = vmatpush2.bf16.msra.mxu0 %v2869
    %3404 = vmatprep.subr.bf16.mxu0 0
    %3405 = vmatpush2.bf16.msra.mxu0 %v2868
    %3406 = vmatprep.subr.bf16.mxu0 0
    %3407 = vmatpush2.bf16.msra.mxu0 %v2867
    %3408 = vmatprep.subr.bf16.mxu0 0
    %3409 = vmatpush2.bf16.msra.mxu0 %v2866
    %3410 = vmatprep.mubr.bf16.mxu0 %v1438
    %3411 = vmatmul.mubr.bf16.gmra.mxu0 %v1437
    %v3412 = vpop.f32.mrf.mxu0
    %v3413 = vadd.f32 %v3373, %v3412
    %v3414 = vpop.f32.mrf.mxu0
    %v3415 = vpop.f32.mrf.mxu0
    %v3416 = vpop.f32.mrf.mxu0
    %3417 = vdwg.mxu0
    %3418 = vmatprep.subr.bf16.mxu0 0
    %3419 = vmatpush1.bf16.msra.mxu0 %v2881
    %3420 = vmatprep.subr.bf16.mxu0 0
    %3421 = vmatpush1.bf16.msra.mxu0 %v2880
    %3422 = vmatprep.subr.bf16.mxu0 0
    %3423 = vmatpush1.bf16.msra.mxu0 %v2879
    %3424 = vmatprep.subr.bf16.mxu0 0
    %3425 = vmatpush1.bf16.msra.mxu0 %v2878
    %3426 = vmatprep.subr.bf16.mxu0 0
    %3427 = vmatpush1.bf16.msra.mxu0 %v2877
    %3428 = vmatprep.subr.bf16.mxu0 0
    %3429 = vmatpush1.bf16.msra.mxu0 %v2876
    %3430 = vmatprep.subr.bf16.mxu0 0
    %3431 = vmatpush1.bf16.msra.mxu0 %v2875
    %3432 = vmatprep.subr.bf16.mxu0 0
    %3433 = vmatpush1.bf16.msra.mxu0 %v2874
    %3434 = vmatprep.subr.bf16.mxu0 0
    %3435 = vmatpush2.bf16.msra.mxu0 %v2889
    %3436 = vmatprep.subr.bf16.mxu0 0
    %3437 = vmatpush2.bf16.msra.mxu0 %v2888
    %3438 = vmatprep.subr.bf16.mxu0 0
    %3439 = vmatpush2.bf16.msra.mxu0 %v2887
    %3440 = vmatprep.subr.bf16.mxu0 0
    %3441 = vmatpush2.bf16.msra.mxu0 %v2886
    %3442 = vmatprep.subr.bf16.mxu0 0
    %3443 = vmatpush2.bf16.msra.mxu0 %v2885
    %3444 = vmatprep.subr.bf16.mxu0 0
    %3445 = vmatpush2.bf16.msra.mxu0 %v2884
    %3446 = vmatprep.subr.bf16.mxu0 0
    %3447 = vmatpush2.bf16.msra.mxu0 %v2883
    %3448 = vmatprep.subr.bf16.mxu0 0
    %3449 = vmatpush2.bf16.msra.mxu0 %v2882
    %3450 = vmatprep.mubr.bf16.mxu0 %v1440
    %3451 = vmatmul.mubr.bf16.gmra.mxu0 %v1439
    %v3452 = vpop.f32.mrf.mxu0
    %v3453 = vadd.f32 %v3413, %v3452
    %v3454 = vpop.f32.mrf.mxu0
    %v3455 = vpop.f32.mrf.mxu0
    %v3456 = vpop.f32.mrf.mxu0
    %3457 = vdwg.mxu0
    %3458 = vmatprep.subr.bf16.mxu0 0
    %3459 = vmatpush1.bf16.msra.mxu0 %v2897
    %3460 = vmatprep.subr.bf16.mxu0 0
    %3461 = vmatpush1.bf16.msra.mxu0 %v2896
    %3462 = vmatprep.subr.bf16.mxu0 0
    %3463 = vmatpush1.bf16.msra.mxu0 %v2895
    %3464 = vmatprep.subr.bf16.mxu0 0
    %3465 = vmatpush1.bf16.msra.mxu0 %v2894
    %3466 = vmatprep.subr.bf16.mxu0 0
    %3467 = vmatpush1.bf16.msra.mxu0 %v2893
    %3468 = vmatprep.subr.bf16.mxu0 0
    %3469 = vmatpush1.bf16.msra.mxu0 %v2892
    %3470 = vmatprep.subr.bf16.mxu0 0
    %3471 = vmatpush1.bf16.msra.mxu0 %v2891
    %3472 = vmatprep.subr.bf16.mxu0 0
    %3473 = vmatpush1.bf16.msra.mxu0 %v2890
    %3474 = vmatprep.subr.bf16.mxu0 0
    %3475 = vmatpush2.bf16.msra.mxu0 %v2905
    %3476 = vmatprep.subr.bf16.mxu0 0
    %3477 = vmatpush2.bf16.msra.mxu0 %v2904
    %3478 = vmatprep.subr.bf16.mxu0 0
    %3479 = vmatpush2.bf16.msra.mxu0 %v2903
    %3480 = vmatprep.subr.bf16.mxu0 0
    %3481 = vmatpush2.bf16.msra.mxu0 %v2902
    %3482 = vmatprep.subr.bf16.mxu0 0
    %3483 = vmatpush2.bf16.msra.mxu0 %v2901
    %3484 = vmatprep.subr.bf16.mxu0 0
    %3485 = vmatpush2.bf16.msra.mxu0 %v2900
    %3486 = vmatprep.subr.bf16.mxu0 0
    %3487 = vmatpush2.bf16.msra.mxu0 %v2899
    %3488 = vmatprep.subr.bf16.mxu0 0
    %3489 = vmatpush2.bf16.msra.mxu0 %v2898
    %3490 = vmatprep.mubr.bf16.mxu0 %v1442
    %3491 = vmatmul.mubr.bf16.gmra.mxu0 %v1441
    %v3492 = vpop.f32.mrf.mxu0
    %v3493 = vadd.f32 %v3453, %v3492
    %v3494 = vpop.f32.mrf.mxu0
    %v3495 = vpop.f32.mrf.mxu0
    %v3496 = vpop.f32.mrf.mxu0
    %3497 = vdwg.mxu0
    %3498 = vmatprep.subr.bf16.mxu0 0
    %3499 = vmatpush1.bf16.msra.mxu0 %v2913
    %3500 = vmatprep.subr.bf16.mxu0 0
    %3501 = vmatpush1.bf16.msra.mxu0 %v2912
    %3502 = vmatprep.subr.bf16.mxu0 0
    %3503 = vmatpush1.bf16.msra.mxu0 %v2911
    %3504 = vmatprep.subr.bf16.mxu0 0
    %3505 = vmatpush1.bf16.msra.mxu0 %v2910
    %3506 = vmatprep.subr.bf16.mxu0 0
    %3507 = vmatpush1.bf16.msra.mxu0 %v2909
    %3508 = vmatprep.subr.bf16.mxu0 0
    %3509 = vmatpush1.bf16.msra.mxu0 %v2908
    %3510 = vmatprep.subr.bf16.mxu0 0
    %3511 = vmatpush1.bf16.msra.mxu0 %v2907
    %3512 = vmatprep.subr.bf16.mxu0 0
    %3513 = vmatpush1.bf16.msra.mxu0 %v2906
    %3514 = vmatprep.subr.bf16.mxu0 0
    %3515 = vmatpush2.bf16.msra.mxu0 %v2921
    %3516 = vmatprep.subr.bf16.mxu0 0
    %3517 = vmatpush2.bf16.msra.mxu0 %v2920
    %3518 = vmatprep.subr.bf16.mxu0 0
    %3519 = vmatpush2.bf16.msra.mxu0 %v2919
    %3520 = vmatprep.subr.bf16.mxu0 0
    %3521 = vmatpush2.bf16.msra.mxu0 %v2918
    %3522 = vmatprep.subr.bf16.mxu0 0
    %3523 = vmatpush2.bf16.msra.mxu0 %v2917
    %3524 = vmatprep.subr.bf16.mxu0 0
    %3525 = vmatpush2.bf16.msra.mxu0 %v2916
    %3526 = vmatprep.subr.bf16.mxu0 0
    %3527 = vmatpush2.bf16.msra.mxu0 %v2915
    %3528 = vmatprep.subr.bf16.mxu0 0
    %3529 = vmatpush2.bf16.msra.mxu0 %v2914
    %3530 = vmatprep.mubr.bf16.mxu0 %v1444
    %3531 = vmatmul.mubr.bf16.gmra.mxu0 %v1443
    %v3532 = vpop.f32.mrf.mxu0
    %v3533 = vadd.f32 %v3493, %v3532
    %v3534 = vpop.f32.mrf.mxu0
    %v3535 = vpop.f32.mrf.mxu0
    %v3536 = vpop.f32.mrf.mxu0
    %3537 = vdwg.mxu0
    %3538 = vmatprep.subr.bf16.mxu0 0
    %3539 = vmatpush1.bf16.msra.mxu0 %v2929
    %3540 = vmatprep.subr.bf16.mxu0 0
    %3541 = vmatpush1.bf16.msra.mxu0 %v2928
    %3542 = vmatprep.subr.bf16.mxu0 0
    %3543 = vmatpush1.bf16.msra.mxu0 %v2927
    %3544 = vmatprep.subr.bf16.mxu0 0
    %3545 = vmatpush1.bf16.msra.mxu0 %v2926
    %3546 = vmatprep.subr.bf16.mxu0 0
    %3547 = vmatpush1.bf16.msra.mxu0 %v2925
    %3548 = vmatprep.subr.bf16.mxu0 0
    %3549 = vmatpush1.bf16.msra.mxu0 %v2924
    %3550 = vmatprep.subr.bf16.mxu0 0
    %3551 = vmatpush1.bf16.msra.mxu0 %v2923
    %3552 = vmatprep.subr.bf16.mxu0 0
    %3553 = vmatpush1.bf16.msra.mxu0 %v2922
    %3554 = vmatprep.subr.bf16.mxu0 0
    %3555 = vmatpush2.bf16.msra.mxu0 %v2937
    %3556 = vmatprep.subr.bf16.mxu0 0
    %3557 = vmatpush2.bf16.msra.mxu0 %v2936
    %3558 = vmatprep.subr.bf16.mxu0 0
    %3559 = vmatpush2.bf16.msra.mxu0 %v2935
    %3560 = vmatprep.subr.bf16.mxu0 0
    %3561 = vmatpush2.bf16.msra.mxu0 %v2934
    %3562 = vmatprep.subr.bf16.mxu0 0
    %3563 = vmatpush2.bf16.msra.mxu0 %v2933
    %3564 = vmatprep.subr.bf16.mxu0 0
    %3565 = vmatpush2.bf16.msra.mxu0 %v2932
    %3566 = vmatprep.subr.bf16.mxu0 0
    %3567 = vmatpush2.bf16.msra.mxu0 %v2931
    %3568 = vmatprep.subr.bf16.mxu0 0
    %3569 = vmatpush2.bf16.msra.mxu0 %v2930
    %3570 = vmatprep.mubr.bf16.mxu0 %v1446
    %3571 = vmatmul.mubr.bf16.gmra.mxu0 %v1445
    %v3572 = vpop.f32.mrf.mxu0
    %v3573 = vadd.f32 %v3533, %v3572
    %v3574 = vpop.f32.mrf.mxu0
    %v3575 = vpop.f32.mrf.mxu0
    %v3576 = vpop.f32.mrf.mxu0
    %3577 = vdwg.mxu0
    %3578 = vmatprep.subr.bf16.mxu0 0
    %3579 = vmatpush1.bf16.msra.mxu0 %v2945
    %3580 = vmatprep.subr.bf16.mxu0 0
    %3581 = vmatpush1.bf16.msra.mxu0 %v2944
    %3582 = vmatprep.subr.bf16.mxu0 0
    %3583 = vmatpush1.bf16.msra.mxu0 %v2943
    %3584 = vmatprep.subr.bf16.mxu0 0
    %3585 = vmatpush1.bf16.msra.mxu0 %v2942
    %3586 = vmatprep.subr.bf16.mxu0 0
    %3587 = vmatpush1.bf16.msra.mxu0 %v2941
    %3588 = vmatprep.subr.bf16.mxu0 0
    %3589 = vmatpush1.bf16.msra.mxu0 %v2940
    %3590 = vmatprep.subr.bf16.mxu0 0
    %3591 = vmatpush1.bf16.msra.mxu0 %v2939
    %3592 = vmatprep.subr.bf16.mxu0 0
    %3593 = vmatpush1.bf16.msra.mxu0 %v2938
    %3594 = vmatprep.subr.bf16.mxu0 0
    %3595 = vmatpush2.bf16.msra.mxu0 %v2953
    %3596 = vmatprep.subr.bf16.mxu0 0
    %3597 = vmatpush2.bf16.msra.mxu0 %v2952
    %3598 = vmatprep.subr.bf16.mxu0 0
    %3599 = vmatpush2.bf16.msra.mxu0 %v2951
    %3600 = vmatprep.subr.bf16.mxu0 0
    %3601 = vmatpush2.bf16.msra.mxu0 %v2950
    %3602 = vmatprep.subr.bf16.mxu0 0
    %3603 = vmatpush2.bf16.msra.mxu0 %v2949
    %3604 = vmatprep.subr.bf16.mxu0 0
    %3605 = vmatpush2.bf16.msra.mxu0 %v2948
    %3606 = vmatprep.subr.bf16.mxu0 0
    %3607 = vmatpush2.bf16.msra.mxu0 %v2947
    %3608 = vmatprep.subr.bf16.mxu0 0
    %3609 = vmatpush2.bf16.msra.mxu0 %v2946
    %3610 = vmatprep.mubr.bf16.mxu0 %v1448
    %3611 = vmatmul.mubr.bf16.gmra.mxu0 %v1447
    %v3612 = vpop.f32.mrf.mxu0
    %v3613 = vadd.f32 %v3573, %v3612
    %v3614 = vpop.f32.mrf.mxu0
    %v3615 = vpop.f32.mrf.mxu0
    %v3616 = vpop.f32.mrf.mxu0
    %3617 = vdwg.mxu0
    %3618 = vmatprep.subr.bf16.mxu0 0
    %3619 = vmatpush1.bf16.msra.mxu0 %v2961
    %3620 = vmatprep.subr.bf16.mxu0 0
    %3621 = vmatpush1.bf16.msra.mxu0 %v2960
    %3622 = vmatprep.subr.bf16.mxu0 0
    %3623 = vmatpush1.bf16.msra.mxu0 %v2959
    %3624 = vmatprep.subr.bf16.mxu0 0
    %3625 = vmatpush1.bf16.msra.mxu0 %v2958
    %3626 = vmatprep.subr.bf16.mxu0 0
    %3627 = vmatpush1.bf16.msra.mxu0 %v2957
    %3628 = vmatprep.subr.bf16.mxu0 0
    %3629 = vmatpush1.bf16.msra.mxu0 %v2956
    %3630 = vmatprep.subr.bf16.mxu0 0
    %3631 = vmatpush1.bf16.msra.mxu0 %v2955
    %3632 = vmatprep.subr.bf16.mxu0 0
    %3633 = vmatpush1.bf16.msra.mxu0 %v2954
    %3634 = vmatprep.subr.bf16.mxu0 0
    %3635 = vmatpush2.bf16.msra.mxu0 %v2969
    %3636 = vmatprep.subr.bf16.mxu0 0
    %3637 = vmatpush2.bf16.msra.mxu0 %v2968
    %3638 = vmatprep.subr.bf16.mxu0 0
    %3639 = vmatpush2.bf16.msra.mxu0 %v2967
    %3640 = vmatprep.subr.bf16.mxu0 0
    %3641 = vmatpush2.bf16.msra.mxu0 %v2966
    %3642 = vmatprep.subr.bf16.mxu0 0
    %3643 = vmatpush2.bf16.msra.mxu0 %v2965
    %3644 = vmatprep.subr.bf16.mxu0 0
    %3645 = vmatpush2.bf16.msra.mxu0 %v2964
    %3646 = vmatprep.subr.bf16.mxu0 0
    %3647 = vmatpush2.bf16.msra.mxu0 %v2963
    %3648 = vmatprep.subr.bf16.mxu0 0
    %3649 = vmatpush2.bf16.msra.mxu0 %v2962
    %3650 = vmatprep.mubr.bf16.mxu0 %v1450
    %3651 = vmatmul.mubr.bf16.gmra.mxu0 %v1449
    %v3652 = vpop.f32.mrf.mxu0
    %v3653 = vadd.f32 %v3613, %v3652
    %v3654 = vpop.f32.mrf.mxu0
    %v3655 = vpop.f32.mrf.mxu0
    %v3656 = vpop.f32.mrf.mxu0
    %3657 = vdwg.mxu0
    %3658 = vmatprep.subr.bf16.mxu0 0
    %3659 = vmatpush1.bf16.msra.mxu0 %v2977
    %3660 = vmatprep.subr.bf16.mxu0 0
    %3661 = vmatpush1.bf16.msra.mxu0 %v2976
    %3662 = vmatprep.subr.bf16.mxu0 0
    %3663 = vmatpush1.bf16.msra.mxu0 %v2975
    %3664 = vmatprep.subr.bf16.mxu0 0
    %3665 = vmatpush1.bf16.msra.mxu0 %v2974
    %3666 = vmatprep.subr.bf16.mxu0 0
    %3667 = vmatpush1.bf16.msra.mxu0 %v2973
    %3668 = vmatprep.subr.bf16.mxu0 0
    %3669 = vmatpush1.bf16.msra.mxu0 %v2972
    %3670 = vmatprep.subr.bf16.mxu0 0
    %3671 = vmatpush1.bf16.msra.mxu0 %v2971
    %3672 = vmatprep.subr.bf16.mxu0 0
    %3673 = vmatpush1.bf16.msra.mxu0 %v2970
    %3674 = vmatprep.subr.bf16.mxu0 0
    %3675 = vmatpush2.bf16.msra.mxu0 %v2985
    %3676 = vmatprep.subr.bf16.mxu0 0
    %3677 = vmatpush2.bf16.msra.mxu0 %v2984
    %3678 = vmatprep.subr.bf16.mxu0 0
    %3679 = vmatpush2.bf16.msra.mxu0 %v2983
    %3680 = vmatprep.subr.bf16.mxu0 0
    %3681 = vmatpush2.bf16.msra.mxu0 %v2982
    %3682 = vmatprep.subr.bf16.mxu0 0
    %3683 = vmatpush2.bf16.msra.mxu0 %v2981
    %3684 = vmatprep.subr.bf16.mxu0 0
    %3685 = vmatpush2.bf16.msra.mxu0 %v2980
    %3686 = vmatprep.subr.bf16.mxu0 0
    %3687 = vmatpush2.bf16.msra.mxu0 %v2979
    %3688 = vmatprep.subr.bf16.mxu0 0
    %3689 = vmatpush2.bf16.msra.mxu0 %v2978
    %3690 = vmatprep.mubr.bf16.mxu0 %v1452
    %3691 = vmatmul.mubr.bf16.gmra.mxu0 %v1451
    %v3692 = vpop.f32.mrf.mxu0
    %v3693 = vadd.f32 %v3653, %v3692
    %v3694 = vpop.f32.mrf.mxu0
    %v3695 = vpop.f32.mrf.mxu0
    %v3696 = vpop.f32.mrf.mxu0
    %3697 = vdwg.mxu0
    %3698 = vmatprep.subr.bf16.mxu0 0
    %3699 = vmatpush1.bf16.msra.mxu0 %v2993
    %3700 = vmatprep.subr.bf16.mxu0 0
    %3701 = vmatpush1.bf16.msra.mxu0 %v2992
    %3702 = vmatprep.subr.bf16.mxu0 0
    %3703 = vmatpush1.bf16.msra.mxu0 %v2991
    %3704 = vmatprep.subr.bf16.mxu0 0
    %3705 = vmatpush1.bf16.msra.mxu0 %v2990
    %3706 = vmatprep.subr.bf16.mxu0 0
    %3707 = vmatpush1.bf16.msra.mxu0 %v2989
    %3708 = vmatprep.subr.bf16.mxu0 0
    %3709 = vmatpush1.bf16.msra.mxu0 %v2988
    %3710 = vmatprep.subr.bf16.mxu0 0
    %3711 = vmatpush1.bf16.msra.mxu0 %v2987
    %3712 = vmatprep.subr.bf16.mxu0 0
    %3713 = vmatpush1.bf16.msra.mxu0 %v2986
    %3714 = vmatprep.subr.bf16.mxu0 0
    %3715 = vmatpush2.bf16.msra.mxu0 %v3001
    %3716 = vmatprep.subr.bf16.mxu0 0
    %3717 = vmatpush2.bf16.msra.mxu0 %v3000
    %3718 = vmatprep.subr.bf16.mxu0 0
    %3719 = vmatpush2.bf16.msra.mxu0 %v2999
    %3720 = vmatprep.subr.bf16.mxu0 0
    %3721 = vmatpush2.bf16.msra.mxu0 %v2998
    %3722 = vmatprep.subr.bf16.mxu0 0
    %3723 = vmatpush2.bf16.msra.mxu0 %v2997
    %3724 = vmatprep.subr.bf16.mxu0 0
    %3725 = vmatpush2.bf16.msra.mxu0 %v2996
    %3726 = vmatprep.subr.bf16.mxu0 0
    %3727 = vmatpush2.bf16.msra.mxu0 %v2995
    %3728 = vmatprep.subr.bf16.mxu0 0
    %3729 = vmatpush2.bf16.msra.mxu0 %v2994
    %3730 = vmatprep.mubr.bf16.mxu0 %v1454
    %3731 = vmatmul.mubr.bf16.gmra.mxu0 %v1453
    %v3732 = vpop.f32.mrf.mxu0
    %v3733 = vadd.f32 %v3693, %v3732
    %v3734 = vpop.f32.mrf.mxu0
    %v3735 = vpop.f32.mrf.mxu0
    %v3736 = vpop.f32.mrf.mxu0
    %3737 = vdwg.mxu0
    %3738 = vmatprep.subr.bf16.mxu0 0
    %3739 = vmatpush1.bf16.msra.mxu0 %v3009
    %3740 = vmatprep.subr.bf16.mxu0 0
    %3741 = vmatpush1.bf16.msra.mxu0 %v3008
    %3742 = vmatprep.subr.bf16.mxu0 0
    %3743 = vmatpush1.bf16.msra.mxu0 %v3007
    %3744 = vmatprep.subr.bf16.mxu0 0
    %3745 = vmatpush1.bf16.msra.mxu0 %v3006
    %3746 = vmatprep.subr.bf16.mxu0 0
    %3747 = vmatpush1.bf16.msra.mxu0 %v3005
    %3748 = vmatprep.subr.bf16.mxu0 0
    %3749 = vmatpush1.bf16.msra.mxu0 %v3004
    %3750 = vmatprep.subr.bf16.mxu0 0
    %3751 = vmatpush1.bf16.msra.mxu0 %v3003
    %3752 = vmatprep.subr.bf16.mxu0 0
    %3753 = vmatpush1.bf16.msra.mxu0 %v3002
    %3754 = vmatprep.subr.bf16.mxu0 0
    %3755 = vmatpush2.bf16.msra.mxu0 %v3017
    %3756 = vmatprep.subr.bf16.mxu0 0
    %3757 = vmatpush2.bf16.msra.mxu0 %v3016
    %3758 = vmatprep.subr.bf16.mxu0 0
    %3759 = vmatpush2.bf16.msra.mxu0 %v3015
    %3760 = vmatprep.subr.bf16.mxu0 0
    %3761 = vmatpush2.bf16.msra.mxu0 %v3014
    %3762 = vmatprep.subr.bf16.mxu0 0
    %3763 = vmatpush2.bf16.msra.mxu0 %v3013
    %3764 = vmatprep.subr.bf16.mxu0 0
    %3765 = vmatpush2.bf16.msra.mxu0 %v3012
    %3766 = vmatprep.subr.bf16.mxu0 0
    %3767 = vmatpush2.bf16.msra.mxu0 %v3011
    %3768 = vmatprep.subr.bf16.mxu0 0
    %3769 = vmatpush2.bf16.msra.mxu0 %v3010
    %3770 = vmatprep.mubr.bf16.mxu0 %v1456
    %3771 = vmatmul.mubr.bf16.gmra.mxu0 %v1455
    %v3772 = vpop.f32.mrf.mxu0
    %v3773 = vadd.f32 %v3733, %v3772
    %v3774 = vpop.f32.mrf.mxu0
    %v3775 = vpop.f32.mrf.mxu0
    %v3776 = vpop.f32.mrf.mxu0
    %3777 = vdwg.mxu0
    %3778 = vmatprep.subr.bf16.mxu0 0
    %3779 = vmatpush1.bf16.msra.mxu0 %v3025
    %3780 = vmatprep.subr.bf16.mxu0 0
    %3781 = vmatpush1.bf16.msra.mxu0 %v3024
    %3782 = vmatprep.subr.bf16.mxu0 0
    %3783 = vmatpush1.bf16.msra.mxu0 %v3023
    %3784 = vmatprep.subr.bf16.mxu0 0
    %3785 = vmatpush1.bf16.msra.mxu0 %v3022
    %3786 = vmatprep.subr.bf16.mxu0 0
    %3787 = vmatpush1.bf16.msra.mxu0 %v3021
    %3788 = vmatprep.subr.bf16.mxu0 0
    %3789 = vmatpush1.bf16.msra.mxu0 %v3020
    %3790 = vmatprep.subr.bf16.mxu0 0
    %3791 = vmatpush1.bf16.msra.mxu0 %v3019
    %3792 = vmatprep.subr.bf16.mxu0 0
    %3793 = vmatpush1.bf16.msra.mxu0 %v3018
    %3794 = vmatprep.subr.bf16.mxu0 0
    %3795 = vmatpush2.bf16.msra.mxu0 %v3033
    %3796 = vmatprep.subr.bf16.mxu0 0
    %3797 = vmatpush2.bf16.msra.mxu0 %v3032
    %3798 = vmatprep.subr.bf16.mxu0 0
    %3799 = vmatpush2.bf16.msra.mxu0 %v3031
    %3800 = vmatprep.subr.bf16.mxu0 0
    %3801 = vmatpush2.bf16.msra.mxu0 %v3030
    %3802 = vmatprep.subr.bf16.mxu0 0
    %3803 = vmatpush2.bf16.msra.mxu0 %v3029
    %3804 = vmatprep.subr.bf16.mxu0 0
    %3805 = vmatpush2.bf16.msra.mxu0 %v3028
    %3806 = vmatprep.subr.bf16.mxu0 0
    %3807 = vmatpush2.bf16.msra.mxu0 %v3027
    %3808 = vmatprep.subr.bf16.mxu0 0
    %3809 = vmatpush2.bf16.msra.mxu0 %v3026
    %3810 = vmatprep.mubr.bf16.mxu0 %v1458
    %3811 = vmatmul.mubr.bf16.gmra.mxu0 %v1457
    %v3812 = vpop.f32.mrf.mxu0
    %v3813 = vadd.f32 %v3773, %v3812
    %v3814 = vpop.f32.mrf.mxu0
    %v3815 = vpop.f32.mrf.mxu0
    %v3816 = vpop.f32.mrf.mxu0
    %3817 = vdwg.mxu0
    %3818 = vmax.xlane.f32.xlu0 %v3813
    %v3819 = vpop.xlane.xlu0 %3818
    %v3820 = vsub.f32 %v3813, %v3819
    %v3821 = vmul.f32 %v3820, 1.442695
    %v3822 = vpow.pop %v3821
    %3823 = vadd.xlane.f32.xlu0 %v3822
    %v3824 = vpop.xlane.xlu0 %3823
    %v3825 = vrcp.pop %v3824
    %v3826 = vmul.f32 %v3824, %v3825
    %v3827 = vsub.f32 2.0, %v3826
    %v3828 = vmul.f32 %v3825, %v3827
    %v3829 = vmul.f32 %v3822, %v3828
    %3830 = vst [vmem:[%s5] sm:$0xff] %v3829
    // Predicated region
    $region30: #{snow_classifier_forward.1} parent=1 // pred_check
      _
    $region31: #{snow_classifier_forward.1} parent=1 // pred_check_branch
      %3832 = sbr.rel (0) target = $region33
    $region32: #{snow_classifier_forward.1} parent=1 // pred_region
      _
    $region33: #{snow_classifier_forward.1} parent=1 // pred_fallthru
      _
    // Predicated region
    $region34: #{snow_classifier_forward.1} parent=1 // pred_check
      _
    $region35: #{snow_classifier_forward.1} parent=1 // pred_check_branch
      %3834 = sbr.rel (0) target = $region37
    $region36: #{snow_classifier_forward.1} parent=1 // pred_region
      _
    $region37: #{snow_classifier_forward.1} parent=1 // pred_fallthru
      _
    %3835 = vsyncpa [#allocation5], 1
    %3836 = vsyncpa [#allocation7], 1

</llo_original>
